<compile_context>
chip_gen: v7x
topology: tpu7x:2x2x1
jax: 0.10.0
libtpu: 0.0.40
codegen_flags: <defaults>
</compile_context>

<pallas_src>
import functools

import jax
import jax.numpy as jnp
import numpy as np
from jax import lax
from jax.experimental import pallas as pl
from jax.experimental.pallas import tpu as pltpu

EPS = 1e-5
EXPANSION = 4


def _sds(start, size, stride):
    """Contiguous or strided slice for Ref indexing."""
    if stride == 1:
        return pl.ds(start, size)
    return pl.ds(start, size, stride=stride)


# ----------------------------- Pallas kernels ------------------------------ #

def _residual_main(x_ref, w1_ref, s1_ref, b1_ref, w2_ref, s2_ref, b2_ref,
                   w3_ref, s3_ref, b3_ref, xp_ref, stride, Ho, Wo):
    """conv1x1+BN+ReLU -> conv3x3(stride)+BN+ReLU -> conv1x1+BN (pre-residual)."""
    H, W, Cin = x_ref.shape
    Cmid = w1_ref.shape[1]

    # Padded-h1 buffer: zero every step (cheap memset, megacore-safe). The
    # interior is fully overwritten below; the border provides conv padding.
    xp_ref[...] = jnp.zeros_like(xp_ref)

    # Stage 1: 1x1 conv + BN + ReLU (result stays in VMEM scratch).
    h1 = jnp.dot(x_ref[...].reshape(H * W, Cin), w1_ref[...],
                 preferred_element_type=jnp.float32)
    h1 = jnp.maximum(h1 * s1_ref[...] + b1_ref[...], 0.0)
    xp_ref[1:H + 1, 1:W + 1, :] = h1.reshape(H, W, Cmid)

    # Stage 2: 3x3 conv evaluated only at the strided output positions.
    acc = jnp.zeros((Ho * Wo, Cmid), jnp.float32)
    for kh in range(3):
        for kw in range(3):
            tap = xp_ref[_sds(kh, Ho, stride), _sds(kw, Wo, stride), :]
            acc = acc + jnp.dot(tap.reshape(Ho * Wo, Cmid), w2_ref[kh, kw],
                                preferred_element_type=jnp.float32)
    h2 = jnp.maximum(acc * s2_ref[...] + b2_ref[...], 0.0)

    # Stage 3: 1x1 expansion conv + BN (ReLU applied after the residual add).
    main = jnp.dot(h2, w3_ref[...], preferred_element_type=jnp.float32)
    return main * s3_ref[...] + b3_ref[...]


def _bottleneck_proj_kernel(x_ref, w1_ref, s1_ref, b1_ref,
                            w2_ref, s2_ref, b2_ref,
                            w3_ref, s3_ref, b3_ref,
                            ws_ref, ss_ref, bs_ref,
                            o_ref, xp_ref, *, stride):
    """Bottleneck with projection shortcut (1x1 stride-s conv + BN)."""
    Ho, Wo, Cout = o_ref.shape
    Cin = x_ref.shape[-1]
    main = _residual_main(x_ref, w1_ref, s1_ref, b1_ref, w2_ref, s2_ref,
                          b2_ref, w3_ref, s3_ref, b3_ref, xp_ref,
                          stride, Ho, Wo)
    # Shortcut: the stride-s spatial subsample of x is an in-kernel strided
    # read of the already-resident x block (hidden under the pipeline).
    xs = x_ref[_sds(0, Ho, stride), _sds(0, Wo, stride), :].reshape(Ho * Wo, Cin)
    sc = jnp.dot(xs, ws_ref[...], preferred_element_type=jnp.float32)
    sc = sc * ss_ref[...] + bs_ref[...]
    o_ref[...] = jnp.maximum(main + sc, 0.0).reshape(Ho, Wo, Cout)


def _bottleneck_identity_kernel(x_ref, w1_ref, s1_ref, b1_ref,
                                w2_ref, s2_ref, b2_ref,
                                w3_ref, s3_ref, b3_ref,
                                o_ref, xp_ref):
    """Bottleneck with identity shortcut (stride == 1, Cin == Cout): VPU add."""
    Ho, Wo, Cout = o_ref.shape
    main = _residual_main(x_ref, w1_ref, s1_ref, b1_ref, w2_ref, s2_ref,
                          b2_ref, w3_ref, s3_ref, b3_ref, xp_ref,
                          1, Ho, Wo)
    sc = x_ref[...].reshape(Ho * Wo, Cout)        # no eye() matmul
    o_ref[...] = jnp.maximum(main + sc, 0.0).reshape(Ho, Wo, Cout)


# ------------------------------- Wrapper ----------------------------------- #

def _fold_bn(gamma, beta, mean, var):
    scale = gamma / jnp.sqrt(var + EPS)
    bias = beta - mean * scale
    return scale[None, :].astype(jnp.float32), bias[None, :].astype(jnp.float32)


def bottleneck_forward(x_nchw, p, stride):
    x = jnp.transpose(x_nchw, (0, 2, 3, 1)).astype(jnp.float32)   # NHWC
    N, H, W, Cin = x.shape
    Cmid = p["w1"].shape[1]
    Cout = p["w3"].shape[1]
    Ho = (H - 1) // stride + 1
    Wo = (W - 1) // stride + 1

    s1, b1 = _fold_bn(*p["bn1"])
    s2, b2 = _fold_bn(*p["bn2"])
    s3, b3 = _fold_bn(*p["bn3"])

    def resident(shape):
        # Constant block index -> DMA'd once, stays resident across grid steps.
        return pl.BlockSpec(shape, lambda n: (0,) * len(shape))

    in_specs = [
        # One image per grid step; batch dim squeezed out of the kernel view.
        pl.BlockSpec((None, H, W, Cin), lambda n: (n, 0, 0, 0)),
        resident((Cin, Cmid)), resident((1, Cmid)), resident((1, Cmid)),
        resident((3, 3, Cmid, Cmid)), resident((1, Cmid)), resident((1, Cmid)),
        resident((Cmid, Cout)), resident((1, Cout)), resident((1, Cout)),
    ]
    args = [x, p["w1"], s1, b1, p["w2"], s2, b2, p["w3"], s3, b3]

    if p["ws"] is not None:
        ss, bs = _fold_bn(*p["bns"])
        in_specs += [resident((Cin, Cout)), resident((1, Cout)),
                     resident((1, Cout))]
        args += [p["ws"], ss, bs]
        kernel = functools.partial(_bottleneck_proj_kernel, stride=stride)
    else:
        assert stride == 1 and Cin == Cout
        kernel = _bottleneck_identity_kernel

    out = pl.pallas_call(
        kernel,
        grid=(N,),
        in_specs=in_specs,
        out_specs=pl.BlockSpec((None, Ho, Wo, Cout), lambda n: (n, 0, 0, 0)),
        out_shape=jax.ShapeDtypeStruct((N, Ho, Wo, Cout), jnp.float32),
        scratch_shapes=[pltpu.VMEM((H + 2, W + 2, Cmid), jnp.float32)],
        compiler_params=pltpu.CompilerParams(
            dimension_semantics=("parallel",),
            vmem_limit_bytes=32 * 1024 * 1024),
    )(*args)
    return jnp.transpose(out, (0, 3, 1, 2))        # back to NCHW


# ------------------------- Pure-JAX reference (NCHW) ------------------------ #

def reference_forward(x_nchw, p, stride):
    def conv(x, w_oihw, s, pad):
        return lax.conv_general_dilated(
            x, w_oihw, window_strides=(s, s),
            padding=((pad, pad), (pad, pad)),
            dimension_numbers=("NCHW", "OIHW", "NCHW"),
            precision=lax.Precision.HIGHEST)

    def bn(x, params):
        g, b, m, v = params
        sc = g / jnp.sqrt(v + EPS)
        return x * sc[None, :, None, None] + (b - m * sc)[None, :, None, None]

    w1 = jnp.transpose(p["w1"])[:, :, None, None]
    w2 = jnp.transpose(p["w2"], (3, 2, 0, 1))
    w3 = jnp.transpose(p["w3"])[:, :, None, None]

    h = jax.nn.relu(bn(conv(x_nchw, w1, 1, 0), p["bn1"]))
    h = jax.nn.relu(bn(conv(h, w2, stride, 1), p["bn2"]))
    h = bn(conv(h, w3, 1, 0), p["bn3"])
    if p["ws"] is None:
        sc = x_nchw
    else:
        ws = jnp.transpose(p["ws"])[:, :, None, None]
        sc = bn(conv(x_nchw, ws, stride, 0), p["bns"])
    return jax.nn.relu(h + sc)


# --------------------------------- Main ------------------------------------ #

def _init_params(key, in_channels, out_channels, stride):
    Cout = out_channels * EXPANSION
    ks = jax.random.split(key, 12)

    def bn_params(k, c):
        k1, k2, k3, k4 = jax.random.split(k, 4)
        gamma = jax.random.uniform(k1, (c,), jnp.float32, 0.5, 1.5)
        beta = 0.1 * jax.random.normal(k2, (c,), jnp.float32)
        mean = 0.1 * jax.random.normal(k3, (c,), jnp.float32)
        var = jax.random.uniform(k4, (c,), jnp.float32, 0.5, 1.5)
        return (gamma, beta, mean, var)

    p = {
        # 1x1 conv weights stored as (Cin, Cout); 3x3 as (kh, kw, Cin, Cout).
        "w1": 0.3 * jax.random.normal(ks[0], (in_channels, out_channels), jnp.float32),
        "bn1": bn_params(ks[1], out_channels),
        "w2": 0.3 * jax.random.normal(ks[2], (3, 3, out_channels, out_channels), jnp.float32),
        "bn2": bn_params(ks[3], out_channels),
        "w3": 0.3 * jax.random.normal(ks[4], (out_channels, Cout), jnp.float32),
        "bn3": bn_params(ks[5], Cout),
    }
    if stride != 1 or in_channels != Cout:
        p["ws"] = 0.3 * jax.random.normal(ks[6], (in_channels, Cout), jnp.float32)
        p["bns"] = bn_params(ks[7], Cout)
    else:
        p["ws"] = None
        p["bns"] = None
    return p


if __name__ == "__main__":
    key = jax.random.PRNGKey(0)

    # Config 1: projection shortcut (stride 2, channel change).
    k1, k2, key = jax.random.split(key, 3)
    in_c, out_c, stride = 4, 4, 2
    x = jax.random.normal(k1, (2, in_c, 16, 16), jnp.float32)          # NCHW
    params = _init_params(k2, in_c, out_c, stride)
    out = jax.block_until_ready(bottleneck_forward(x, params, stride))
    ref = jax.block_until_ready(reference_forward(x, params, stride))
    assert out.shape == ref.shape == (2, out_c * EXPANSION, 8, 8)
    np.testing.assert_allclose(np.asarray(out), np.asarray(ref),
                               rtol=1e-3, atol=1e-3)

    # Config 2: identity shortcut (stride 1, in_channels == out_channels * 4).
    k1, k2, key = jax.random.split(key, 3)
    in_c, out_c, stride = 16, 4, 1
    x = jax.random.normal(k1, (2, in_c, 16, 16), jnp.float32)
    params = _init_params(k2, in_c, out_c, stride)
    out = jax.block_until_ready(bottleneck_forward(x, params, stride))
    ref = jax.block_until_ready(reference_forward(x, params, stride))
    assert out.shape == ref.shape == (2, out_c * EXPANSION, 16, 16)
    np.testing.assert_allclose(np.asarray(out), np.asarray(ref),
                               rtol=1e-3, atol=1e-3)

    print("KERNEL_OK")
</pallas_src>

<mosaic_0001>
module attributes {stable_mosaic.version = 11 : i64} {
  func.func @_bottleneck_proj_kernel(%arg0: i32, %arg1: memref<1x16x16x4xf32, #tpu.memory_space<vmem>>, %arg2: memref<4x4xf32, #tpu.memory_space<vmem>>, %arg3: memref<1x4xf32, #tpu.memory_space<vmem>>, %arg4: memref<1x4xf32, #tpu.memory_space<vmem>>, %arg5: memref<3x3x4x4xf32, #tpu.memory_space<vmem>>, %arg6: memref<1x4xf32, #tpu.memory_space<vmem>>, %arg7: memref<1x4xf32, #tpu.memory_space<vmem>>, %arg8: memref<4x16xf32, #tpu.memory_space<vmem>>, %arg9: memref<1x16xf32, #tpu.memory_space<vmem>>, %arg10: memref<1x16xf32, #tpu.memory_space<vmem>>, %arg11: memref<4x16xf32, #tpu.memory_space<vmem>>, %arg12: memref<1x16xf32, #tpu.memory_space<vmem>>, %arg13: memref<1x16xf32, #tpu.memory_space<vmem>>, %arg14: memref<1x8x8x16xf32, #tpu.memory_space<vmem>>, %arg15: memref<18x18x4xf32, #tpu.memory_space<vmem>>) attributes {dimension_semantics = [#tpu.dimension_semantics<parallel>], iteration_bounds = array<i64: 2>, scalar_prefetch = 0 : i64, scratch_operands = 1 : i64, tpu.core_type = #tpu.core_type<tc>, window_params = [{transform_indices = @transform_0, window_bounds = array<i64: 1, 16, 16, 4>}, {pipeline_mode = #tpu.pipeline_mode<synchronous>, transform_indices = @transform_1, window_bounds = array<i64: 4, 4>}, {pipeline_mode = #tpu.pipeline_mode<synchronous>, transform_indices = @transform_2, window_bounds = array<i64: 1, 4>}, {pipeline_mode = #tpu.pipeline_mode<synchronous>, transform_indices = @transform_3, window_bounds = array<i64: 1, 4>}, {pipeline_mode = #tpu.pipeline_mode<synchronous>, transform_indices = @transform_4, window_bounds = array<i64: 3, 3, 4, 4>}, {pipeline_mode = #tpu.pipeline_mode<synchronous>, transform_indices = @transform_5, window_bounds = array<i64: 1, 4>}, {pipeline_mode = #tpu.pipeline_mode<synchronous>, transform_indices = @transform_6, window_bounds = array<i64: 1, 4>}, {pipeline_mode = #tpu.pipeline_mode<synchronous>, transform_indices = @transform_7, window_bounds = array<i64: 4, 16>}, {pipeline_mode = #tpu.pipeline_mode<synchronous>, transform_indices = @transform_8, window_bounds = array<i64: 1, 16>}, {pipeline_mode = #tpu.pipeline_mode<synchronous>, transform_indices = @transform_9, window_bounds = array<i64: 1, 16>}, {pipeline_mode = #tpu.pipeline_mode<synchronous>, transform_indices = @transform_10, window_bounds = array<i64: 4, 16>}, {pipeline_mode = #tpu.pipeline_mode<synchronous>, transform_indices = @transform_11, window_bounds = array<i64: 1, 16>}, {pipeline_mode = #tpu.pipeline_mode<synchronous>, transform_indices = @transform_12, window_bounds = array<i64: 1, 16>}, {transform_indices = @transform_13, window_bounds = array<i64: 1, 8, 8, 16>}]} {
    %cst = arith.constant 0.000000e+00 : f32
    %0 = vector.broadcast %cst : f32 to vector<18x18x4xf32>
    %c0 = arith.constant 0 : index
    %c0_0 = arith.constant 0 : index
    %c0_1 = arith.constant 0 : index
    %1 = vector.load %arg15[%c0, %c0_0, %c0_1] : memref<18x18x4xf32, #tpu.memory_space<vmem>>, vector<18x18x4xf32>
    tpu.vector_store %arg15[%c0, %c0_0, %c0_1], %0 {strides = array<i32>} : memref<18x18x4xf32, #tpu.memory_space<vmem>>, vector<18x18x4xf32>,
    %c0_2 = arith.constant 0 : index
    %c0_3 = arith.constant 0 : index
    %c0_4 = arith.constant 0 : index
    %c0_5 = arith.constant 0 : index
    %2 = vector.load %arg1[%c0_2, %c0_3, %c0_4, %c0_5] : memref<1x16x16x4xf32, #tpu.memory_space<vmem>>, vector<1x16x16x4xf32>
    %3 = vector.shape_cast %2 : vector<1x16x16x4xf32> to vector<16x16x4xf32>
    %4 = vector.shape_cast %3 : vector<16x16x4xf32> to vector<256x4xf32>
    %c0_6 = arith.constant 0 : index
    %c0_7 = arith.constant 0 : index
    %5 = vector.load %arg2[%c0_6, %c0_7] : memref<4x4xf32, #tpu.memory_space<vmem>>, vector<4x4xf32>
    %cst_8 = arith.constant dense<0.000000e+00> : vector<256x4xf32>
    %6 = tpu.matmul %4, %5, %cst_8 {dimension_numbers = #tpu.dot_dimension_numbers<[1], [0], [0], [1], [0, 0, 1, 1], [], []>} : vector<256x4xf32>, vector<4x4xf32>, vector<256x4xf32> -> vector<256x4xf32>
    %c0_9 = arith.constant 0 : index
    %c0_10 = arith.constant 0 : index
    %7 = vector.load %arg3[%c0_9, %c0_10] : memref<1x4xf32, #tpu.memory_space<vmem>>, vector<1x4xf32>
    %8 = vector.broadcast %7 : vector<1x4xf32> to vector<256x4xf32>
    %9 = arith.mulf %6, %8 : vector<256x4xf32>
    %c0_11 = arith.constant 0 : index
    %c0_12 = arith.constant 0 : index
    %10 = vector.load %arg4[%c0_11, %c0_12] : memref<1x4xf32, #tpu.memory_space<vmem>>, vector<1x4xf32>
    %11 = vector.broadcast %10 : vector<1x4xf32> to vector<256x4xf32>
    %12 = arith.addf %9, %11 : vector<256x4xf32>
    %cst_13 = arith.constant 0.000000e+00 : f32
    %13 = vector.broadcast %cst_13 : f32 to vector<256x4xf32>
    %14 = arith.maximumf %12, %13 : vector<256x4xf32>
    %15 = vector.shape_cast %14 : vector<256x4xf32> to vector<16x16x4xf32>
    %c1 = arith.constant 1 : index
    %c1_14 = arith.constant 1 : index
    %c0_15 = arith.constant 0 : index
    %16 = vector.load %arg15[%c1, %c1_14, %c0_15] : memref<18x18x4xf32, #tpu.memory_space<vmem>>, vector<16x16x4xf32>
    tpu.vector_store %arg15[%c1, %c1_14, %c0_15], %15 {strides = array<i32>} : memref<18x18x4xf32, #tpu.memory_space<vmem>>, vector<16x16x4xf32>,
    %cst_16 = arith.constant 0.000000e+00 : f32
    %17 = vector.broadcast %cst_16 : f32 to vector<64x4xf32>
    %c0_17 = arith.constant 0 : index
    %c0_18 = arith.constant 0 : index
    %c0_19 = arith.constant 0 : index
    %18 = tpu.strided_load %arg15[%c0_17, %c0_18, %c0_19] {strides = array<i32: 2, 2, 1>} : memref<18x18x4xf32, #tpu.memory_space<vmem>>, vector<8x8x4xf32>
    %19 = vector.shape_cast %18 : vector<8x8x4xf32> to vector<64x4xf32>
    %c0_20 = arith.constant 0 : index
    %c0_21 = arith.constant 0 : index
    %c0_22 = arith.constant 0 : index
    %c0_23 = arith.constant 0 : index
    %20 = vector.load %arg5[%c0_20, %c0_21, %c0_22, %c0_23] : memref<3x3x4x4xf32, #tpu.memory_space<vmem>>, vector<1x1x4x4xf32>
    %21 = vector.shape_cast %20 : vector<1x1x4x4xf32> to vector<4x4xf32>
    %cst_24 = arith.constant dense<0.000000e+00> : vector<64x4xf32>
    %22 = tpu.matmul %19, %21, %cst_24 {dimension_numbers = #tpu.dot_dimension_numbers<[1], [0], [0], [1], [0, 0, 1, 1], [], []>} : vector<64x4xf32>, vector<4x4xf32>, vector<64x4xf32> -> vector<64x4xf32>
    %23 = arith.addf %17, %22 : vector<64x4xf32>
    %c0_25 = arith.constant 0 : index
    %c1_26 = arith.constant 1 : index
    %c0_27 = arith.constant 0 : index
    %24 = tpu.strided_load %arg15[%c0_25, %c1_26, %c0_27] {strides = array<i32: 2, 2, 1>} : memref<18x18x4xf32, #tpu.memory_space<vmem>>, vector<8x8x4xf32>
    %25 = vector.shape_cast %24 : vector<8x8x4xf32> to vector<64x4xf32>
    %c0_28 = arith.constant 0 : index
    %c1_29 = arith.constant 1 : index
    %c0_30 = arith.constant 0 : index
    %c0_31 = arith.constant 0 : index
    %26 = vector.load %arg5[%c0_28, %c1_29, %c0_30, %c0_31] : memref<3x3x4x4xf32, #tpu.memory_space<vmem>>, vector<1x1x4x4xf32>
    %27 = vector.shape_cast %26 : vector<1x1x4x4xf32> to vector<4x4xf32>
    %cst_32 = arith.constant dense<0.000000e+00> : vector<64x4xf32>
    %28 = tpu.matmul %25, %27, %cst_32 {dimension_numbers = #tpu.dot_dimension_numbers<[1], [0], [0], [1], [0, 0, 1, 1], [], []>} : vector<64x4xf32>, vector<4x4xf32>, vector<64x4xf32> -> vector<64x4xf32>
    %29 = arith.addf %23, %28 : vector<64x4xf32>
    %c0_33 = arith.constant 0 : index
    %c2 = arith.constant 2 : index
    %c0_34 = arith.constant 0 : index
    %30 = tpu.strided_load %arg15[%c0_33, %c2, %c0_34] {strides = array<i32: 2, 2, 1>} : memref<18x18x4xf32, #tpu.memory_space<vmem>>, vector<8x8x4xf32>
    %31 = vector.shape_cast %30 : vector<8x8x4xf32> to vector<64x4xf32>
    %c0_35 = arith.constant 0 : index
    %c2_36 = arith.constant 2 : index
    %c0_37 = arith.constant 0 : index
    %c0_38 = arith.constant 0 : index
    %32 = vector.load %arg5[%c0_35, %c2_36, %c0_37, %c0_38] : memref<3x3x4x4xf32, #tpu.memory_space<vmem>>, vector<1x1x4x4xf32>
    %33 = vector.shape_cast %32 : vector<1x1x4x4xf32> to vector<4x4xf32>
    %cst_39 = arith.constant dense<0.000000e+00> : vector<64x4xf32>
    %34 = tpu.matmul %31, %33, %cst_39 {dimension_numbers = #tpu.dot_dimension_numbers<[1], [0], [0], [1], [0, 0, 1, 1], [], []>} : vector<64x4xf32>, vector<4x4xf32>, vector<64x4xf32> -> vector<64x4xf32>
    %35 = arith.addf %29, %34 : vector<64x4xf32>
    %c1_40 = arith.constant 1 : index
    %c0_41 = arith.constant 0 : index
    %c0_42 = arith.constant 0 : index
    %36 = tpu.strided_load %arg15[%c1_40, %c0_41, %c0_42] {strides = array<i32: 2, 2, 1>} : memref<18x18x4xf32, #tpu.memory_space<vmem>>, vector<8x8x4xf32>
    %37 = vector.shape_cast %36 : vector<8x8x4xf32> to vector<64x4xf32>
    %c1_43 = arith.constant 1 : index
    %c0_44 = arith.constant 0 : index
    %c0_45 = arith.constant 0 : index
    %c0_46 = arith.constant 0 : index
    %38 = vector.load %arg5[%c1_43, %c0_44, %c0_45, %c0_46] : memref<3x3x4x4xf32, #tpu.memory_space<vmem>>, vector<1x1x4x4xf32>
    %39 = vector.shape_cast %38 : vector<1x1x4x4xf32> to vector<4x4xf32>
    %cst_47 = arith.constant dense<0.000000e+00> : vector<64x4xf32>
    %40 = tpu.matmul %37, %39, %cst_47 {dimension_numbers = #tpu.dot_dimension_numbers<[1], [0], [0], [1], [0, 0, 1, 1], [], []>} : vector<64x4xf32>, vector<4x4xf32>, vector<64x4xf32> -> vector<64x4xf32>
    %41 = arith.addf %35, %40 : vector<64x4xf32>
    %c1_48 = arith.constant 1 : index
    %c1_49 = arith.constant 1 : index
    %c0_50 = arith.constant 0 : index
    %42 = tpu.strided_load %arg15[%c1_48, %c1_49, %c0_50] {strides = array<i32: 2, 2, 1>} : memref<18x18x4xf32, #tpu.memory_space<vmem>>, vector<8x8x4xf32>
    %43 = vector.shape_cast %42 : vector<8x8x4xf32> to vector<64x4xf32>
    %c1_51 = arith.constant 1 : index
    %c1_52 = arith.constant 1 : index
    %c0_53 = arith.constant 0 : index
    %c0_54 = arith.constant 0 : index
    %44 = vector.load %arg5[%c1_51, %c1_52, %c0_53, %c0_54] : memref<3x3x4x4xf32, #tpu.memory_space<vmem>>, vector<1x1x4x4xf32>
    %45 = vector.shape_cast %44 : vector<1x1x4x4xf32> to vector<4x4xf32>
    %cst_55 = arith.constant dense<0.000000e+00> : vector<64x4xf32>
    %46 = tpu.matmul %43, %45, %cst_55 {dimension_numbers = #tpu.dot_dimension_numbers<[1], [0], [0], [1], [0, 0, 1, 1], [], []>} : vector<64x4xf32>, vector<4x4xf32>, vector<64x4xf32> -> vector<64x4xf32>
    %47 = arith.addf %41, %46 : vector<64x4xf32>
    %c1_56 = arith.constant 1 : index
    %c2_57 = arith.constant 2 : index
    %c0_58 = arith.constant 0 : index
    %48 = tpu.strided_load %arg15[%c1_56, %c2_57, %c0_58] {strides = array<i32: 2, 2, 1>} : memref<18x18x4xf32, #tpu.memory_space<vmem>>, vector<8x8x4xf32>
    %49 = vector.shape_cast %48 : vector<8x8x4xf32> to vector<64x4xf32>
    %c1_59 = arith.constant 1 : index
    %c2_60 = arith.constant 2 : index
    %c0_61 = arith.constant 0 : index
    %c0_62 = arith.constant 0 : index
    %50 = vector.load %arg5[%c1_59, %c2_60, %c0_61, %c0_62] : memref<3x3x4x4xf32, #tpu.memory_space<vmem>>, vector<1x1x4x4xf32>
    %51 = vector.shape_cast %50 : vector<1x1x4x4xf32> to vector<4x4xf32>
    %cst_63 = arith.constant dense<0.000000e+00> : vector<64x4xf32>
    %52 = tpu.matmul %49, %51, %cst_63 {dimension_numbers = #tpu.dot_dimension_numbers<[1], [0], [0], [1], [0, 0, 1, 1], [], []>} : vector<64x4xf32>, vector<4x4xf32>, vector<64x4xf32> -> vector<64x4xf32>
    %53 = arith.addf %47, %52 : vector<64x4xf32>
    %c2_64 = arith.constant 2 : index
    %c0_65 = arith.constant 0 : index
    %c0_66 = arith.constant 0 : index
    %54 = tpu.strided_load %arg15[%c2_64, %c0_65, %c0_66] {strides = array<i32: 2, 2, 1>} : memref<18x18x4xf32, #tpu.memory_space<vmem>>, vector<8x8x4xf32>
    %55 = vector.shape_cast %54 : vector<8x8x4xf32> to vector<64x4xf32>
    %c2_67 = arith.constant 2 : index
    %c0_68 = arith.constant 0 : index
    %c0_69 = arith.constant 0 : index
    %c0_70 = arith.constant 0 : index
    %56 = vector.load %arg5[%c2_67, %c0_68, %c0_69, %c0_70] : memref<3x3x4x4xf32, #tpu.memory_space<vmem>>, vector<1x1x4x4xf32>
    %57 = vector.shape_cast %56 : vector<1x1x4x4xf32> to vector<4x4xf32>
    %cst_71 = arith.constant dense<0.000000e+00> : vector<64x4xf32>
    %58 = tpu.matmul %55, %57, %cst_71 {dimension_numbers = #tpu.dot_dimension_numbers<[1], [0], [0], [1], [0, 0, 1, 1], [], []>} : vector<64x4xf32>, vector<4x4xf32>, vector<64x4xf32> -> vector<64x4xf32>
    %59 = arith.addf %53, %58 : vector<64x4xf32>
    %c2_72 = arith.constant 2 : index
    %c1_73 = arith.constant 1 : index
    %c0_74 = arith.constant 0 : index
    %60 = tpu.strided_load %arg15[%c2_72, %c1_73, %c0_74] {strides = array<i32: 2, 2, 1>} : memref<18x18x4xf32, #tpu.memory_space<vmem>>, vector<8x8x4xf32>
    %61 = vector.shape_cast %60 : vector<8x8x4xf32> to vector<64x4xf32>
    %c2_75 = arith.constant 2 : index
    %c1_76 = arith.constant 1 : index
    %c0_77 = arith.constant 0 : index
    %c0_78 = arith.constant 0 : index
    %62 = vector.load %arg5[%c2_75, %c1_76, %c0_77, %c0_78] : memref<3x3x4x4xf32, #tpu.memory_space<vmem>>, vector<1x1x4x4xf32>
    %63 = vector.shape_cast %62 : vector<1x1x4x4xf32> to vector<4x4xf32>
    %cst_79 = arith.constant dense<0.000000e+00> : vector<64x4xf32>
    %64 = tpu.matmul %61, %63, %cst_79 {dimension_numbers = #tpu.dot_dimension_numbers<[1], [0], [0], [1], [0, 0, 1, 1], [], []>} : vector<64x4xf32>, vector<4x4xf32>, vector<64x4xf32> -> vector<64x4xf32>
    %65 = arith.addf %59, %64 : vector<64x4xf32>
    %c2_80 = arith.constant 2 : index
    %c2_81 = arith.constant 2 : index
    %c0_82 = arith.constant 0 : index
    %66 = tpu.strided_load %arg15[%c2_80, %c2_81, %c0_82] {strides = array<i32: 2, 2, 1>} : memref<18x18x4xf32, #tpu.memory_space<vmem>>, vector<8x8x4xf32>
    %67 = vector.shape_cast %66 : vector<8x8x4xf32> to vector<64x4xf32>
    %c2_83 = arith.constant 2 : index
    %c2_84 = arith.constant 2 : index
    %c0_85 = arith.constant 0 : index
    %c0_86 = arith.constant 0 : index
    %68 = vector.load %arg5[%c2_83, %c2_84, %c0_85, %c0_86] : memref<3x3x4x4xf32, #tpu.memory_space<vmem>>, vector<1x1x4x4xf32>
    %69 = vector.shape_cast %68 : vector<1x1x4x4xf32> to vector<4x4xf32>
    %cst_87 = arith.constant dense<0.000000e+00> : vector<64x4xf32>
    %70 = tpu.matmul %67, %69, %cst_87 {dimension_numbers = #tpu.dot_dimension_numbers<[1], [0], [0], [1], [0, 0, 1, 1], [], []>} : vector<64x4xf32>, vector<4x4xf32>, vector<64x4xf32> -> vector<64x4xf32>
    %71 = arith.addf %65, %70 : vector<64x4xf32>
    %c0_88 = arith.constant 0 : index
    %c0_89 = arith.constant 0 : index
    %72 = vector.load %arg6[%c0_88, %c0_89] : memref<1x4xf32, #tpu.memory_space<vmem>>, vector<1x4xf32>
    %73 = vector.broadcast %72 : vector<1x4xf32> to vector<64x4xf32>
    %74 = arith.mulf %71, %73 : vector<64x4xf32>
    %c0_90 = arith.constant 0 : index
    %c0_91 = arith.constant 0 : index
    %75 = vector.load %arg7[%c0_90, %c0_91] : memref<1x4xf32, #tpu.memory_space<vmem>>, vector<1x4xf32>
    %76 = vector.broadcast %75 : vector<1x4xf32> to vector<64x4xf32>
    %77 = arith.addf %74, %76 : vector<64x4xf32>
    %cst_92 = arith.constant 0.000000e+00 : f32
    %78 = vector.broadcast %cst_92 : f32 to vector<64x4xf32>
    %79 = arith.maximumf %77, %78 : vector<64x4xf32>
    %c0_93 = arith.constant 0 : index
    %c0_94 = arith.constant 0 : index
    %80 = vector.load %arg8[%c0_93, %c0_94] : memref<4x16xf32, #tpu.memory_space<vmem>>, vector<4x16xf32>
    %cst_95 = arith.constant dense<0.000000e+00> : vector<64x16xf32>
    %81 = tpu.matmul %79, %80, %cst_95 {dimension_numbers = #tpu.dot_dimension_numbers<[1], [0], [0], [1], [0, 0, 1, 1], [], []>} : vector<64x4xf32>, vector<4x16xf32>, vector<64x16xf32> -> vector<64x16xf32>
    %c0_96 = arith.constant 0 : index
    %c0_97 = arith.constant 0 : index
    %82 = vector.load %arg9[%c0_96, %c0_97] : memref<1x16xf32, #tpu.memory_space<vmem>>, vector<1x16xf32>
    %83 = vector.broadcast %82 : vector<1x16xf32> to vector<64x16xf32>
    %84 = arith.mulf %81, %83 : vector<64x16xf32>
    %c0_98 = arith.constant 0 : index
    %c0_99 = arith.constant 0 : index
    %85 = vector.load %arg10[%c0_98, %c0_99] : memref<1x16xf32, #tpu.memory_space<vmem>>, vector<1x16xf32>
    %86 = vector.broadcast %85 : vector<1x16xf32> to vector<64x16xf32>
    %87 = arith.addf %84, %86 : vector<64x16xf32>
    %c0_100 = arith.constant 0 : index
    %c0_101 = arith.constant 0 : index
    %c0_102 = arith.constant 0 : index
    %c0_103 = arith.constant 0 : index
    %88 = tpu.strided_load %arg1[%c0_100, %c0_101, %c0_102, %c0_103] {strides = array<i32: 1, 2, 2, 1>} : memref<1x16x16x4xf32, #tpu.memory_space<vmem>>, vector<1x8x8x4xf32>
    %89 = vector.shape_cast %88 : vector<1x8x8x4xf32> to vector<8x8x4xf32>
    %90 = vector.shape_cast %89 : vector<8x8x4xf32> to vector<64x4xf32>
    %c0_104 = arith.constant 0 : index
    %c0_105 = arith.constant 0 : index
    %91 = vector.load %arg11[%c0_104, %c0_105] : memref<4x16xf32, #tpu.memory_space<vmem>>, vector<4x16xf32>
    %cst_106 = arith.constant dense<0.000000e+00> : vector<64x16xf32>
    %92 = tpu.matmul %90, %91, %cst_106 {dimension_numbers = #tpu.dot_dimension_numbers<[1], [0], [0], [1], [0, 0, 1, 1], [], []>} : vector<64x4xf32>, vector<4x16xf32>, vector<64x16xf32> -> vector<64x16xf32>
    %c0_107 = arith.constant 0 : index
    %c0_108 = arith.constant 0 : index
    %93 = vector.load %arg12[%c0_107, %c0_108] : memref<1x16xf32, #tpu.memory_space<vmem>>, vector<1x16xf32>
    %94 = vector.broadcast %93 : vector<1x16xf32> to vector<64x16xf32>
    %95 = arith.mulf %92, %94 : vector<64x16xf32>
    %c0_109 = arith.constant 0 : index
    %c0_110 = arith.constant 0 : index
    %96 = vector.load %arg13[%c0_109, %c0_110] : memref<1x16xf32, #tpu.memory_space<vmem>>, vector<1x16xf32>
    %97 = vector.broadcast %96 : vector<1x16xf32> to vector<64x16xf32>
    %98 = arith.addf %95, %97 : vector<64x16xf32>
    %99 = arith.addf %87, %98 : vector<64x16xf32>
    %cst_111 = arith.constant 0.000000e+00 : f32
    %100 = vector.broadcast %cst_111 : f32 to vector<64x16xf32>
    %101 = arith.maximumf %99, %100 : vector<64x16xf32>
    %102 = vector.shape_cast %101 : vector<64x16xf32> to vector<8x8x16xf32>
    %c0_112 = arith.constant 0 : index
    %c0_113 = arith.constant 0 : index
    %c0_114 = arith.constant 0 : index
    %c0_115 = arith.constant 0 : index
    %103 = vector.load %arg14[%c0_112, %c0_113, %c0_114, %c0_115] : memref<1x8x8x16xf32, #tpu.memory_space<vmem>>, vector<1x8x8x16xf32>
    %104 = vector.shape_cast %103 : vector<1x8x8x16xf32> to vector<8x8x16xf32>
    %105 = vector.shape_cast %102 : vector<8x8x16xf32> to vector<1x8x8x16xf32>
    tpu.vector_store %arg14[%c0_112, %c0_113, %c0_114, %c0_115], %105 {strides = array<i32>} : memref<1x8x8x16xf32, #tpu.memory_space<vmem>>, vector<1x8x8x16xf32>,
    return
  }
  func.func @transform_0(%arg0: i32) -> (i32, i32, i32, i32) {
    %c0_i32 = arith.constant 0 : i32
    %c0_i32_0 = arith.constant 0 : i32
    %c0_i32_1 = arith.constant 0 : i32
    %c0_i32_2 = arith.constant 0 : i32
    return %arg0, %c0_i32, %c0_i32_0, %c0_i32_1 : i32, i32, i32, i32
  }
  func.func @transform_1(%arg0: i32) -> (i32, i32) {
    %c0_i32 = arith.constant 0 : i32
    %c0_i32_0 = arith.constant 0 : i32
    %c0_i32_1 = arith.constant 0 : i32
    return %c0_i32, %c0_i32_0 : i32, i32
  }
  func.func @transform_2(%arg0: i32) -> (i32, i32) {
    %c0_i32 = arith.constant 0 : i32
    %c0_i32_0 = arith.constant 0 : i32
    %c0_i32_1 = arith.constant 0 : i32
    return %c0_i32, %c0_i32_0 : i32, i32
  }
  func.func @transform_3(%arg0: i32) -> (i32, i32) {
    %c0_i32 = arith.constant 0 : i32
    %c0_i32_0 = arith.constant 0 : i32
    %c0_i32_1 = arith.constant 0 : i32
    return %c0_i32, %c0_i32_0 : i32, i32
  }
  func.func @transform_4(%arg0: i32) -> (i32, i32, i32, i32) {
    %c0_i32 = arith.constant 0 : i32
    %c0_i32_0 = arith.constant 0 : i32
    %c0_i32_1 = arith.constant 0 : i32
    %c0_i32_2 = arith.constant 0 : i32
    %c0_i32_3 = arith.constant 0 : i32
    return %c0_i32, %c0_i32_0, %c0_i32_1, %c0_i32_2 : i32, i32, i32, i32
  }
  func.func @transform_5(%arg0: i32) -> (i32, i32) {
    %c0_i32 = arith.constant 0 : i32
    %c0_i32_0 = arith.constant 0 : i32
    %c0_i32_1 = arith.constant 0 : i32
    return %c0_i32, %c0_i32_0 : i32, i32
  }
  func.func @transform_6(%arg0: i32) -> (i32, i32) {
    %c0_i32 = arith.constant 0 : i32
    %c0_i32_0 = arith.constant 0 : i32
    %c0_i32_1 = arith.constant 0 : i32
    return %c0_i32, %c0_i32_0 : i32, i32
  }
  func.func @transform_7(%arg0: i32) -> (i32, i32) {
    %c0_i32 = arith.constant 0 : i32
    %c0_i32_0 = arith.constant 0 : i32
    %c0_i32_1 = arith.constant 0 : i32
    return %c0_i32, %c0_i32_0 : i32, i32
  }
  func.func @transform_8(%arg0: i32) -> (i32, i32) {
    %c0_i32 = arith.constant 0 : i32
    %c0_i32_0 = arith.constant 0 : i32
    %c0_i32_1 = arith.constant 0 : i32
    return %c0_i32, %c0_i32_0 : i32, i32
  }
  func.func @transform_9(%arg0: i32) -> (i32, i32) {
    %c0_i32 = arith.constant 0 : i32
    %c0_i32_0 = arith.constant 0 : i32
    %c0_i32_1 = arith.constant 0 : i32
    return %c0_i32, %c0_i32_0 : i32, i32
  }
  func.func @transform_10(%arg0: i32) -> (i32, i32) {
    %c0_i32 = arith.constant 0 : i32
    %c0_i32_0 = arith.constant 0 : i32
    %c0_i32_1 = arith.constant 0 : i32
    return %c0_i32, %c0_i32_0 : i32, i32
  }
  func.func @transform_11(%arg0: i32) -> (i32, i32) {
    %c0_i32 = arith.constant 0 : i32
    %c0_i32_0 = arith.constant 0 : i32
    %c0_i32_1 = arith.constant 0 : i32
    return %c0_i32, %c0_i32_0 : i32, i32
  }
  func.func @transform_12(%arg0: i32) -> (i32, i32) {
    %c0_i32 = arith.constant 0 : i32
    %c0_i32_0 = arith.constant 0 : i32
    %c0_i32_1 = arith.constant 0 : i32
    return %c0_i32, %c0_i32_0 : i32, i32
  }
  func.func @transform_13(%arg0: i32) -> (i32, i32, i32, i32) {
    %c0_i32 = arith.constant 0 : i32
    %c0_i32_0 = arith.constant 0 : i32
    %c0_i32_1 = arith.constant 0 : i32
    %c0_i32_2 = arith.constant 0 : i32
    return %arg0, %c0_i32, %c0_i32_0, %c0_i32_1 : i32, i32, i32, i32
  }
}

</mosaic_0001>

<llo_original>
// kernel: tpu_custom_call.1
$region0: #{tpu_custom_call.1}
  #allocation0 [shape = 'u32[]', space=smem, size = 0x4, offset = 0x4, fixed_abs, tag = 'smem constant byte address 0x4 - core index']
  #allocation1 [shape = 'u32[144,128]{1,0:T(1,128)}', space=vmem, size = 0x12000, scoped, tag = 'internal scratch']
  #allocation2 [shape = 'f32[18,18,4]{2,1,0:T(8,128)}', space=vmem, size = 0x36000, scoped, tag = 'scratch operand']
  %s0 = inlined_call_operand.vmem [shape: f32[2,16,16,4], index: 0, kind: input, shape index: {}]
  %s1 = inlined_call_operand.vmem [shape: f32[4,4], index: 1, kind: input, shape index: {}]
  %s2 = inlined_call_operand.vmem [shape: f32[1,4], index: 2, kind: input, shape index: {}]
  %s3 = inlined_call_operand.vmem [shape: f32[1,4], index: 3, kind: input, shape index: {}]
  %s4 = inlined_call_operand.vmem [shape: f32[3,3,4,4], index: 4, kind: input, shape index: {}]
  %s5 = inlined_call_operand.vmem [shape: f32[1,4], index: 5, kind: input, shape index: {}]
  %s6 = inlined_call_operand.vmem [shape: f32[1,4], index: 6, kind: input, shape index: {}]
  %s7 = inlined_call_operand.vmem [shape: f32[4,16], index: 7, kind: input, shape index: {}]
  %s8 = inlined_call_operand.vmem [shape: f32[1,16], index: 8, kind: input, shape index: {}]
  %s9 = inlined_call_operand.vmem [shape: f32[1,16], index: 9, kind: input, shape index: {}]
  %s10 = inlined_call_operand.vmem [shape: f32[4,16], index: 10, kind: input, shape index: {}]
  %s11 = inlined_call_operand.vmem [shape: f32[1,16], index: 11, kind: input, shape index: {}]
  %s12 = inlined_call_operand.vmem [shape: f32[1,16], index: 12, kind: input, shape index: {}]
  %s13 = inlined_call_operand.hbm [shape: f32[2,8,8,16], index: 13, kind: output, shape index: {}]
  %s14 = sld [smem:[#allocation0]]
  $region85: #{tpu_custom_call.1} parent=0
    _
  %s16 = ssub.s32 1, %s14
  %s17 = scalar_select 0, %s16, %s14
  $region1: #{tpu_custom_call.1} parent=0
    #allocation3 [shape = 'u8[65536]{0}', space=vmem, size = 0x10000, scoped, tag = 'output window, operand 0']
    #allocation4 [shape = 's32[2]{0}', space=sflag, size = 0x8, scoped, tag = 'scoped memory for tpu_custom_call.1']
    %18 = vsyncpa [#allocation4], 0
    %s19 = scalar_lea.sflag [#allocation4], 1
    %20 = vsyncpa %s19, 0
    loop: start=0, step=1, limit=4
    $region2: #{tpu_custom_call.1} parent=1 // loop_pre_header
      _
    $region3: #{tpu_custom_call.1} parent=1 // loop_header
      %s22 = sphi 0, %s26
      %p23 = scmp.ge.s32.totalorder %s22, 4
      %s32 = sphi 0, %s34
      %s35 = sphi 0, %s32
      %s36 = sphi 0, %s35
      %s52 = sphi 0, %s36
      %s56 = sphi 0, %s56
      %s58 = sphi 0, %s56
      %s59 = sphi 0, %s58
      %s73 = sphi 0, %s59
      %s77 = sphi 0, %s77
      %s79 = sphi 0, %s77
      %s80 = sphi 0, %s79
      %s94 = sphi 0, %s80
      %s98 = sphi 0, %s98
      %s100 = sphi 0, %s98
      %s101 = sphi 0, %s100
      %s115 = sphi 0, %s101
      %s119 = sphi 0, %s119
      %s121 = sphi 0, %s119
      %s122 = sphi 0, %s121
      %s136 = sphi 0, %s122
      %s140 = sphi 0, %s140
      %s142 = sphi 0, %s140
      %s143 = sphi 0, %s142
      %s157 = sphi 0, %s143
      %s161 = sphi 0, %s161
      %s163 = sphi 0, %s161
      %s164 = sphi 0, %s163
      %s178 = sphi 0, %s164
      %s182 = sphi 0, %s182
      %s184 = sphi 0, %s182
      %s185 = sphi 0, %s184
      %s199 = sphi 0, %s185
      %s203 = sphi 0, %s203
      %s205 = sphi 0, %s203
      %s206 = sphi 0, %s205
      %s220 = sphi 0, %s206
      %s224 = sphi 0, %s224
      %s226 = sphi 0, %s224
      %s227 = sphi 0, %s226
      %s241 = sphi 0, %s227
      %s245 = sphi 0, %s245
      %s247 = sphi 0, %s245
      %s248 = sphi 0, %s247
      %s262 = sphi 0, %s248
      %s266 = sphi 0, %s266
      %s268 = sphi 0, %s266
      %s269 = sphi 0, %s268
      %s283 = sphi 0, %s269
      %s287 = sphi 0, %s287
      %s289 = sphi 0, %s287
      %s290 = sphi 0, %s289
      %s304 = sphi 0, %s290
      %s310 = sphi 0, %s312
      %s313 = sphi 0, %s310
      %s314 = sphi 0, %s313
      %s330 = sphi 0, %s314
    $region4: #{tpu_custom_call.1} parent=1 // loop_header_branch
      %25 = sbr.rel (%p23) target = $region8
    $region5: #{tpu_custom_call.1} parent=1 // loop_body
      %s27 = ssub.s32 %s22, 1
      %s28 = ssub.s32 %s22, 2
      %s29 = sadd.s32 %s22, 1
      %s30 = ssub.s32 %s22, %s29
      %p31 = scmp.eq.s32.totalorder %s30, 0
      %s33 = sadd.s32 %s32, 1
      %s34 = scalar_select %p31, %s32, %s33
      %p37 = pneg %p31
      %p38 = scmp.eq.s32.totalorder %s22, 1
      %p39 = por %p37, %p38
      %p40 = scmp.ne.s32.totalorder %s32, %s35
      %p41 = scmp.eq.s32.totalorder %s22, 0
      %p42 = por %p40, %p41
      %p43 = scmp.ne.s32.totalorder %s32, %s35
      %p44 = scmp.eq.s32.totalorder %s27, 1
      %p45 = por %p43, %p44
      %p46 = scmp.ne.s32.totalorder %s35, %s36
      %p47 = scmp.eq.s32.totalorder %s27, 0
      %p48 = por %p46, %p47
      %p49 = scmp.ne.s32.totalorder %s35, %s36
      %p50 = scmp.eq.s32.totalorder %s28, 1
      %p51 = por %p49, %p50
      %p53 = scmp.ne.s32.totalorder %s36, %s52
      %p54 = scmp.eq.s32.totalorder %s28, 0
      %p55 = por %p53, %p54
      %s57 = sadd.s32 %s56, 1
      %p60 = scmp.eq.s32.totalorder %s22, 1
      %p61 = scmp.ne.s32.totalorder %s56, %s58
      %p62 = scmp.eq.s32.totalorder %s22, 0
      %p63 = por %p61, %p62
      %p64 = scmp.ne.s32.totalorder %s56, %s58
      %p65 = scmp.eq.s32.totalorder %s27, 1
      %p66 = por %p64, %p65
      %p67 = scmp.ne.s32.totalorder %s58, %s59
      %p68 = scmp.eq.s32.totalorder %s27, 0
      %p69 = por %p67, %p68
      %p70 = scmp.ne.s32.totalorder %s58, %s59
      %p71 = scmp.eq.s32.totalorder %s28, 1
      %p72 = por %p70, %p71
      %p74 = scmp.ne.s32.totalorder %s59, %s73
      %p75 = scmp.eq.s32.totalorder %s28, 0
      %p76 = por %p74, %p75
      %s78 = sadd.s32 %s77, 1
      %p81 = scmp.eq.s32.totalorder %s22, 1
      %p82 = scmp.ne.s32.totalorder %s77, %s79
      %p83 = scmp.eq.s32.totalorder %s22, 0
      %p84 = por %p82, %p83
      %p85 = scmp.ne.s32.totalorder %s77, %s79
      %p86 = scmp.eq.s32.totalorder %s27, 1
      %p87 = por %p85, %p86
      %p88 = scmp.ne.s32.totalorder %s79, %s80
      %p89 = scmp.eq.s32.totalorder %s27, 0
      %p90 = por %p88, %p89
      %p91 = scmp.ne.s32.totalorder %s79, %s80
      %p92 = scmp.eq.s32.totalorder %s28, 1
      %p93 = por %p91, %p92
      %p95 = scmp.ne.s32.totalorder %s80, %s94
      %p96 = scmp.eq.s32.totalorder %s28, 0
      %p97 = por %p95, %p96
      %s99 = sadd.s32 %s98, 1
      %p102 = scmp.eq.s32.totalorder %s22, 1
      %p103 = scmp.ne.s32.totalorder %s98, %s100
      %p104 = scmp.eq.s32.totalorder %s22, 0
      %p105 = por %p103, %p104
      %p106 = scmp.ne.s32.totalorder %s98, %s100
      %p107 = scmp.eq.s32.totalorder %s27, 1
      %p108 = por %p106, %p107
      %p109 = scmp.ne.s32.totalorder %s100, %s101
      %p110 = scmp.eq.s32.totalorder %s27, 0
      %p111 = por %p109, %p110
      %p112 = scmp.ne.s32.totalorder %s100, %s101
      %p113 = scmp.eq.s32.totalorder %s28, 1
      %p114 = por %p112, %p113
      %p116 = scmp.ne.s32.totalorder %s101, %s115
      %p117 = scmp.eq.s32.totalorder %s28, 0
      %p118 = por %p116, %p117
      %s120 = sadd.s32 %s119, 1
      %p123 = scmp.eq.s32.totalorder %s22, 1
      %p124 = scmp.ne.s32.totalorder %s119, %s121
      %p125 = scmp.eq.s32.totalorder %s22, 0
      %p126 = por %p124, %p125
      %p127 = scmp.ne.s32.totalorder %s119, %s121
      %p128 = scmp.eq.s32.totalorder %s27, 1
      %p129 = por %p127, %p128
      %p130 = scmp.ne.s32.totalorder %s121, %s122
      %p131 = scmp.eq.s32.totalorder %s27, 0
      %p132 = por %p130, %p131
      %p133 = scmp.ne.s32.totalorder %s121, %s122
      %p134 = scmp.eq.s32.totalorder %s28, 1
      %p135 = por %p133, %p134
      %p137 = scmp.ne.s32.totalorder %s122, %s136
      %p138 = scmp.eq.s32.totalorder %s28, 0
      %p139 = por %p137, %p138
      %s141 = sadd.s32 %s140, 1
      %p144 = scmp.eq.s32.totalorder %s22, 1
      %p145 = scmp.ne.s32.totalorder %s140, %s142
      %p146 = scmp.eq.s32.totalorder %s22, 0
      %p147 = por %p145, %p146
      %p148 = scmp.ne.s32.totalorder %s140, %s142
      %p149 = scmp.eq.s32.totalorder %s27, 1
      %p150 = por %p148, %p149
      %p151 = scmp.ne.s32.totalorder %s142, %s143
      %p152 = scmp.eq.s32.totalorder %s27, 0
      %p153 = por %p151, %p152
      %p154 = scmp.ne.s32.totalorder %s142, %s143
      %p155 = scmp.eq.s32.totalorder %s28, 1
      %p156 = por %p154, %p155
      %p158 = scmp.ne.s32.totalorder %s143, %s157
      %p159 = scmp.eq.s32.totalorder %s28, 0
      %p160 = por %p158, %p159
      %s162 = sadd.s32 %s161, 1
      %p165 = scmp.eq.s32.totalorder %s22, 1
      %p166 = scmp.ne.s32.totalorder %s161, %s163
      %p167 = scmp.eq.s32.totalorder %s22, 0
      %p168 = por %p166, %p167
      %p169 = scmp.ne.s32.totalorder %s161, %s163
      %p170 = scmp.eq.s32.totalorder %s27, 1
      %p171 = por %p169, %p170
      %p172 = scmp.ne.s32.totalorder %s163, %s164
      %p173 = scmp.eq.s32.totalorder %s27, 0
      %p174 = por %p172, %p173
      %p175 = scmp.ne.s32.totalorder %s163, %s164
      %p176 = scmp.eq.s32.totalorder %s28, 1
      %p177 = por %p175, %p176
      %p179 = scmp.ne.s32.totalorder %s164, %s178
      %p180 = scmp.eq.s32.totalorder %s28, 0
      %p181 = por %p179, %p180
      %s183 = sadd.s32 %s182, 1
      %p186 = scmp.eq.s32.totalorder %s22, 1
      %p187 = scmp.ne.s32.totalorder %s182, %s184
      %p188 = scmp.eq.s32.totalorder %s22, 0
      %p189 = por %p187, %p188
      %p190 = scmp.ne.s32.totalorder %s182, %s184
      %p191 = scmp.eq.s32.totalorder %s27, 1
      %p192 = por %p190, %p191
      %p193 = scmp.ne.s32.totalorder %s184, %s185
      %p194 = scmp.eq.s32.totalorder %s27, 0
      %p195 = por %p193, %p194
      %p196 = scmp.ne.s32.totalorder %s184, %s185
      %p197 = scmp.eq.s32.totalorder %s28, 1
      %p198 = por %p196, %p197
      %p200 = scmp.ne.s32.totalorder %s185, %s199
      %p201 = scmp.eq.s32.totalorder %s28, 0
      %p202 = por %p200, %p201
      %s204 = sadd.s32 %s203, 1
      %p207 = scmp.eq.s32.totalorder %s22, 1
      %p208 = scmp.ne.s32.totalorder %s203, %s205
      %p209 = scmp.eq.s32.totalorder %s22, 0
      %p210 = por %p208, %p209
      %p211 = scmp.ne.s32.totalorder %s203, %s205
      %p212 = scmp.eq.s32.totalorder %s27, 1
      %p213 = por %p211, %p212
      %p214 = scmp.ne.s32.totalorder %s205, %s206
      %p215 = scmp.eq.s32.totalorder %s27, 0
      %p216 = por %p214, %p215
      %p217 = scmp.ne.s32.totalorder %s205, %s206
      %p218 = scmp.eq.s32.totalorder %s28, 1
      %p219 = por %p217, %p218
      %p221 = scmp.ne.s32.totalorder %s206, %s220
      %p222 = scmp.eq.s32.totalorder %s28, 0
      %p223 = por %p221, %p222
      %s225 = sadd.s32 %s224, 1
      %p228 = scmp.eq.s32.totalorder %s22, 1
      %p229 = scmp.ne.s32.totalorder %s224, %s226
      %p230 = scmp.eq.s32.totalorder %s22, 0
      %p231 = por %p229, %p230
      %p232 = scmp.ne.s32.totalorder %s224, %s226
      %p233 = scmp.eq.s32.totalorder %s27, 1
      %p234 = por %p232, %p233
      %p235 = scmp.ne.s32.totalorder %s226, %s227
      %p236 = scmp.eq.s32.totalorder %s27, 0
      %p237 = por %p235, %p236
      %p238 = scmp.ne.s32.totalorder %s226, %s227
      %p239 = scmp.eq.s32.totalorder %s28, 1
      %p240 = por %p238, %p239
      %p242 = scmp.ne.s32.totalorder %s227, %s241
      %p243 = scmp.eq.s32.totalorder %s28, 0
      %p244 = por %p242, %p243
      %s246 = sadd.s32 %s245, 1
      %p249 = scmp.eq.s32.totalorder %s22, 1
      %p250 = scmp.ne.s32.totalorder %s245, %s247
      %p251 = scmp.eq.s32.totalorder %s22, 0
      %p252 = por %p250, %p251
      %p253 = scmp.ne.s32.totalorder %s245, %s247
      %p254 = scmp.eq.s32.totalorder %s27, 1
      %p255 = por %p253, %p254
      %p256 = scmp.ne.s32.totalorder %s247, %s248
      %p257 = scmp.eq.s32.totalorder %s27, 0
      %p258 = por %p256, %p257
      %p259 = scmp.ne.s32.totalorder %s247, %s248
      %p260 = scmp.eq.s32.totalorder %s28, 1
      %p261 = por %p259, %p260
      %p263 = scmp.ne.s32.totalorder %s248, %s262
      %p264 = scmp.eq.s32.totalorder %s28, 0
      %p265 = por %p263, %p264
      %s267 = sadd.s32 %s266, 1
      %p270 = scmp.eq.s32.totalorder %s22, 1
      %p271 = scmp.ne.s32.totalorder %s266, %s268
      %p272 = scmp.eq.s32.totalorder %s22, 0
      %p273 = por %p271, %p272
      %p274 = scmp.ne.s32.totalorder %s266, %s268
      %p275 = scmp.eq.s32.totalorder %s27, 1
      %p276 = por %p274, %p275
      %p277 = scmp.ne.s32.totalorder %s268, %s269
      %p278 = scmp.eq.s32.totalorder %s27, 0
      %p279 = por %p277, %p278
      %p280 = scmp.ne.s32.totalorder %s268, %s269
      %p281 = scmp.eq.s32.totalorder %s28, 1
      %p282 = por %p280, %p281
      %p284 = scmp.ne.s32.totalorder %s269, %s283
      %p285 = scmp.eq.s32.totalorder %s28, 0
      %p286 = por %p284, %p285
      %s288 = sadd.s32 %s287, 1
      %p291 = scmp.eq.s32.totalorder %s22, 1
      %p292 = scmp.ne.s32.totalorder %s287, %s289
      %p293 = scmp.eq.s32.totalorder %s22, 0
      %p294 = por %p292, %p293
      %p295 = scmp.ne.s32.totalorder %s287, %s289
      %p296 = scmp.eq.s32.totalorder %s27, 1
      %p297 = por %p295, %p296
      %p298 = scmp.ne.s32.totalorder %s289, %s290
      %p299 = scmp.eq.s32.totalorder %s27, 0
      %p300 = por %p298, %p299
      %p301 = scmp.ne.s32.totalorder %s289, %s290
      %p302 = scmp.eq.s32.totalorder %s28, 1
      %p303 = por %p301, %p302
      %p305 = scmp.ne.s32.totalorder %s290, %s304
      %p306 = scmp.eq.s32.totalorder %s28, 0
      %p307 = por %p305, %p306
      %s308 = ssub.s32 %s22, %s29
      %p309 = scmp.eq.s32.totalorder %s308, 0
      %s311 = sadd.s32 %s310, 1
      %s312 = scalar_select %p309, %s310, %s311
      %p315 = pneg %p309
      %p316 = scmp.eq.s32.totalorder %s22, 1
      %p317 = por %p315, %p316
      %p318 = scmp.ne.s32.totalorder %s310, %s313
      %p319 = scmp.eq.s32.totalorder %s22, 0
      %p320 = por %p318, %p319
      %p321 = scmp.ne.s32.totalorder %s310, %s313
      %p322 = scmp.eq.s32.totalorder %s27, 1
      %p323 = por %p321, %p322
      %p324 = scmp.ne.s32.totalorder %s313, %s314
      %p325 = scmp.eq.s32.totalorder %s27, 0
      %p326 = por %p324, %p325
      %p327 = scmp.ne.s32.totalorder %s313, %s314
      %p328 = scmp.eq.s32.totalorder %s28, 1
      %p329 = por %p327, %p328
      %p331 = scmp.ne.s32.totalorder %s314, %s330
      %p332 = scmp.eq.s32.totalorder %s28, 0
      %p333 = por %p331, %p332
      %p334 = scmp.le.s32.totalorder 1, %s22
      %p335 = scmp.lt.s32.totalorder %s22, 3
      %p336 = pnand %p334, %p335
      %p337 = pneg %p336
      // Predicated region
      $region9: #{tpu_custom_call.1} parent=5 // pred_check
        _
      $region10: #{tpu_custom_call.1} parent=5 // pred_check_branch
        %339 = sbr.rel (%p336) target = $region12
      $region11: #{tpu_custom_call.1} parent=5 // pred_region
        %s340 = ssub.s32 %s22, 1
        // Predicated region
        $region13: #{tpu_custom_call.1} parent=11 // pred_check
          %p341 = pneg %p69
        $region14: #{tpu_custom_call.1} parent=11 // pred_check_branch
          %343 = sbr.rel (%p341) target = $region16
        $region15: #{tpu_custom_call.1} parent=11 // pred_region
          _
        $region16: #{tpu_custom_call.1} parent=11 // pred_fallthru
          _
        // Predicated region
        $region17: #{tpu_custom_call.1} parent=11 // pred_check
          %p344 = pneg %p90
        $region18: #{tpu_custom_call.1} parent=11 // pred_check_branch
          %346 = sbr.rel (%p344) target = $region20
        $region19: #{tpu_custom_call.1} parent=11 // pred_region
          _
        $region20: #{tpu_custom_call.1} parent=11 // pred_fallthru
          _
        // Predicated region
        $region21: #{tpu_custom_call.1} parent=11 // pred_check
          %p347 = pneg %p111
        $region22: #{tpu_custom_call.1} parent=11 // pred_check_branch
          %349 = sbr.rel (%p347) target = $region24
        $region23: #{tpu_custom_call.1} parent=11 // pred_region
          _
        $region24: #{tpu_custom_call.1} parent=11 // pred_fallthru
          _
        // Predicated region
        $region25: #{tpu_custom_call.1} parent=11 // pred_check
          %p350 = pneg %p132
        $region26: #{tpu_custom_call.1} parent=11 // pred_check_branch
          %352 = sbr.rel (%p350) target = $region28
        $region27: #{tpu_custom_call.1} parent=11 // pred_region
          _
        $region28: #{tpu_custom_call.1} parent=11 // pred_fallthru
          _
        // Predicated region
        $region29: #{tpu_custom_call.1} parent=11 // pred_check
          %p353 = pneg %p153
        $region30: #{tpu_custom_call.1} parent=11 // pred_check_branch
          %355 = sbr.rel (%p353) target = $region32
        $region31: #{tpu_custom_call.1} parent=11 // pred_region
          _
        $region32: #{tpu_custom_call.1} parent=11 // pred_fallthru
          _
        // Predicated region
        $region33: #{tpu_custom_call.1} parent=11 // pred_check
          %p356 = pneg %p174
        $region34: #{tpu_custom_call.1} parent=11 // pred_check_branch
          %358 = sbr.rel (%p356) target = $region36
        $region35: #{tpu_custom_call.1} parent=11 // pred_region
          _
        $region36: #{tpu_custom_call.1} parent=11 // pred_fallthru
          _
        // Predicated region
        $region37: #{tpu_custom_call.1} parent=11 // pred_check
          %p359 = pneg %p195
        $region38: #{tpu_custom_call.1} parent=11 // pred_check_branch
          %361 = sbr.rel (%p359) target = $region40
        $region39: #{tpu_custom_call.1} parent=11 // pred_region
          _
        $region40: #{tpu_custom_call.1} parent=11 // pred_fallthru
          _
        // Predicated region
        $region41: #{tpu_custom_call.1} parent=11 // pred_check
          %p362 = pneg %p216
        $region42: #{tpu_custom_call.1} parent=11 // pred_check_branch
          %364 = sbr.rel (%p362) target = $region44
        $region43: #{tpu_custom_call.1} parent=11 // pred_region
          _
        $region44: #{tpu_custom_call.1} parent=11 // pred_fallthru
          _
        // Predicated region
        $region45: #{tpu_custom_call.1} parent=11 // pred_check
          %p365 = pneg %p237
        $region46: #{tpu_custom_call.1} parent=11 // pred_check_branch
          %367 = sbr.rel (%p365) target = $region48
        $region47: #{tpu_custom_call.1} parent=11 // pred_region
          _
        $region48: #{tpu_custom_call.1} parent=11 // pred_fallthru
          _
        // Predicated region
        $region49: #{tpu_custom_call.1} parent=11 // pred_check
          %p368 = pneg %p258
        $region50: #{tpu_custom_call.1} parent=11 // pred_check_branch
          %370 = sbr.rel (%p368) target = $region52
        $region51: #{tpu_custom_call.1} parent=11 // pred_region
          _
        $region52: #{tpu_custom_call.1} parent=11 // pred_fallthru
          _
        // Predicated region
        $region53: #{tpu_custom_call.1} parent=11 // pred_check
          %p371 = pneg %p279
        $region54: #{tpu_custom_call.1} parent=11 // pred_check_branch
          %373 = sbr.rel (%p371) target = $region56
        $region55: #{tpu_custom_call.1} parent=11 // pred_region
          _
        $region56: #{tpu_custom_call.1} parent=11 // pred_fallthru
          _
        // Predicated region
        $region57: #{tpu_custom_call.1} parent=11 // pred_check
          %p374 = pneg %p300
        $region58: #{tpu_custom_call.1} parent=11 // pred_check_branch
          %376 = sbr.rel (%p374) target = $region60
        $region59: #{tpu_custom_call.1} parent=11 // pred_region
          _
        $region60: #{tpu_custom_call.1} parent=11 // pred_fallthru
          _
      $region12: #{tpu_custom_call.1} parent=5 // pred_fallthru
        _
      %p377 = scmp.lt.s32.totalorder %s22, 2
      // Predicated region
      $region61: #{tpu_custom_call.1} parent=5 // pred_check
        %p378 = pneg %p377
      $region62: #{tpu_custom_call.1} parent=5 // pred_check_branch
        %380 = sbr.rel (%p378) target = $region64
      $region63: #{tpu_custom_call.1} parent=5 // pred_region
        // Predicated region
        $region65: #{tpu_custom_call.1} parent=63 // pred_check
          %p381 = pneg %p42
        $region66: #{tpu_custom_call.1} parent=63 // pred_check_branch
          %383 = sbr.rel (%p381) target = $region68
        $region67: #{tpu_custom_call.1} parent=63 // pred_region
          %p384 = scmp.lt.s32.totalorder %s22, 1
          %s385 = scalar_select %p384, %s22, 1
          %s386 = smul.addr %s385, 32
          %s387 = smul.addr %s386, 8
          %s388 = scalar_lea.vmem %s0, %s387
        $region68: #{tpu_custom_call.1} parent=63 // pred_fallthru
          _
      $region64: #{tpu_custom_call.1} parent=5 // pred_fallthru
        _
      %p389 = scmp.le.s32.totalorder 1, %s22
      %p390 = scmp.lt.s32.totalorder %s22, 3
      %p391 = pnand %p389, %p390
      %p392 = pneg %p391
      // Predicated region
      $region69: #{tpu_custom_call.1} parent=5 // pred_check
        _
      $region70: #{tpu_custom_call.1} parent=5 // pred_check_branch
        %394 = sbr.rel (%p391) target = $region72
      $region71: #{tpu_custom_call.1} parent=5 // pred_region
        %s395 = ssub.s32 %s22, 1
        %p396 = scmp.lt.s32.totalorder %s27, 1
        %s397 = scalar_select %p396, %s27, 1
        %s398 = smul.addr %s397, 32
        %s399 = smul.addr %s398, 8
        %s400 = scalar_lea.vmem %s0, %s399
        %p401 = pneg %p48
        %p402 = pneg %p45
        %p403 = pneg %p69
        %p404 = pneg %p66
        %p405 = pneg %p90
        %p406 = pneg %p87
        %p407 = pneg %p111
        %p408 = pneg %p108
        %p409 = pneg %p132
        %p410 = pneg %p129
        %p411 = pneg %p153
        %p412 = pneg %p150
        %p413 = pneg %p174
        %p414 = pneg %p171
        %p415 = pneg %p195
        %p416 = pneg %p192
        %p417 = pneg %p216
        %p418 = pneg %p213
        %p419 = pneg %p237
        %p420 = pneg %p234
        %p421 = pneg %p258
        %p422 = pneg %p255
        %p423 = pneg %p279
        %p424 = pneg %p276
        %p425 = pneg %p300
        %p426 = pneg %p297
        %p427 = pneg %p326
        %p428 = pneg %p323
        %s429 = sand.u32 %s313, 1
        %s430 = scalar_lea.sflag [#allocation4], %s429
        %s431 = sand.u32 %s313, 1
        %s432 = smul.addr %s431, 64
        %s433 = scalar_lea.vmem [#allocation3], %s432
        %p434 = scmp.lt.s32.totalorder %s27, 1
        %s435 = scalar_select %p434, %s27, 1
        %s436 = smul.addr %s435, 32
        %s437 = smul.addr %s436, 8
        %s438 = scalar_lea.vmem %s0, %s437
        %vm439 = vcmask 31744
        %440 = vst.msk [vmem:[#allocation2] sm:$0xff] %vm439, 0.0
        %441 = vst.msk [vmem:[#allocation2 + $0x8] sm:$0xff] %vm439, 0.0
        %vm442 = vcmask 25600
        %443 = vst.msk [vmem:[#allocation2 + $0x10] sm:$0x3] %vm442, 0.0
        %444 = vst.msk [vmem:[#allocation2 + $0x18] sm:$0xff] %vm439, 0.0
        %445 = vst.msk [vmem:[#allocation2 + $0x20] sm:$0xff] %vm439, 0.0
        %446 = vst.msk [vmem:[#allocation2 + $0x28] sm:$0x3] %vm442, 0.0
        %447 = vst.msk [vmem:[#allocation2 + $0x30] sm:$0xff] %vm439, 0.0
        %448 = vst.msk [vmem:[#allocation2 + $0x38] sm:$0xff] %vm439, 0.0
        %449 = vst.msk [vmem:[#allocation2 + $0x40] sm:$0x3] %vm442, 0.0
        %450 = vst.msk [vmem:[#allocation2 + $0x48] sm:$0xff] %vm439, 0.0
        %451 = vst.msk [vmem:[#allocation2 + $0x50] sm:$0xff] %vm439, 0.0
        %452 = vst.msk [vmem:[#allocation2 + $0x58] sm:$0x3] %vm442, 0.0
        %453 = vst.msk [vmem:[#allocation2 + $0x60] sm:$0xff] %vm439, 0.0
        %454 = vst.msk [vmem:[#allocation2 + $0x68] sm:$0xff] %vm439, 0.0
        %455 = vst.msk [vmem:[#allocation2 + $0x70] sm:$0x3] %vm442, 0.0
        %456 = vst.msk [vmem:[#allocation2 + $0x78] sm:$0xff] %vm439, 0.0
        %457 = vst.msk [vmem:[#allocation2 + $0x80] sm:$0xff] %vm439, 0.0
        %458 = vst.msk [vmem:[#allocation2 + $0x88] sm:$0x3] %vm442, 0.0
        %459 = vst.msk [vmem:[#allocation2 + $0x90] sm:$0xff] %vm439, 0.0
        %460 = vst.msk [vmem:[#allocation2 + $0x98] sm:$0xff] %vm439, 0.0
        %461 = vst.msk [vmem:[#allocation2 + $0xa0] sm:$0x3] %vm442, 0.0
        %462 = vst.msk [vmem:[#allocation2 + $0xa8] sm:$0xff] %vm439, 0.0
        %463 = vst.msk [vmem:[#allocation2 + $0xb0] sm:$0xff] %vm439, 0.0
        %464 = vst.msk [vmem:[#allocation2 + $0xb8] sm:$0x3] %vm442, 0.0
        %465 = vst.msk [vmem:[#allocation2 + $0xc0] sm:$0xff] %vm439, 0.0
        %466 = vst.msk [vmem:[#allocation2 + $0xc8] sm:$0xff] %vm439, 0.0
        %467 = vst.msk [vmem:[#allocation2 + $0xd0] sm:$0x3] %vm442, 0.0
        %468 = vst.msk [vmem:[#allocation2 + $0xd8] sm:$0xff] %vm439, 0.0
        %469 = vst.msk [vmem:[#allocation2 + $0xe0] sm:$0xff] %vm439, 0.0
        %470 = vst.msk [vmem:[#allocation2 + $0xe8] sm:$0x3] %vm442, 0.0
        %471 = vst.msk [vmem:[#allocation2 + $0xf0] sm:$0xff] %vm439, 0.0
        %472 = vst.msk [vmem:[#allocation2 + $0xf8] sm:$0xff] %vm439, 0.0
        %473 = vst.msk [vmem:[#allocation2 + $0x100] sm:$0x3] %vm442, 0.0
        %474 = vst.msk [vmem:[#allocation2 + $0x108] sm:$0xff] %vm439, 0.0
        %475 = vst.msk [vmem:[#allocation2 + $0x110] sm:$0xff] %vm439, 0.0
        %476 = vst.msk [vmem:[#allocation2 + $0x118] sm:$0x3] %vm442, 0.0
        %477 = vst.msk [vmem:[#allocation2 + $0x120] sm:$0xff] %vm439, 0.0
        %478 = vst.msk [vmem:[#allocation2 + $0x128] sm:$0xff] %vm439, 0.0
        %479 = vst.msk [vmem:[#allocation2 + $0x130] sm:$0x3] %vm442, 0.0
        %480 = vst.msk [vmem:[#allocation2 + $0x138] sm:$0xff] %vm439, 0.0
        %481 = vst.msk [vmem:[#allocation2 + $0x140] sm:$0xff] %vm439, 0.0
        %482 = vst.msk [vmem:[#allocation2 + $0x148] sm:$0x3] %vm442, 0.0
        %483 = vst.msk [vmem:[#allocation2 + $0x150] sm:$0xff] %vm439, 0.0
        %484 = vst.msk [vmem:[#allocation2 + $0x158] sm:$0xff] %vm439, 0.0
        %485 = vst.msk [vmem:[#allocation2 + $0x160] sm:$0x3] %vm442, 0.0
        %486 = vst.msk [vmem:[#allocation2 + $0x168] sm:$0xff] %vm439, 0.0
        %487 = vst.msk [vmem:[#allocation2 + $0x170] sm:$0xff] %vm439, 0.0
        %488 = vst.msk [vmem:[#allocation2 + $0x178] sm:$0x3] %vm442, 0.0
        %489 = vst.msk [vmem:[#allocation2 + $0x180] sm:$0xff] %vm439, 0.0
        %490 = vst.msk [vmem:[#allocation2 + $0x188] sm:$0xff] %vm439, 0.0
        %491 = vst.msk [vmem:[#allocation2 + $0x190] sm:$0x3] %vm442, 0.0
        %492 = vst.msk [vmem:[#allocation2 + $0x198] sm:$0xff] %vm439, 0.0
        %493 = vst.msk [vmem:[#allocation2 + $0x1a0] sm:$0xff] %vm439, 0.0
        %494 = vst.msk [vmem:[#allocation2 + $0x1a8] sm:$0x3] %vm442, 0.0
        %v495 = vld [vmem:[%s438] sm:$0xff]
        %v496 = vld [vmem:[%s438 + $0x8] sm:$0xff]
        %v497 = vld [vmem:[%s438 + $0x10] sm:$0xff]
        %v498 = vld [vmem:[%s438 + $0x18] sm:$0xff]
        %v499 = vld [vmem:[%s438 + $0x20] sm:$0xff]
        %v500 = vld [vmem:[%s438 + $0x28] sm:$0xff]
        %v501 = vld [vmem:[%s438 + $0x30] sm:$0xff]
        %v502 = vld [vmem:[%s438 + $0x38] sm:$0xff]
        %v503 = vld [vmem:[%s438 + $0x40] sm:$0xff]
        %v504 = vld [vmem:[%s438 + $0x48] sm:$0xff]
        %v505 = vld [vmem:[%s438 + $0x50] sm:$0xff]
        %v506 = vld [vmem:[%s438 + $0x58] sm:$0xff]
        %v507 = vld [vmem:[%s438 + $0x60] sm:$0xff]
        %v508 = vld [vmem:[%s438 + $0x68] sm:$0xff]
        %v509 = vld [vmem:[%s438 + $0x70] sm:$0xff]
        %v510 = vld [vmem:[%s438 + $0x78] sm:$0xff]
        %v511 = vld [vmem:[%s438 + $0x80] sm:$0xff]
        %v512 = vld [vmem:[%s438 + $0x88] sm:$0xff]
        %v513 = vld [vmem:[%s438 + $0x90] sm:$0xff]
        %v514 = vld [vmem:[%s438 + $0x98] sm:$0xff]
        %v515 = vld [vmem:[%s438 + $0xa0] sm:$0xff]
        %v516 = vld [vmem:[%s438 + $0xa8] sm:$0xff]
        %v517 = vld [vmem:[%s438 + $0xb0] sm:$0xff]
        %v518 = vld [vmem:[%s438 + $0xb8] sm:$0xff]
        %v519 = vld [vmem:[%s438 + $0xc0] sm:$0xff]
        %v520 = vld [vmem:[%s438 + $0xc8] sm:$0xff]
        %v521 = vld [vmem:[%s438 + $0xd0] sm:$0xff]
        %v522 = vld [vmem:[%s438 + $0xd8] sm:$0xff]
        %v523 = vld [vmem:[%s438 + $0xe0] sm:$0xff]
        %v524 = vld [vmem:[%s438 + $0xe8] sm:$0xff]
        %v525 = vld [vmem:[%s438 + $0xf0] sm:$0xff]
        %v526 = vld [vmem:[%s438 + $0xf8] sm:$0xff]
        %v527 = vld [vmem:[%s1] sm:$0xf]
        %v529 = vsel %vm439, %v495, 0
        %v532 = vsel %vm439, %v496, 0
        %v535 = vsel %vm439, %v497, 0
        %v538 = vsel %vm439, %v498, 0
        %v541 = vsel %vm439, %v499, 0
        %v544 = vsel %vm439, %v500, 0
        %v547 = vsel %vm439, %v501, 0
        %v550 = vsel %vm439, %v502, 0
        %v553 = vsel %vm439, %v503, 0
        %v556 = vsel %vm439, %v504, 0
        %v559 = vsel %vm439, %v505, 0
        %v562 = vsel %vm439, %v506, 0
        %v565 = vsel %vm439, %v507, 0
        %v568 = vsel %vm439, %v508, 0
        %v571 = vsel %vm439, %v509, 0
        %v574 = vsel %vm439, %v510, 0
        %v577 = vsel %vm439, %v511, 0
        %v580 = vsel %vm439, %v512, 0
        %v583 = vsel %vm439, %v513, 0
        %v586 = vsel %vm439, %v514, 0
        %v589 = vsel %vm439, %v515, 0
        %v592 = vsel %vm439, %v516, 0
        %v595 = vsel %vm439, %v517, 0
        %v598 = vsel %vm439, %v518, 0
        %v601 = vsel %vm439, %v519, 0
        %v604 = vsel %vm439, %v520, 0
        %v607 = vsel %vm439, %v521, 0
        %v610 = vsel %vm439, %v522, 0
        %v613 = vsel %vm439, %v523, 0
        %v616 = vsel %vm439, %v524, 0
        %v619 = vsel %vm439, %v525, 0
        %v622 = vsel %vm439, %v526, 0
        %vm624 = vcmask 1043456
        %v626 = vsel %vm624, %v527, 0
        %628 = vmatprep.subr.mxu0 0.0
        %629 = vmatpush1.msra.mxu0 %v626
        %630 = vmatprep.subr.mxu0 0.0
        %631 = vmatpush1.msra.mxu0 0.0
        %632 = vmatprep.subr.mxu0 0.0
        %633 = vmatpush1.msra.mxu0 0.0
        %634 = vmatprep.subr.mxu0 0.0
        %635 = vmatpush1.msra.mxu0 0.0
        %636 = vmatprep.subr.mxu0 0.0
        %637 = vmatpush1.msra.mxu0 0.0
        %638 = vmatprep.subr.mxu0 0.0
        %639 = vmatpush1.msra.mxu0 0.0
        %640 = vmatprep.subr.mxu0 0.0
        %641 = vmatpush1.msra.mxu0 0.0
        %642 = vmatprep.subr.mxu0 0.0
        %643 = vmatpush1.msra.mxu0 0.0
        %644 = vmatprep.subr.mxu0 0.0
        %645 = vmatpush1.msra.mxu0 0.0
        %646 = vmatprep.subr.mxu0 0.0
        %647 = vmatpush1.msra.mxu0 0.0
        %648 = vmatprep.subr.mxu0 0.0
        %649 = vmatpush1.msra.mxu0 0.0
        %650 = vmatprep.subr.mxu0 0.0
        %651 = vmatpush1.msra.mxu0 0.0
        %652 = vmatprep.subr.mxu0 0.0
        %653 = vmatpush1.msra.mxu0 0.0
        %654 = vmatprep.subr.mxu0 0.0
        %655 = vmatpush1.msra.mxu0 0.0
        %656 = vmatprep.subr.mxu0 0.0
        %657 = vmatpush1.msra.mxu0 0.0
        %658 = vmatprep.subr.mxu0 0.0
        %659 = vmatpush1.msra.mxu0 0.0
        %660 = vmatprep.subr.mxu0 0.0
        %661 = vmatpush1.msra.mxu0 0.0
        %662 = vmatprep.subr.mxu0 0.0
        %663 = vmatpush1.msra.mxu0 0.0
        %664 = vmatprep.subr.mxu0 0.0
        %665 = vmatpush1.msra.mxu0 0.0
        %666 = vmatprep.subr.mxu0 0.0
        %667 = vmatpush1.msra.mxu0 0.0
        %668 = vmatprep.subr.mxu0 0.0
        %669 = vmatpush1.msra.mxu0 0.0
        %670 = vmatprep.subr.mxu0 0.0
        %671 = vmatpush1.msra.mxu0 0.0
        %672 = vmatprep.subr.mxu0 0.0
        %673 = vmatpush1.msra.mxu0 0.0
        %674 = vmatprep.subr.mxu0 0.0
        %675 = vmatpush1.msra.mxu0 0.0
        %676 = vmatprep.subr.mxu0 0.0
        %677 = vmatpush1.msra.mxu0 0.0
        %678 = vmatprep.subr.mxu0 0.0
        %679 = vmatpush1.msra.mxu0 0.0
        %680 = vmatprep.subr.mxu0 0.0
        %681 = vmatpush1.msra.mxu0 0.0
        %682 = vmatprep.subr.mxu0 0.0
        %683 = vmatpush1.msra.mxu0 0.0
        %684 = vmatprep.subr.mxu0 0.0
        %685 = vmatpush1.msra.mxu0 0.0
        %686 = vmatprep.subr.mxu0 0.0
        %687 = vmatpush1.msra.mxu0 0.0
        %688 = vmatprep.subr.mxu0 0.0
        %689 = vmatpush1.msra.mxu0 0.0
        %690 = vmatprep.subr.mxu0 0.0
        %691 = vmatpush1.msra.mxu0 0.0
        %692 = vmatprep.mubr.f32.mxu0 0.0
        %693 = vmatmul.mubr.f32.gmra.mrb[0].mxu0 %v529
        %v694 = vpop.f32.mrb[0].mxu0
        %v695 = vadd.f32 0.0, %v694
        %v696 = vpop.f32.mrb[0].mxu0
        %697 = vmatprep.mubr.f32.mxu0 0.0
        %698 = vmatmul.mubr.f32.gmra.mrb[0].mxu0 %v532
        %v699 = vpop.f32.mrb[0].mxu0
        %v700 = vadd.f32 0.0, %v699
        %v701 = vpop.f32.mrb[0].mxu0
        %702 = vmatprep.mubr.f32.mxu0 0.0
        %703 = vmatmul.mubr.f32.gmra.mrb[0].mxu0 %v535
        %v704 = vpop.f32.mrb[0].mxu0
        %v705 = vadd.f32 0.0, %v704
        %v706 = vpop.f32.mrb[0].mxu0
        %707 = vmatprep.mubr.f32.mxu0 0.0
        %708 = vmatmul.mubr.f32.gmra.mrb[0].mxu0 %v538
        %v709 = vpop.f32.mrb[0].mxu0
        %v710 = vadd.f32 0.0, %v709
        %v711 = vpop.f32.mrb[0].mxu0
        %712 = vmatprep.mubr.f32.mxu0 0.0
        %713 = vmatmul.mubr.f32.gmra.mrb[0].mxu0 %v541
        %v714 = vpop.f32.mrb[0].mxu0
        %v715 = vadd.f32 0.0, %v714
        %v716 = vpop.f32.mrb[0].mxu0
        %717 = vmatprep.mubr.f32.mxu0 0.0
        %718 = vmatmul.mubr.f32.gmra.mrb[0].mxu0 %v544
        %v719 = vpop.f32.mrb[0].mxu0
        %v720 = vadd.f32 0.0, %v719
        %v721 = vpop.f32.mrb[0].mxu0
        %722 = vmatprep.mubr.f32.mxu0 0.0
        %723 = vmatmul.mubr.f32.gmra.mrb[0].mxu0 %v547
        %v724 = vpop.f32.mrb[0].mxu0
        %v725 = vadd.f32 0.0, %v724
        %v726 = vpop.f32.mrb[0].mxu0
        %727 = vmatprep.mubr.f32.mxu0 0.0
        %728 = vmatmul.mubr.f32.gmra.mrb[0].mxu0 %v550
        %v729 = vpop.f32.mrb[0].mxu0
        %v730 = vadd.f32 0.0, %v729
        %v731 = vpop.f32.mrb[0].mxu0
        %732 = vmatprep.mubr.f32.mxu0 0.0
        %733 = vmatmul.mubr.f32.gmra.mrb[0].mxu0 %v553
        %v734 = vpop.f32.mrb[0].mxu0
        %v735 = vadd.f32 0.0, %v734
        %v736 = vpop.f32.mrb[0].mxu0
        %737 = vmatprep.mubr.f32.mxu0 0.0
        %738 = vmatmul.mubr.f32.gmra.mrb[0].mxu0 %v556
        %v739 = vpop.f32.mrb[0].mxu0
        %v740 = vadd.f32 0.0, %v739
        %v741 = vpop.f32.mrb[0].mxu0
        %742 = vmatprep.mubr.f32.mxu0 0.0
        %743 = vmatmul.mubr.f32.gmra.mrb[0].mxu0 %v559
        %v744 = vpop.f32.mrb[0].mxu0
        %v745 = vadd.f32 0.0, %v744
        %v746 = vpop.f32.mrb[0].mxu0
        %747 = vmatprep.mubr.f32.mxu0 0.0
        %748 = vmatmul.mubr.f32.gmra.mrb[0].mxu0 %v562
        %v749 = vpop.f32.mrb[0].mxu0
        %v750 = vadd.f32 0.0, %v749
        %v751 = vpop.f32.mrb[0].mxu0
        %752 = vmatprep.mubr.f32.mxu0 0.0
        %753 = vmatmul.mubr.f32.gmra.mrb[0].mxu0 %v565
        %v754 = vpop.f32.mrb[0].mxu0
        %v755 = vadd.f32 0.0, %v754
        %v756 = vpop.f32.mrb[0].mxu0
        %757 = vmatprep.mubr.f32.mxu0 0.0
        %758 = vmatmul.mubr.f32.gmra.mrb[0].mxu0 %v568
        %v759 = vpop.f32.mrb[0].mxu0
        %v760 = vadd.f32 0.0, %v759
        %v761 = vpop.f32.mrb[0].mxu0
        %762 = vmatprep.mubr.f32.mxu0 0.0
        %763 = vmatmul.mubr.f32.gmra.mrb[0].mxu0 %v571
        %v764 = vpop.f32.mrb[0].mxu0
        %v765 = vadd.f32 0.0, %v764
        %v766 = vpop.f32.mrb[0].mxu0
        %767 = vmatprep.mubr.f32.mxu0 0.0
        %768 = vmatmul.mubr.f32.gmra.mrb[0].mxu0 %v574
        %v769 = vpop.f32.mrb[0].mxu0
        %v770 = vadd.f32 0.0, %v769
        %v771 = vpop.f32.mrb[0].mxu0
        %772 = vmatprep.mubr.f32.mxu0 0.0
        %773 = vmatmul.mubr.f32.gmra.mrb[0].mxu0 %v577
        %v774 = vpop.f32.mrb[0].mxu0
        %v775 = vadd.f32 0.0, %v774
        %v776 = vpop.f32.mrb[0].mxu0
        %777 = vmatprep.mubr.f32.mxu0 0.0
        %778 = vmatmul.mubr.f32.gmra.mrb[0].mxu0 %v580
        %v779 = vpop.f32.mrb[0].mxu0
        %v780 = vadd.f32 0.0, %v779
        %v781 = vpop.f32.mrb[0].mxu0
        %782 = vmatprep.mubr.f32.mxu0 0.0
        %783 = vmatmul.mubr.f32.gmra.mrb[0].mxu0 %v583
        %v784 = vpop.f32.mrb[0].mxu0
        %v785 = vadd.f32 0.0, %v784
        %v786 = vpop.f32.mrb[0].mxu0
        %787 = vmatprep.mubr.f32.mxu0 0.0
        %788 = vmatmul.mubr.f32.gmra.mrb[0].mxu0 %v586
        %v789 = vpop.f32.mrb[0].mxu0
        %v790 = vadd.f32 0.0, %v789
        %v791 = vpop.f32.mrb[0].mxu0
        %792 = vmatprep.mubr.f32.mxu0 0.0
        %793 = vmatmul.mubr.f32.gmra.mrb[0].mxu0 %v589
        %v794 = vpop.f32.mrb[0].mxu0
        %v795 = vadd.f32 0.0, %v794
        %v796 = vpop.f32.mrb[0].mxu0
        %797 = vmatprep.mubr.f32.mxu0 0.0
        %798 = vmatmul.mubr.f32.gmra.mrb[0].mxu0 %v592
        %v799 = vpop.f32.mrb[0].mxu0
        %v800 = vadd.f32 0.0, %v799
        %v801 = vpop.f32.mrb[0].mxu0
        %802 = vmatprep.mubr.f32.mxu0 0.0
        %803 = vmatmul.mubr.f32.gmra.mrb[0].mxu0 %v595
        %v804 = vpop.f32.mrb[0].mxu0
        %v805 = vadd.f32 0.0, %v804
        %v806 = vpop.f32.mrb[0].mxu0
        %807 = vmatprep.mubr.f32.mxu0 0.0
        %808 = vmatmul.mubr.f32.gmra.mrb[0].mxu0 %v598
        %v809 = vpop.f32.mrb[0].mxu0
        %v810 = vadd.f32 0.0, %v809
        %v811 = vpop.f32.mrb[0].mxu0
        %812 = vmatprep.mubr.f32.mxu0 0.0
        %813 = vmatmul.mubr.f32.gmra.mrb[0].mxu0 %v601
        %v814 = vpop.f32.mrb[0].mxu0
        %v815 = vadd.f32 0.0, %v814
        %v816 = vpop.f32.mrb[0].mxu0
        %817 = vmatprep.mubr.f32.mxu0 0.0
        %818 = vmatmul.mubr.f32.gmra.mrb[0].mxu0 %v604
        %v819 = vpop.f32.mrb[0].mxu0
        %v820 = vadd.f32 0.0, %v819
        %v821 = vpop.f32.mrb[0].mxu0
        %822 = vmatprep.mubr.f32.mxu0 0.0
        %823 = vmatmul.mubr.f32.gmra.mrb[0].mxu0 %v607
        %v824 = vpop.f32.mrb[0].mxu0
        %v825 = vadd.f32 0.0, %v824
        %v826 = vpop.f32.mrb[0].mxu0
        %827 = vmatprep.mubr.f32.mxu0 0.0
        %828 = vmatmul.mubr.f32.gmra.mrb[0].mxu0 %v610
        %v829 = vpop.f32.mrb[0].mxu0
        %v830 = vadd.f32 0.0, %v829
        %v831 = vpop.f32.mrb[0].mxu0
        %832 = vmatprep.mubr.f32.mxu0 0.0
        %833 = vmatmul.mubr.f32.gmra.mrb[0].mxu0 %v613
        %v834 = vpop.f32.mrb[0].mxu0
        %v835 = vadd.f32 0.0, %v834
        %v836 = vpop.f32.mrb[0].mxu0
        %837 = vmatprep.mubr.f32.mxu0 0.0
        %838 = vmatmul.mubr.f32.gmra.mrb[0].mxu0 %v616
        %v839 = vpop.f32.mrb[0].mxu0
        %v840 = vadd.f32 0.0, %v839
        %v841 = vpop.f32.mrb[0].mxu0
        %842 = vmatprep.mubr.f32.mxu0 0.0
        %843 = vmatmul.mubr.f32.gmra.mrb[0].mxu0 %v619
        %v844 = vpop.f32.mrb[0].mxu0
        %v845 = vadd.f32 0.0, %v844
        %v846 = vpop.f32.mrb[0].mxu0
        %847 = vmatprep.mubr.f32.mxu0 0.0
        %848 = vmatmul.mubr.f32.gmra.mrb[0].mxu0 %v622
        %v849 = vpop.f32.mrb[0].mxu0
        %v850 = vadd.f32 0.0, %v849
        %v851 = vpop.f32.mrb[0].mxu0
        %852 = vdwg.mxu0
        %v853 = vld [vmem:[%s2] sm:$0x1]
        %v855 = vlaneseq
        %v856 = vshrl.u32 %v855, 7
        %v857 = vsub.s32 0, %v856
        %v858 = vrot.slane %v853, %v857
        %v860 = vmul.f32 %v695, %v858
        %v861 = vmul.f32 %v700, %v858
        %v862 = vmul.f32 %v705, %v858
        %v863 = vmul.f32 %v710, %v858
        %v864 = vmul.f32 %v715, %v858
        %v865 = vmul.f32 %v720, %v858
        %v866 = vmul.f32 %v725, %v858
        %v867 = vmul.f32 %v730, %v858
        %v868 = vmul.f32 %v735, %v858
        %v869 = vmul.f32 %v740, %v858
        %v870 = vmul.f32 %v745, %v858
        %v871 = vmul.f32 %v750, %v858
        %v872 = vmul.f32 %v755, %v858
        %v873 = vmul.f32 %v760, %v858
        %v874 = vmul.f32 %v765, %v858
        %v875 = vmul.f32 %v770, %v858
        %v876 = vmul.f32 %v775, %v858
        %v877 = vmul.f32 %v780, %v858
        %v878 = vmul.f32 %v785, %v858
        %v879 = vmul.f32 %v790, %v858
        %v880 = vmul.f32 %v795, %v858
        %v881 = vmul.f32 %v800, %v858
        %v882 = vmul.f32 %v805, %v858
        %v883 = vmul.f32 %v810, %v858
        %v884 = vmul.f32 %v815, %v858
        %v885 = vmul.f32 %v820, %v858
        %v886 = vmul.f32 %v825, %v858
        %v887 = vmul.f32 %v830, %v858
        %v888 = vmul.f32 %v835, %v858
        %v889 = vmul.f32 %v840, %v858
        %v890 = vmul.f32 %v845, %v858
        %v891 = vmul.f32 %v850, %v858
        %v892 = vld [vmem:[%s3] sm:$0x1]
        %v894 = vlaneseq
        %v895 = vshrl.u32 %v894, 7
        %v896 = vsub.s32 0, %v895
        %v897 = vrot.slane %v892, %v896
        %v899 = vadd.f32 %v860, %v897
        %v900 = vadd.f32 %v861, %v897
        %v901 = vadd.f32 %v862, %v897
        %v902 = vadd.f32 %v863, %v897
        %v903 = vadd.f32 %v864, %v897
        %v904 = vadd.f32 %v865, %v897
        %v905 = vadd.f32 %v866, %v897
        %v906 = vadd.f32 %v867, %v897
        %v907 = vadd.f32 %v868, %v897
        %v908 = vadd.f32 %v869, %v897
        %v909 = vadd.f32 %v870, %v897
        %v910 = vadd.f32 %v871, %v897
        %v911 = vadd.f32 %v872, %v897
        %v912 = vadd.f32 %v873, %v897
        %v913 = vadd.f32 %v874, %v897
        %v914 = vadd.f32 %v875, %v897
        %v915 = vadd.f32 %v876, %v897
        %v916 = vadd.f32 %v877, %v897
        %v917 = vadd.f32 %v878, %v897
        %v918 = vadd.f32 %v879, %v897
        %v919 = vadd.f32 %v880, %v897
        %v920 = vadd.f32 %v881, %v897
        %v921 = vadd.f32 %v882, %v897
        %v922 = vadd.f32 %v883, %v897
        %v923 = vadd.f32 %v884, %v897
        %v924 = vadd.f32 %v885, %v897
        %v925 = vadd.f32 %v886, %v897
        %v926 = vadd.f32 %v887, %v897
        %v927 = vadd.f32 %v888, %v897
        %v928 = vadd.f32 %v889, %v897
        %v929 = vadd.f32 %v890, %v897
        %v930 = vadd.f32 %v891, %v897
        %v931 = vmax.f32 %v899, 0.0
        %v932 = vmax.f32 %v900, 0.0
        %v933 = vmax.f32 %v901, 0.0
        %v934 = vmax.f32 %v902, 0.0
        %v935 = vmax.f32 %v903, 0.0
        %v936 = vmax.f32 %v904, 0.0
        %v937 = vmax.f32 %v905, 0.0
        %v938 = vmax.f32 %v906, 0.0
        %v939 = vmax.f32 %v907, 0.0
        %v940 = vmax.f32 %v908, 0.0
        %v941 = vmax.f32 %v909, 0.0
        %v942 = vmax.f32 %v910, 0.0
        %v943 = vmax.f32 %v911, 0.0
        %v944 = vmax.f32 %v912, 0.0
        %v945 = vmax.f32 %v913, 0.0
        %v946 = vmax.f32 %v914, 0.0
        %v947 = vmax.f32 %v915, 0.0
        %v948 = vmax.f32 %v916, 0.0
        %v949 = vmax.f32 %v917, 0.0
        %v950 = vmax.f32 %v918, 0.0
        %v951 = vmax.f32 %v919, 0.0
        %v952 = vmax.f32 %v920, 0.0
        %v953 = vmax.f32 %v921, 0.0
        %v954 = vmax.f32 %v922, 0.0
        %v955 = vmax.f32 %v923, 0.0
        %v956 = vmax.f32 %v924, 0.0
        %v957 = vmax.f32 %v925, 0.0
        %v958 = vmax.f32 %v926, 0.0
        %v959 = vmax.f32 %v927, 0.0
        %v960 = vmax.f32 %v928, 0.0
        %v961 = vmax.f32 %v929, 0.0
        %v962 = vmax.f32 %v930, 0.0
        %s963 = scalar_lea.vmem [#allocation2], 24
        %964 = vst.msk [vmem:[%s963 + $0x1] sm:$0xff] %vm439, %v931
        %965 = vst.msk [vmem:[%s963 + $0x9] sm:$0xff] %vm439, %v932
        %966 = vst.msk [vmem:[%s963 + $0x19] sm:$0xff] %vm439, %v933
        %967 = vst.msk [vmem:[%s963 + $0x21] sm:$0xff] %vm439, %v934
        %968 = vst.msk [vmem:[%s963 + $0x31] sm:$0xff] %vm439, %v935
        %969 = vst.msk [vmem:[%s963 + $0x39] sm:$0xff] %vm439, %v936
        %970 = vst.msk [vmem:[%s963 + $0x49] sm:$0xff] %vm439, %v937
        %971 = vst.msk [vmem:[%s963 + $0x51] sm:$0xff] %vm439, %v938
        %972 = vst.msk [vmem:[%s963 + $0x61] sm:$0xff] %vm439, %v939
        %973 = vst.msk [vmem:[%s963 + $0x69] sm:$0xff] %vm439, %v940
        %974 = vst.msk [vmem:[%s963 + $0x79] sm:$0xff] %vm439, %v941
        %975 = vst.msk [vmem:[%s963 + $0x81] sm:$0xff] %vm439, %v942
        %976 = vst.msk [vmem:[%s963 + $0x91] sm:$0xff] %vm439, %v943
        %977 = vst.msk [vmem:[%s963 + $0x99] sm:$0xff] %vm439, %v944
        %978 = vst.msk [vmem:[%s963 + $0xa9] sm:$0xff] %vm439, %v945
        %979 = vst.msk [vmem:[%s963 + $0xb1] sm:$0xff] %vm439, %v946
        %980 = vst.msk [vmem:[%s963 + $0xc1] sm:$0xff] %vm439, %v947
        %981 = vst.msk [vmem:[%s963 + $0xc9] sm:$0xff] %vm439, %v948
        %982 = vst.msk [vmem:[%s963 + $0xd9] sm:$0xff] %vm439, %v949
        %983 = vst.msk [vmem:[%s963 + $0xe1] sm:$0xff] %vm439, %v950
        %984 = vst.msk [vmem:[%s963 + $0xf1] sm:$0xff] %vm439, %v951
        %985 = vst.msk [vmem:[%s963 + $0xf9] sm:$0xff] %vm439, %v952
        %986 = vst.msk [vmem:[%s963 + $0x109] sm:$0xff] %vm439, %v953
        %987 = vst.msk [vmem:[%s963 + $0x111] sm:$0xff] %vm439, %v954
        %988 = vst.msk [vmem:[%s963 + $0x121] sm:$0xff] %vm439, %v955
        %989 = vst.msk [vmem:[%s963 + $0x129] sm:$0xff] %vm439, %v956
        %990 = vst.msk [vmem:[%s963 + $0x139] sm:$0xff] %vm439, %v957
        %991 = vst.msk [vmem:[%s963 + $0x141] sm:$0xff] %vm439, %v958
        %992 = vst.msk [vmem:[%s963 + $0x151] sm:$0xff] %vm439, %v959
        %993 = vst.msk [vmem:[%s963 + $0x159] sm:$0xff] %vm439, %v960
        %994 = vst.msk [vmem:[%s963 + $0x169] sm:$0xff] %vm439, %v961
        %995 = vst.msk [vmem:[%s963 + $0x171] sm:$0xff] %vm439, %v962
        %v996 = vld [vmem:[#allocation2] ss:$2 sm:$0xff]
        %s997 = scalar_lea.vmem [#allocation2], 48
        %v998 = vld [vmem:[%s997] ss:$2 sm:$0xff]
        %s999 = scalar_lea.vmem [#allocation2], 96
        %v1000 = vld [vmem:[%s999] ss:$2 sm:$0xff]
        %s1001 = scalar_lea.vmem [#allocation2], 144
        %v1002 = vld [vmem:[%s1001] ss:$2 sm:$0xff]
        %s1003 = scalar_lea.vmem [#allocation2], 192
        %v1004 = vld [vmem:[%s1003] ss:$2 sm:$0xff]
        %s1005 = scalar_lea.vmem [#allocation2], 240
        %v1006 = vld [vmem:[%s1005] ss:$2 sm:$0xff]
        %s1007 = scalar_lea.vmem [#allocation2], 288
        %v1008 = vld [vmem:[%s1007] ss:$2 sm:$0xff]
        %s1009 = scalar_lea.vmem [#allocation2], 336
        %v1010 = vld [vmem:[%s1009] ss:$2 sm:$0xff]
        %v1011 = vld [vmem:[%s4] sm:$0xf]
        %s1012 = scalar_lea.vmem [#allocation2], 1
        %v1013 = vld [vmem:[%s1012] ss:$2 sm:$0xff]
        %s1014 = scalar_lea.vmem [#allocation2], 49
        %v1015 = vld [vmem:[%s1014] ss:$2 sm:$0xff]
        %s1016 = scalar_lea.vmem [#allocation2], 97
        %v1017 = vld [vmem:[%s1016] ss:$2 sm:$0xff]
        %s1018 = scalar_lea.vmem [#allocation2], 145
        %v1019 = vld [vmem:[%s1018] ss:$2 sm:$0xff]
        %s1020 = scalar_lea.vmem [#allocation2], 193
        %v1021 = vld [vmem:[%s1020] ss:$2 sm:$0xff]
        %s1022 = scalar_lea.vmem [#allocation2], 241
        %v1023 = vld [vmem:[%s1022] ss:$2 sm:$0xff]
        %s1024 = scalar_lea.vmem [#allocation2], 289
        %v1025 = vld [vmem:[%s1024] ss:$2 sm:$0xff]
        %s1026 = scalar_lea.vmem [#allocation2], 337
        %v1027 = vld [vmem:[%s1026] ss:$2 sm:$0xff]
        %s1028 = scalar_lea.vmem %s4, 4
        %v1029 = vld [vmem:[%s1028] sm:$0xf]
        %v1031 = vsel %vm439, %v1013, 0
        %v1034 = vsel %vm439, %v1015, 0
        %v1037 = vsel %vm439, %v1017, 0
        %v1040 = vsel %vm439, %v1019, 0
        %v1043 = vsel %vm439, %v1021, 0
        %v1046 = vsel %vm439, %v1023, 0
        %v1049 = vsel %vm439, %v1025, 0
        %v1052 = vsel %vm439, %v1027, 0
        %v1055 = vsel %vm624, %v1029, 0
        %1057 = vmatprep.subr.mxu0 0.0
        %1058 = vmatpush1.msra.mxu0 %v1055
        %1059 = vmatprep.subr.mxu0 0.0
        %1060 = vmatpush1.msra.mxu0 0.0
        %1061 = vmatprep.subr.mxu0 0.0
        %1062 = vmatpush1.msra.mxu0 0.0
        %1063 = vmatprep.subr.mxu0 0.0
        %1064 = vmatpush1.msra.mxu0 0.0
        %1065 = vmatprep.subr.mxu0 0.0
        %1066 = vmatpush1.msra.mxu0 0.0
        %1067 = vmatprep.subr.mxu0 0.0
        %1068 = vmatpush1.msra.mxu0 0.0
        %1069 = vmatprep.subr.mxu0 0.0
        %1070 = vmatpush1.msra.mxu0 0.0
        %1071 = vmatprep.subr.mxu0 0.0
        %1072 = vmatpush1.msra.mxu0 0.0
        %1073 = vmatprep.subr.mxu0 0.0
        %1074 = vmatpush1.msra.mxu0 0.0
        %1075 = vmatprep.subr.mxu0 0.0
        %1076 = vmatpush1.msra.mxu0 0.0
        %1077 = vmatprep.subr.mxu0 0.0
        %1078 = vmatpush1.msra.mxu0 0.0
        %1079 = vmatprep.subr.mxu0 0.0
        %1080 = vmatpush1.msra.mxu0 0.0
        %1081 = vmatprep.subr.mxu0 0.0
        %1082 = vmatpush1.msra.mxu0 0.0
        %1083 = vmatprep.subr.mxu0 0.0
        %1084 = vmatpush1.msra.mxu0 0.0
        %1085 = vmatprep.subr.mxu0 0.0
        %1086 = vmatpush1.msra.mxu0 0.0
        %1087 = vmatprep.subr.mxu0 0.0
        %1088 = vmatpush1.msra.mxu0 0.0
        %1089 = vmatprep.subr.mxu0 0.0
        %1090 = vmatpush1.msra.mxu0 0.0
        %1091 = vmatprep.subr.mxu0 0.0
        %1092 = vmatpush1.msra.mxu0 0.0
        %1093 = vmatprep.subr.mxu0 0.0
        %1094 = vmatpush1.msra.mxu0 0.0
        %1095 = vmatprep.subr.mxu0 0.0
        %1096 = vmatpush1.msra.mxu0 0.0
        %1097 = vmatprep.subr.mxu0 0.0
        %1098 = vmatpush1.msra.mxu0 0.0
        %1099 = vmatprep.subr.mxu0 0.0
        %1100 = vmatpush1.msra.mxu0 0.0
        %1101 = vmatprep.subr.mxu0 0.0
        %1102 = vmatpush1.msra.mxu0 0.0
        %1103 = vmatprep.subr.mxu0 0.0
        %1104 = vmatpush1.msra.mxu0 0.0
        %1105 = vmatprep.subr.mxu0 0.0
        %1106 = vmatpush1.msra.mxu0 0.0
        %1107 = vmatprep.subr.mxu0 0.0
        %1108 = vmatpush1.msra.mxu0 0.0
        %1109 = vmatprep.subr.mxu0 0.0
        %1110 = vmatpush1.msra.mxu0 0.0
        %1111 = vmatprep.subr.mxu0 0.0
        %1112 = vmatpush1.msra.mxu0 0.0
        %1113 = vmatprep.subr.mxu0 0.0
        %1114 = vmatpush1.msra.mxu0 0.0
        %1115 = vmatprep.subr.mxu0 0.0
        %1116 = vmatpush1.msra.mxu0 0.0
        %1117 = vmatprep.subr.mxu0 0.0
        %1118 = vmatpush1.msra.mxu0 0.0
        %1119 = vmatprep.subr.mxu0 0.0
        %1120 = vmatpush1.msra.mxu0 0.0
        %1121 = vmatprep.mubr.f32.mxu0 0.0
        %1122 = vmatmul.mubr.f32.gmra.mrb[0].mxu0 %v1031
        %v1123 = vpop.f32.mrb[0].mxu0
        %v1124 = vadd.f32 0.0, %v1123
        %v1125 = vpop.f32.mrb[0].mxu0
        %1126 = vmatprep.mubr.f32.mxu0 0.0
        %1127 = vmatmul.mubr.f32.gmra.mrb[0].mxu0 %v1034
        %v1128 = vpop.f32.mrb[0].mxu0
        %v1129 = vadd.f32 0.0, %v1128
        %v1130 = vpop.f32.mrb[0].mxu0
        %1131 = vmatprep.mubr.f32.mxu0 0.0
        %1132 = vmatmul.mubr.f32.gmra.mrb[0].mxu0 %v1037
        %v1133 = vpop.f32.mrb[0].mxu0
        %v1134 = vadd.f32 0.0, %v1133
        %v1135 = vpop.f32.mrb[0].mxu0
        %1136 = vmatprep.mubr.f32.mxu0 0.0
        %1137 = vmatmul.mubr.f32.gmra.mrb[0].mxu0 %v1040
        %v1138 = vpop.f32.mrb[0].mxu0
        %v1139 = vadd.f32 0.0, %v1138
        %v1140 = vpop.f32.mrb[0].mxu0
        %1141 = vmatprep.mubr.f32.mxu0 0.0
        %1142 = vmatmul.mubr.f32.gmra.mrb[0].mxu0 %v1043
        %v1143 = vpop.f32.mrb[0].mxu0
        %v1144 = vadd.f32 0.0, %v1143
        %v1145 = vpop.f32.mrb[0].mxu0
        %1146 = vmatprep.mubr.f32.mxu0 0.0
        %1147 = vmatmul.mubr.f32.gmra.mrb[0].mxu0 %v1046
        %v1148 = vpop.f32.mrb[0].mxu0
        %v1149 = vadd.f32 0.0, %v1148
        %v1150 = vpop.f32.mrb[0].mxu0
        %1151 = vmatprep.mubr.f32.mxu0 0.0
        %1152 = vmatmul.mubr.f32.gmra.mrb[0].mxu0 %v1049
        %v1153 = vpop.f32.mrb[0].mxu0
        %v1154 = vadd.f32 0.0, %v1153
        %v1155 = vpop.f32.mrb[0].mxu0
        %1156 = vmatprep.mubr.f32.mxu0 0.0
        %1157 = vmatmul.mubr.f32.gmra.mrb[0].mxu0 %v1052
        %v1158 = vpop.f32.mrb[0].mxu0
        %v1159 = vadd.f32 0.0, %v1158
        %v1160 = vpop.f32.mrb[0].mxu0
        %1161 = vdwg.mxu0
        %v1163 = vsel %vm439, %v996, 0
        %v1166 = vsel %vm439, %v998, 0
        %v1169 = vsel %vm439, %v1000, 0
        %v1172 = vsel %vm439, %v1002, 0
        %v1175 = vsel %vm439, %v1004, 0
        %v1178 = vsel %vm439, %v1006, 0
        %v1181 = vsel %vm439, %v1008, 0
        %v1184 = vsel %vm439, %v1010, 0
        %v1187 = vsel %vm624, %v1011, 0
        %1189 = vmatprep.subr.mxu0 0.0
        %1190 = vmatpush1.msra.mxu0 %v1187
        %1191 = vmatprep.subr.mxu0 0.0
        %1192 = vmatpush1.msra.mxu0 0.0
        %1193 = vmatprep.subr.mxu0 0.0
        %1194 = vmatpush1.msra.mxu0 0.0
        %1195 = vmatprep.subr.mxu0 0.0
        %1196 = vmatpush1.msra.mxu0 0.0
        %1197 = vmatprep.subr.mxu0 0.0
        %1198 = vmatpush1.msra.mxu0 0.0
        %1199 = vmatprep.subr.mxu0 0.0
        %1200 = vmatpush1.msra.mxu0 0.0
        %1201 = vmatprep.subr.mxu0 0.0
        %1202 = vmatpush1.msra.mxu0 0.0
        %1203 = vmatprep.subr.mxu0 0.0
        %1204 = vmatpush1.msra.mxu0 0.0
        %1205 = vmatprep.subr.mxu0 0.0
        %1206 = vmatpush1.msra.mxu0 0.0
        %1207 = vmatprep.subr.mxu0 0.0
        %1208 = vmatpush1.msra.mxu0 0.0
        %1209 = vmatprep.subr.mxu0 0.0
        %1210 = vmatpush1.msra.mxu0 0.0
        %1211 = vmatprep.subr.mxu0 0.0
        %1212 = vmatpush1.msra.mxu0 0.0
        %1213 = vmatprep.subr.mxu0 0.0
        %1214 = vmatpush1.msra.mxu0 0.0
        %1215 = vmatprep.subr.mxu0 0.0
        %1216 = vmatpush1.msra.mxu0 0.0
        %1217 = vmatprep.subr.mxu0 0.0
        %1218 = vmatpush1.msra.mxu0 0.0
        %1219 = vmatprep.subr.mxu0 0.0
        %1220 = vmatpush1.msra.mxu0 0.0
        %1221 = vmatprep.subr.mxu0 0.0
        %1222 = vmatpush1.msra.mxu0 0.0
        %1223 = vmatprep.subr.mxu0 0.0
        %1224 = vmatpush1.msra.mxu0 0.0
        %1225 = vmatprep.subr.mxu0 0.0
        %1226 = vmatpush1.msra.mxu0 0.0
        %1227 = vmatprep.subr.mxu0 0.0
        %1228 = vmatpush1.msra.mxu0 0.0
        %1229 = vmatprep.subr.mxu0 0.0
        %1230 = vmatpush1.msra.mxu0 0.0
        %1231 = vmatprep.subr.mxu0 0.0
        %1232 = vmatpush1.msra.mxu0 0.0
        %1233 = vmatprep.subr.mxu0 0.0
        %1234 = vmatpush1.msra.mxu0 0.0
        %1235 = vmatprep.subr.mxu0 0.0
        %1236 = vmatpush1.msra.mxu0 0.0
        %1237 = vmatprep.subr.mxu0 0.0
        %1238 = vmatpush1.msra.mxu0 0.0
        %1239 = vmatprep.subr.mxu0 0.0
        %1240 = vmatpush1.msra.mxu0 0.0
        %1241 = vmatprep.subr.mxu0 0.0
        %1242 = vmatpush1.msra.mxu0 0.0
        %1243 = vmatprep.subr.mxu0 0.0
        %1244 = vmatpush1.msra.mxu0 0.0
        %1245 = vmatprep.subr.mxu0 0.0
        %1246 = vmatpush1.msra.mxu0 0.0
        %1247 = vmatprep.subr.mxu0 0.0
        %1248 = vmatpush1.msra.mxu0 0.0
        %1249 = vmatprep.subr.mxu0 0.0
        %1250 = vmatpush1.msra.mxu0 0.0
        %1251 = vmatprep.subr.mxu0 0.0
        %1252 = vmatpush1.msra.mxu0 0.0
        %1253 = vmatprep.mubr.f32.mxu0 0.0
        %1254 = vmatmul.mubr.f32.gmra.mrb[0].mxu0 %v1163
        %v1255 = vpop.f32.mrb[0].mxu0
        %v1256 = vadd.f32 %v1124, %v1255
        %v1257 = vpop.f32.mrb[0].mxu0
        %1258 = vmatprep.mubr.f32.mxu0 0.0
        %1259 = vmatmul.mubr.f32.gmra.mrb[0].mxu0 %v1166
        %v1260 = vpop.f32.mrb[0].mxu0
        %v1261 = vadd.f32 %v1129, %v1260
        %v1262 = vpop.f32.mrb[0].mxu0
        %1263 = vmatprep.mubr.f32.mxu0 0.0
        %1264 = vmatmul.mubr.f32.gmra.mrb[0].mxu0 %v1169
        %v1265 = vpop.f32.mrb[0].mxu0
        %v1266 = vadd.f32 %v1134, %v1265
        %v1267 = vpop.f32.mrb[0].mxu0
        %1268 = vmatprep.mubr.f32.mxu0 0.0
        %1269 = vmatmul.mubr.f32.gmra.mrb[0].mxu0 %v1172
        %v1270 = vpop.f32.mrb[0].mxu0
        %v1271 = vadd.f32 %v1139, %v1270
        %v1272 = vpop.f32.mrb[0].mxu0
        %1273 = vmatprep.mubr.f32.mxu0 0.0
        %1274 = vmatmul.mubr.f32.gmra.mrb[0].mxu0 %v1175
        %v1275 = vpop.f32.mrb[0].mxu0
        %v1276 = vadd.f32 %v1144, %v1275
        %v1277 = vpop.f32.mrb[0].mxu0
        %1278 = vmatprep.mubr.f32.mxu0 0.0
        %1279 = vmatmul.mubr.f32.gmra.mrb[0].mxu0 %v1178
        %v1280 = vpop.f32.mrb[0].mxu0
        %v1281 = vadd.f32 %v1149, %v1280
        %v1282 = vpop.f32.mrb[0].mxu0
        %1283 = vmatprep.mubr.f32.mxu0 0.0
        %1284 = vmatmul.mubr.f32.gmra.mrb[0].mxu0 %v1181
        %v1285 = vpop.f32.mrb[0].mxu0
        %v1286 = vadd.f32 %v1154, %v1285
        %v1287 = vpop.f32.mrb[0].mxu0
        %1288 = vmatprep.mubr.f32.mxu0 0.0
        %1289 = vmatmul.mubr.f32.gmra.mrb[0].mxu0 %v1184
        %v1290 = vpop.f32.mrb[0].mxu0
        %v1291 = vadd.f32 %v1159, %v1290
        %v1292 = vpop.f32.mrb[0].mxu0
        %1293 = vdwg.mxu0
        %s1294 = scalar_lea.vmem [#allocation2], 2
        %v1295 = vld [vmem:[%s1294] ss:$2 sm:$0xff]
        %s1296 = scalar_lea.vmem [#allocation2], 50
        %v1297 = vld [vmem:[%s1296] ss:$2 sm:$0xff]
        %s1298 = scalar_lea.vmem [#allocation2], 98
        %v1299 = vld [vmem:[%s1298] ss:$2 sm:$0xff]
        %s1300 = scalar_lea.vmem [#allocation2], 146
        %v1301 = vld [vmem:[%s1300] ss:$2 sm:$0xff]
        %s1302 = scalar_lea.vmem [#allocation2], 194
        %v1303 = vld [vmem:[%s1302] ss:$2 sm:$0xff]
        %s1304 = scalar_lea.vmem [#allocation2], 242
        %v1305 = vld [vmem:[%s1304] ss:$2 sm:$0xff]
        %s1306 = scalar_lea.vmem [#allocation2], 290
        %v1307 = vld [vmem:[%s1306] ss:$2 sm:$0xff]
        %s1308 = scalar_lea.vmem [#allocation2], 338
        %v1309 = vld [vmem:[%s1308] ss:$2 sm:$0xff]
        %s1310 = scalar_lea.vmem %s4, 8
        %v1311 = vld [vmem:[%s1310] sm:$0xf]
        %v1313 = vsel %vm439, %v1295, 0
        %v1316 = vsel %vm439, %v1297, 0
        %v1319 = vsel %vm439, %v1299, 0
        %v1322 = vsel %vm439, %v1301, 0
        %v1325 = vsel %vm439, %v1303, 0
        %v1328 = vsel %vm439, %v1305, 0
        %v1331 = vsel %vm439, %v1307, 0
        %v1334 = vsel %vm439, %v1309, 0
        %v1337 = vsel %vm624, %v1311, 0
        %1339 = vmatprep.subr.mxu0 0.0
        %1340 = vmatpush1.msra.mxu0 %v1337
        %1341 = vmatprep.subr.mxu0 0.0
        %1342 = vmatpush1.msra.mxu0 0.0
        %1343 = vmatprep.subr.mxu0 0.0
        %1344 = vmatpush1.msra.mxu0 0.0
        %1345 = vmatprep.subr.mxu0 0.0
        %1346 = vmatpush1.msra.mxu0 0.0
        %1347 = vmatprep.subr.mxu0 0.0
        %1348 = vmatpush1.msra.mxu0 0.0
        %1349 = vmatprep.subr.mxu0 0.0
        %1350 = vmatpush1.msra.mxu0 0.0
        %1351 = vmatprep.subr.mxu0 0.0
        %1352 = vmatpush1.msra.mxu0 0.0
        %1353 = vmatprep.subr.mxu0 0.0
        %1354 = vmatpush1.msra.mxu0 0.0
        %1355 = vmatprep.subr.mxu0 0.0
        %1356 = vmatpush1.msra.mxu0 0.0
        %1357 = vmatprep.subr.mxu0 0.0
        %1358 = vmatpush1.msra.mxu0 0.0
        %1359 = vmatprep.subr.mxu0 0.0
        %1360 = vmatpush1.msra.mxu0 0.0
        %1361 = vmatprep.subr.mxu0 0.0
        %1362 = vmatpush1.msra.mxu0 0.0
        %1363 = vmatprep.subr.mxu0 0.0
        %1364 = vmatpush1.msra.mxu0 0.0
        %1365 = vmatprep.subr.mxu0 0.0
        %1366 = vmatpush1.msra.mxu0 0.0
        %1367 = vmatprep.subr.mxu0 0.0
        %1368 = vmatpush1.msra.mxu0 0.0
        %1369 = vmatprep.subr.mxu0 0.0
        %1370 = vmatpush1.msra.mxu0 0.0
        %1371 = vmatprep.subr.mxu0 0.0
        %1372 = vmatpush1.msra.mxu0 0.0
        %1373 = vmatprep.subr.mxu0 0.0
        %1374 = vmatpush1.msra.mxu0 0.0
        %1375 = vmatprep.subr.mxu0 0.0
        %1376 = vmatpush1.msra.mxu0 0.0
        %1377 = vmatprep.subr.mxu0 0.0
        %1378 = vmatpush1.msra.mxu0 0.0
        %1379 = vmatprep.subr.mxu0 0.0
        %1380 = vmatpush1.msra.mxu0 0.0
        %1381 = vmatprep.subr.mxu0 0.0
        %1382 = vmatpush1.msra.mxu0 0.0
        %1383 = vmatprep.subr.mxu0 0.0
        %1384 = vmatpush1.msra.mxu0 0.0
        %1385 = vmatprep.subr.mxu0 0.0
        %1386 = vmatpush1.msra.mxu0 0.0
        %1387 = vmatprep.subr.mxu0 0.0
        %1388 = vmatpush1.msra.mxu0 0.0
        %1389 = vmatprep.subr.mxu0 0.0
        %1390 = vmatpush1.msra.mxu0 0.0
        %1391 = vmatprep.subr.mxu0 0.0
        %1392 = vmatpush1.msra.mxu0 0.0
        %1393 = vmatprep.subr.mxu0 0.0
        %1394 = vmatpush1.msra.mxu0 0.0
        %1395 = vmatprep.subr.mxu0 0.0
        %1396 = vmatpush1.msra.mxu0 0.0
        %1397 = vmatprep.subr.mxu0 0.0
        %1398 = vmatpush1.msra.mxu0 0.0
        %1399 = vmatprep.subr.mxu0 0.0
        %1400 = vmatpush1.msra.mxu0 0.0
        %1401 = vmatprep.subr.mxu0 0.0
        %1402 = vmatpush1.msra.mxu0 0.0
        %1403 = vmatprep.mubr.f32.mxu0 0.0
        %1404 = vmatmul.mubr.f32.gmra.mrb[0].mxu0 %v1313
        %v1405 = vpop.f32.mrb[0].mxu0
        %v1406 = vadd.f32 0.0, %v1405
        %v1407 = vpop.f32.mrb[0].mxu0
        %1408 = vmatprep.mubr.f32.mxu0 0.0
        %1409 = vmatmul.mubr.f32.gmra.mrb[0].mxu0 %v1316
        %v1410 = vpop.f32.mrb[0].mxu0
        %v1411 = vadd.f32 0.0, %v1410
        %v1412 = vpop.f32.mrb[0].mxu0
        %1413 = vmatprep.mubr.f32.mxu0 0.0
        %1414 = vmatmul.mubr.f32.gmra.mrb[0].mxu0 %v1319
        %v1415 = vpop.f32.mrb[0].mxu0
        %v1416 = vadd.f32 0.0, %v1415
        %v1417 = vpop.f32.mrb[0].mxu0
        %1418 = vmatprep.mubr.f32.mxu0 0.0
        %1419 = vmatmul.mubr.f32.gmra.mrb[0].mxu0 %v1322
        %v1420 = vpop.f32.mrb[0].mxu0
        %v1421 = vadd.f32 0.0, %v1420
        %v1422 = vpop.f32.mrb[0].mxu0
        %1423 = vmatprep.mubr.f32.mxu0 0.0
        %1424 = vmatmul.mubr.f32.gmra.mrb[0].mxu0 %v1325
        %v1425 = vpop.f32.mrb[0].mxu0
        %v1426 = vadd.f32 0.0, %v1425
        %v1427 = vpop.f32.mrb[0].mxu0
        %1428 = vmatprep.mubr.f32.mxu0 0.0
        %1429 = vmatmul.mubr.f32.gmra.mrb[0].mxu0 %v1328
        %v1430 = vpop.f32.mrb[0].mxu0
        %v1431 = vadd.f32 0.0, %v1430
        %v1432 = vpop.f32.mrb[0].mxu0
        %1433 = vmatprep.mubr.f32.mxu0 0.0
        %1434 = vmatmul.mubr.f32.gmra.mrb[0].mxu0 %v1331
        %v1435 = vpop.f32.mrb[0].mxu0
        %v1436 = vadd.f32 0.0, %v1435
        %v1437 = vpop.f32.mrb[0].mxu0
        %1438 = vmatprep.mubr.f32.mxu0 0.0
        %1439 = vmatmul.mubr.f32.gmra.mrb[0].mxu0 %v1334
        %v1440 = vpop.f32.mrb[0].mxu0
        %v1441 = vadd.f32 0.0, %v1440
        %v1442 = vpop.f32.mrb[0].mxu0
        %1443 = vdwg.mxu0
        %v1444 = vadd.f32 %v1256, %v1406
        %v1445 = vadd.f32 %v1261, %v1411
        %v1446 = vadd.f32 %v1266, %v1416
        %v1447 = vadd.f32 %v1271, %v1421
        %v1448 = vadd.f32 %v1276, %v1426
        %v1449 = vadd.f32 %v1281, %v1431
        %v1450 = vadd.f32 %v1286, %v1436
        %v1451 = vadd.f32 %v1291, %v1441
        %v1452 = vld [vmem:[%s963] ss:$2 sm:$0xff]
        %s1453 = scalar_lea.vmem %s963, 48 [#allocation2]
        %v1454 = vld [vmem:[%s1453] ss:$2 sm:$0xff]
        %s1455 = scalar_lea.vmem %s963, 96 [#allocation2]
        %v1456 = vld [vmem:[%s1455] ss:$2 sm:$0xff]
        %s1457 = scalar_lea.vmem %s963, 144 [#allocation2]
        %v1458 = vld [vmem:[%s1457] ss:$2 sm:$0xff]
        %s1459 = scalar_lea.vmem %s963, 192 [#allocation2]
        %v1460 = vld [vmem:[%s1459] ss:$2 sm:$0xff]
        %s1461 = scalar_lea.vmem %s963, 240 [#allocation2]
        %v1462 = vld [vmem:[%s1461] ss:$2 sm:$0xff]
        %s1463 = scalar_lea.vmem %s963, 288 [#allocation2]
        %v1464 = vld [vmem:[%s1463] ss:$2 sm:$0xff]
        %s1465 = scalar_lea.vmem %s963, 336 [#allocation2]
        %v1466 = vld [vmem:[%s1465] ss:$2 sm:$0xff]
        %s1467 = scalar_lea.vmem %s4, 12
        %v1468 = vld [vmem:[%s1467] sm:$0xf]
        %v1470 = vsel %vm439, %v1452, 0
        %v1473 = vsel %vm439, %v1454, 0
        %v1476 = vsel %vm439, %v1456, 0
        %v1479 = vsel %vm439, %v1458, 0
        %v1482 = vsel %vm439, %v1460, 0
        %v1485 = vsel %vm439, %v1462, 0
        %v1488 = vsel %vm439, %v1464, 0
        %v1491 = vsel %vm439, %v1466, 0
        %v1494 = vsel %vm624, %v1468, 0
        %1496 = vmatprep.subr.mxu0 0.0
        %1497 = vmatpush1.msra.mxu0 %v1494
        %1498 = vmatprep.subr.mxu0 0.0
        %1499 = vmatpush1.msra.mxu0 0.0
        %1500 = vmatprep.subr.mxu0 0.0
        %1501 = vmatpush1.msra.mxu0 0.0
        %1502 = vmatprep.subr.mxu0 0.0
        %1503 = vmatpush1.msra.mxu0 0.0
        %1504 = vmatprep.subr.mxu0 0.0
        %1505 = vmatpush1.msra.mxu0 0.0
        %1506 = vmatprep.subr.mxu0 0.0
        %1507 = vmatpush1.msra.mxu0 0.0
        %1508 = vmatprep.subr.mxu0 0.0
        %1509 = vmatpush1.msra.mxu0 0.0
        %1510 = vmatprep.subr.mxu0 0.0
        %1511 = vmatpush1.msra.mxu0 0.0
        %1512 = vmatprep.subr.mxu0 0.0
        %1513 = vmatpush1.msra.mxu0 0.0
        %1514 = vmatprep.subr.mxu0 0.0
        %1515 = vmatpush1.msra.mxu0 0.0
        %1516 = vmatprep.subr.mxu0 0.0
        %1517 = vmatpush1.msra.mxu0 0.0
        %1518 = vmatprep.subr.mxu0 0.0
        %1519 = vmatpush1.msra.mxu0 0.0
        %1520 = vmatprep.subr.mxu0 0.0
        %1521 = vmatpush1.msra.mxu0 0.0
        %1522 = vmatprep.subr.mxu0 0.0
        %1523 = vmatpush1.msra.mxu0 0.0
        %1524 = vmatprep.subr.mxu0 0.0
        %1525 = vmatpush1.msra.mxu0 0.0
        %1526 = vmatprep.subr.mxu0 0.0
        %1527 = vmatpush1.msra.mxu0 0.0
        %1528 = vmatprep.subr.mxu0 0.0
        %1529 = vmatpush1.msra.mxu0 0.0
        %1530 = vmatprep.subr.mxu0 0.0
        %1531 = vmatpush1.msra.mxu0 0.0
        %1532 = vmatprep.subr.mxu0 0.0
        %1533 = vmatpush1.msra.mxu0 0.0
        %1534 = vmatprep.subr.mxu0 0.0
        %1535 = vmatpush1.msra.mxu0 0.0
        %1536 = vmatprep.subr.mxu0 0.0
        %1537 = vmatpush1.msra.mxu0 0.0
        %1538 = vmatprep.subr.mxu0 0.0
        %1539 = vmatpush1.msra.mxu0 0.0
        %1540 = vmatprep.subr.mxu0 0.0
        %1541 = vmatpush1.msra.mxu0 0.0
        %1542 = vmatprep.subr.mxu0 0.0
        %1543 = vmatpush1.msra.mxu0 0.0
        %1544 = vmatprep.subr.mxu0 0.0
        %1545 = vmatpush1.msra.mxu0 0.0
        %1546 = vmatprep.subr.mxu0 0.0
        %1547 = vmatpush1.msra.mxu0 0.0
        %1548 = vmatprep.subr.mxu0 0.0
        %1549 = vmatpush1.msra.mxu0 0.0
        %1550 = vmatprep.subr.mxu0 0.0
        %1551 = vmatpush1.msra.mxu0 0.0
        %1552 = vmatprep.subr.mxu0 0.0
        %1553 = vmatpush1.msra.mxu0 0.0
        %1554 = vmatprep.subr.mxu0 0.0
        %1555 = vmatpush1.msra.mxu0 0.0
        %1556 = vmatprep.subr.mxu0 0.0
        %1557 = vmatpush1.msra.mxu0 0.0
        %1558 = vmatprep.subr.mxu0 0.0
        %1559 = vmatpush1.msra.mxu0 0.0
        %1560 = vmatprep.mubr.f32.mxu0 0.0
        %1561 = vmatmul.mubr.f32.gmra.mrb[0].mxu0 %v1470
        %v1562 = vpop.f32.mrb[0].mxu0
        %v1563 = vadd.f32 0.0, %v1562
        %v1564 = vpop.f32.mrb[0].mxu0
        %1565 = vmatprep.mubr.f32.mxu0 0.0
        %1566 = vmatmul.mubr.f32.gmra.mrb[0].mxu0 %v1473
        %v1567 = vpop.f32.mrb[0].mxu0
        %v1568 = vadd.f32 0.0, %v1567
        %v1569 = vpop.f32.mrb[0].mxu0
        %1570 = vmatprep.mubr.f32.mxu0 0.0
        %1571 = vmatmul.mubr.f32.gmra.mrb[0].mxu0 %v1476
        %v1572 = vpop.f32.mrb[0].mxu0
        %v1573 = vadd.f32 0.0, %v1572
        %v1574 = vpop.f32.mrb[0].mxu0
        %1575 = vmatprep.mubr.f32.mxu0 0.0
        %1576 = vmatmul.mubr.f32.gmra.mrb[0].mxu0 %v1479
        %v1577 = vpop.f32.mrb[0].mxu0
        %v1578 = vadd.f32 0.0, %v1577
        %v1579 = vpop.f32.mrb[0].mxu0
        %1580 = vmatprep.mubr.f32.mxu0 0.0
        %1581 = vmatmul.mubr.f32.gmra.mrb[0].mxu0 %v1482
        %v1582 = vpop.f32.mrb[0].mxu0
        %v1583 = vadd.f32 0.0, %v1582
        %v1584 = vpop.f32.mrb[0].mxu0
        %1585 = vmatprep.mubr.f32.mxu0 0.0
        %1586 = vmatmul.mubr.f32.gmra.mrb[0].mxu0 %v1485
        %v1587 = vpop.f32.mrb[0].mxu0
        %v1588 = vadd.f32 0.0, %v1587
        %v1589 = vpop.f32.mrb[0].mxu0
        %1590 = vmatprep.mubr.f32.mxu0 0.0
        %1591 = vmatmul.mubr.f32.gmra.mrb[0].mxu0 %v1488
        %v1592 = vpop.f32.mrb[0].mxu0
        %v1593 = vadd.f32 0.0, %v1592
        %v1594 = vpop.f32.mrb[0].mxu0
        %1595 = vmatprep.mubr.f32.mxu0 0.0
        %1596 = vmatmul.mubr.f32.gmra.mrb[0].mxu0 %v1491
        %v1597 = vpop.f32.mrb[0].mxu0
        %v1598 = vadd.f32 0.0, %v1597
        %v1599 = vpop.f32.mrb[0].mxu0
        %1600 = vdwg.mxu0
        %v1601 = vadd.f32 %v1444, %v1563
        %v1602 = vadd.f32 %v1445, %v1568
        %v1603 = vadd.f32 %v1446, %v1573
        %v1604 = vadd.f32 %v1447, %v1578
        %v1605 = vadd.f32 %v1448, %v1583
        %v1606 = vadd.f32 %v1449, %v1588
        %v1607 = vadd.f32 %v1450, %v1593
        %v1608 = vadd.f32 %v1451, %v1598
        %s1609 = scalar_lea.vmem %s963, 1 [#allocation2]
        %v1610 = vld [vmem:[%s1609] ss:$2 sm:$0xff]
        %s1611 = scalar_lea.vmem %s963, 49 [#allocation2]
        %v1612 = vld [vmem:[%s1611] ss:$2 sm:$0xff]
        %s1613 = scalar_lea.vmem %s963, 97 [#allocation2]
        %v1614 = vld [vmem:[%s1613] ss:$2 sm:$0xff]
        %s1615 = scalar_lea.vmem %s963, 145 [#allocation2]
        %v1616 = vld [vmem:[%s1615] ss:$2 sm:$0xff]
        %s1617 = scalar_lea.vmem %s963, 193 [#allocation2]
        %v1618 = vld [vmem:[%s1617] ss:$2 sm:$0xff]
        %s1619 = scalar_lea.vmem %s963, 241 [#allocation2]
        %v1620 = vld [vmem:[%s1619] ss:$2 sm:$0xff]
        %s1621 = scalar_lea.vmem %s963, 289 [#allocation2]
        %v1622 = vld [vmem:[%s1621] ss:$2 sm:$0xff]
        %s1623 = scalar_lea.vmem %s963, 337 [#allocation2]
        %v1624 = vld [vmem:[%s1623] ss:$2 sm:$0xff]
        %s1625 = scalar_lea.vmem %s4, 16
        %v1626 = vld [vmem:[%s1625] sm:$0xf]
        %v1628 = vsel %vm439, %v1610, 0
        %v1631 = vsel %vm439, %v1612, 0
        %v1634 = vsel %vm439, %v1614, 0
        %v1637 = vsel %vm439, %v1616, 0
        %v1640 = vsel %vm439, %v1618, 0
        %v1643 = vsel %vm439, %v1620, 0
        %v1646 = vsel %vm439, %v1622, 0
        %v1649 = vsel %vm439, %v1624, 0
        %v1652 = vsel %vm624, %v1626, 0
        %1654 = vmatprep.subr.mxu0 0.0
        %1655 = vmatpush1.msra.mxu0 %v1652
        %1656 = vmatprep.subr.mxu0 0.0
        %1657 = vmatpush1.msra.mxu0 0.0
        %1658 = vmatprep.subr.mxu0 0.0
        %1659 = vmatpush1.msra.mxu0 0.0
        %1660 = vmatprep.subr.mxu0 0.0
        %1661 = vmatpush1.msra.mxu0 0.0
        %1662 = vmatprep.subr.mxu0 0.0
        %1663 = vmatpush1.msra.mxu0 0.0
        %1664 = vmatprep.subr.mxu0 0.0
        %1665 = vmatpush1.msra.mxu0 0.0
        %1666 = vmatprep.subr.mxu0 0.0
        %1667 = vmatpush1.msra.mxu0 0.0
        %1668 = vmatprep.subr.mxu0 0.0
        %1669 = vmatpush1.msra.mxu0 0.0
        %1670 = vmatprep.subr.mxu0 0.0
        %1671 = vmatpush1.msra.mxu0 0.0
        %1672 = vmatprep.subr.mxu0 0.0
        %1673 = vmatpush1.msra.mxu0 0.0
        %1674 = vmatprep.subr.mxu0 0.0
        %1675 = vmatpush1.msra.mxu0 0.0
        %1676 = vmatprep.subr.mxu0 0.0
        %1677 = vmatpush1.msra.mxu0 0.0
        %1678 = vmatprep.subr.mxu0 0.0
        %1679 = vmatpush1.msra.mxu0 0.0
        %1680 = vmatprep.subr.mxu0 0.0
        %1681 = vmatpush1.msra.mxu0 0.0
        %1682 = vmatprep.subr.mxu0 0.0
        %1683 = vmatpush1.msra.mxu0 0.0
        %1684 = vmatprep.subr.mxu0 0.0
        %1685 = vmatpush1.msra.mxu0 0.0
        %1686 = vmatprep.subr.mxu0 0.0
        %1687 = vmatpush1.msra.mxu0 0.0
        %1688 = vmatprep.subr.mxu0 0.0
        %1689 = vmatpush1.msra.mxu0 0.0
        %1690 = vmatprep.subr.mxu0 0.0
        %1691 = vmatpush1.msra.mxu0 0.0
        %1692 = vmatprep.subr.mxu0 0.0
        %1693 = vmatpush1.msra.mxu0 0.0
        %1694 = vmatprep.subr.mxu0 0.0
        %1695 = vmatpush1.msra.mxu0 0.0
        %1696 = vmatprep.subr.mxu0 0.0
        %1697 = vmatpush1.msra.mxu0 0.0
        %1698 = vmatprep.subr.mxu0 0.0
        %1699 = vmatpush1.msra.mxu0 0.0
        %1700 = vmatprep.subr.mxu0 0.0
        %1701 = vmatpush1.msra.mxu0 0.0
        %1702 = vmatprep.subr.mxu0 0.0
        %1703 = vmatpush1.msra.mxu0 0.0
        %1704 = vmatprep.subr.mxu0 0.0
        %1705 = vmatpush1.msra.mxu0 0.0
        %1706 = vmatprep.subr.mxu0 0.0
        %1707 = vmatpush1.msra.mxu0 0.0
        %1708 = vmatprep.subr.mxu0 0.0
        %1709 = vmatpush1.msra.mxu0 0.0
        %1710 = vmatprep.subr.mxu0 0.0
        %1711 = vmatpush1.msra.mxu0 0.0
        %1712 = vmatprep.subr.mxu0 0.0
        %1713 = vmatpush1.msra.mxu0 0.0
        %1714 = vmatprep.subr.mxu0 0.0
        %1715 = vmatpush1.msra.mxu0 0.0
        %1716 = vmatprep.subr.mxu0 0.0
        %1717 = vmatpush1.msra.mxu0 0.0
        %1718 = vmatprep.mubr.f32.mxu0 0.0
        %1719 = vmatmul.mubr.f32.gmra.mrb[0].mxu0 %v1628
        %v1720 = vpop.f32.mrb[0].mxu0
        %v1721 = vadd.f32 0.0, %v1720
        %v1722 = vpop.f32.mrb[0].mxu0
        %1723 = vmatprep.mubr.f32.mxu0 0.0
        %1724 = vmatmul.mubr.f32.gmra.mrb[0].mxu0 %v1631
        %v1725 = vpop.f32.mrb[0].mxu0
        %v1726 = vadd.f32 0.0, %v1725
        %v1727 = vpop.f32.mrb[0].mxu0
        %1728 = vmatprep.mubr.f32.mxu0 0.0
        %1729 = vmatmul.mubr.f32.gmra.mrb[0].mxu0 %v1634
        %v1730 = vpop.f32.mrb[0].mxu0
        %v1731 = vadd.f32 0.0, %v1730
        %v1732 = vpop.f32.mrb[0].mxu0
        %1733 = vmatprep.mubr.f32.mxu0 0.0
        %1734 = vmatmul.mubr.f32.gmra.mrb[0].mxu0 %v1637
        %v1735 = vpop.f32.mrb[0].mxu0
        %v1736 = vadd.f32 0.0, %v1735
        %v1737 = vpop.f32.mrb[0].mxu0
        %1738 = vmatprep.mubr.f32.mxu0 0.0
        %1739 = vmatmul.mubr.f32.gmra.mrb[0].mxu0 %v1640
        %v1740 = vpop.f32.mrb[0].mxu0
        %v1741 = vadd.f32 0.0, %v1740
        %v1742 = vpop.f32.mrb[0].mxu0
        %1743 = vmatprep.mubr.f32.mxu0 0.0
        %1744 = vmatmul.mubr.f32.gmra.mrb[0].mxu0 %v1643
        %v1745 = vpop.f32.mrb[0].mxu0
        %v1746 = vadd.f32 0.0, %v1745
        %v1747 = vpop.f32.mrb[0].mxu0
        %1748 = vmatprep.mubr.f32.mxu0 0.0
        %1749 = vmatmul.mubr.f32.gmra.mrb[0].mxu0 %v1646
        %v1750 = vpop.f32.mrb[0].mxu0
        %v1751 = vadd.f32 0.0, %v1750
        %v1752 = vpop.f32.mrb[0].mxu0
        %1753 = vmatprep.mubr.f32.mxu0 0.0
        %1754 = vmatmul.mubr.f32.gmra.mrb[0].mxu0 %v1649
        %v1755 = vpop.f32.mrb[0].mxu0
        %v1756 = vadd.f32 0.0, %v1755
        %v1757 = vpop.f32.mrb[0].mxu0
        %1758 = vdwg.mxu0
        %v1759 = vadd.f32 %v1601, %v1721
        %v1760 = vadd.f32 %v1602, %v1726
        %v1761 = vadd.f32 %v1603, %v1731
        %v1762 = vadd.f32 %v1604, %v1736
        %v1763 = vadd.f32 %v1605, %v1741
        %v1764 = vadd.f32 %v1606, %v1746
        %v1765 = vadd.f32 %v1607, %v1751
        %v1766 = vadd.f32 %v1608, %v1756
        %s1767 = scalar_lea.vmem %s963, 2 [#allocation2]
        %v1768 = vld [vmem:[%s1767] ss:$2 sm:$0xff]
        %s1769 = scalar_lea.vmem %s963, 50 [#allocation2]
        %v1770 = vld [vmem:[%s1769] ss:$2 sm:$0xff]
        %s1771 = scalar_lea.vmem %s963, 98 [#allocation2]
        %v1772 = vld [vmem:[%s1771] ss:$2 sm:$0xff]
        %s1773 = scalar_lea.vmem %s963, 146 [#allocation2]
        %v1774 = vld [vmem:[%s1773] ss:$2 sm:$0xff]
        %s1775 = scalar_lea.vmem %s963, 194 [#allocation2]
        %v1776 = vld [vmem:[%s1775] ss:$2 sm:$0xff]
        %s1777 = scalar_lea.vmem %s963, 242 [#allocation2]
        %v1778 = vld [vmem:[%s1777] ss:$2 sm:$0xff]
        %s1779 = scalar_lea.vmem %s963, 290 [#allocation2]
        %v1780 = vld [vmem:[%s1779] ss:$2 sm:$0xff]
        %s1781 = scalar_lea.vmem %s963, 338 [#allocation2]
        %v1782 = vld [vmem:[%s1781] ss:$2 sm:$0xff]
        %s1783 = scalar_lea.vmem %s4, 20
        %v1784 = vld [vmem:[%s1783] sm:$0xf]
        %v1786 = vsel %vm439, %v1768, 0
        %v1789 = vsel %vm439, %v1770, 0
        %v1792 = vsel %vm439, %v1772, 0
        %v1795 = vsel %vm439, %v1774, 0
        %v1798 = vsel %vm439, %v1776, 0
        %v1801 = vsel %vm439, %v1778, 0
        %v1804 = vsel %vm439, %v1780, 0
        %v1807 = vsel %vm439, %v1782, 0
        %v1810 = vsel %vm624, %v1784, 0
        %1812 = vmatprep.subr.mxu0 0.0
        %1813 = vmatpush1.msra.mxu0 %v1810
        %1814 = vmatprep.subr.mxu0 0.0
        %1815 = vmatpush1.msra.mxu0 0.0
        %1816 = vmatprep.subr.mxu0 0.0
        %1817 = vmatpush1.msra.mxu0 0.0
        %1818 = vmatprep.subr.mxu0 0.0
        %1819 = vmatpush1.msra.mxu0 0.0
        %1820 = vmatprep.subr.mxu0 0.0
        %1821 = vmatpush1.msra.mxu0 0.0
        %1822 = vmatprep.subr.mxu0 0.0
        %1823 = vmatpush1.msra.mxu0 0.0
        %1824 = vmatprep.subr.mxu0 0.0
        %1825 = vmatpush1.msra.mxu0 0.0
        %1826 = vmatprep.subr.mxu0 0.0
        %1827 = vmatpush1.msra.mxu0 0.0
        %1828 = vmatprep.subr.mxu0 0.0
        %1829 = vmatpush1.msra.mxu0 0.0
        %1830 = vmatprep.subr.mxu0 0.0
        %1831 = vmatpush1.msra.mxu0 0.0
        %1832 = vmatprep.subr.mxu0 0.0
        %1833 = vmatpush1.msra.mxu0 0.0
        %1834 = vmatprep.subr.mxu0 0.0
        %1835 = vmatpush1.msra.mxu0 0.0
        %1836 = vmatprep.subr.mxu0 0.0
        %1837 = vmatpush1.msra.mxu0 0.0
        %1838 = vmatprep.subr.mxu0 0.0
        %1839 = vmatpush1.msra.mxu0 0.0
        %1840 = vmatprep.subr.mxu0 0.0
        %1841 = vmatpush1.msra.mxu0 0.0
        %1842 = vmatprep.subr.mxu0 0.0
        %1843 = vmatpush1.msra.mxu0 0.0
        %1844 = vmatprep.subr.mxu0 0.0
        %1845 = vmatpush1.msra.mxu0 0.0
        %1846 = vmatprep.subr.mxu0 0.0
        %1847 = vmatpush1.msra.mxu0 0.0
        %1848 = vmatprep.subr.mxu0 0.0
        %1849 = vmatpush1.msra.mxu0 0.0
        %1850 = vmatprep.subr.mxu0 0.0
        %1851 = vmatpush1.msra.mxu0 0.0
        %1852 = vmatprep.subr.mxu0 0.0
        %1853 = vmatpush1.msra.mxu0 0.0
        %1854 = vmatprep.subr.mxu0 0.0
        %1855 = vmatpush1.msra.mxu0 0.0
        %1856 = vmatprep.subr.mxu0 0.0
        %1857 = vmatpush1.msra.mxu0 0.0
        %1858 = vmatprep.subr.mxu0 0.0
        %1859 = vmatpush1.msra.mxu0 0.0
        %1860 = vmatprep.subr.mxu0 0.0
        %1861 = vmatpush1.msra.mxu0 0.0
        %1862 = vmatprep.subr.mxu0 0.0
        %1863 = vmatpush1.msra.mxu0 0.0
        %1864 = vmatprep.subr.mxu0 0.0
        %1865 = vmatpush1.msra.mxu0 0.0
        %1866 = vmatprep.subr.mxu0 0.0
        %1867 = vmatpush1.msra.mxu0 0.0
        %1868 = vmatprep.subr.mxu0 0.0
        %1869 = vmatpush1.msra.mxu0 0.0
        %1870 = vmatprep.subr.mxu0 0.0
        %1871 = vmatpush1.msra.mxu0 0.0
        %1872 = vmatprep.subr.mxu0 0.0
        %1873 = vmatpush1.msra.mxu0 0.0
        %1874 = vmatprep.subr.mxu0 0.0
        %1875 = vmatpush1.msra.mxu0 0.0
        %1876 = vmatprep.mubr.f32.mxu0 0.0
        %1877 = vmatmul.mubr.f32.gmra.mrb[0].mxu0 %v1786
        %v1878 = vpop.f32.mrb[0].mxu0
        %v1879 = vadd.f32 0.0, %v1878
        %v1880 = vpop.f32.mrb[0].mxu0
        %1881 = vmatprep.mubr.f32.mxu0 0.0
        %1882 = vmatmul.mubr.f32.gmra.mrb[0].mxu0 %v1789
        %v1883 = vpop.f32.mrb[0].mxu0
        %v1884 = vadd.f32 0.0, %v1883
        %v1885 = vpop.f32.mrb[0].mxu0
        %1886 = vmatprep.mubr.f32.mxu0 0.0
        %1887 = vmatmul.mubr.f32.gmra.mrb[0].mxu0 %v1792
        %v1888 = vpop.f32.mrb[0].mxu0
        %v1889 = vadd.f32 0.0, %v1888
        %v1890 = vpop.f32.mrb[0].mxu0
        %1891 = vmatprep.mubr.f32.mxu0 0.0
        %1892 = vmatmul.mubr.f32.gmra.mrb[0].mxu0 %v1795
        %v1893 = vpop.f32.mrb[0].mxu0
        %v1894 = vadd.f32 0.0, %v1893
        %v1895 = vpop.f32.mrb[0].mxu0
        %1896 = vmatprep.mubr.f32.mxu0 0.0
        %1897 = vmatmul.mubr.f32.gmra.mrb[0].mxu0 %v1798
        %v1898 = vpop.f32.mrb[0].mxu0
        %v1899 = vadd.f32 0.0, %v1898
        %v1900 = vpop.f32.mrb[0].mxu0
        %1901 = vmatprep.mubr.f32.mxu0 0.0
        %1902 = vmatmul.mubr.f32.gmra.mrb[0].mxu0 %v1801
        %v1903 = vpop.f32.mrb[0].mxu0
        %v1904 = vadd.f32 0.0, %v1903
        %v1905 = vpop.f32.mrb[0].mxu0
        %1906 = vmatprep.mubr.f32.mxu0 0.0
        %1907 = vmatmul.mubr.f32.gmra.mrb[0].mxu0 %v1804
        %v1908 = vpop.f32.mrb[0].mxu0
        %v1909 = vadd.f32 0.0, %v1908
        %v1910 = vpop.f32.mrb[0].mxu0
        %1911 = vmatprep.mubr.f32.mxu0 0.0
        %1912 = vmatmul.mubr.f32.gmra.mrb[0].mxu0 %v1807
        %v1913 = vpop.f32.mrb[0].mxu0
        %v1914 = vadd.f32 0.0, %v1913
        %v1915 = vpop.f32.mrb[0].mxu0
        %1916 = vdwg.mxu0
        %v1917 = vadd.f32 %v1759, %v1879
        %v1918 = vadd.f32 %v1760, %v1884
        %v1919 = vadd.f32 %v1761, %v1889
        %v1920 = vadd.f32 %v1762, %v1894
        %v1921 = vadd.f32 %v1763, %v1899
        %v1922 = vadd.f32 %v1764, %v1904
        %v1923 = vadd.f32 %v1765, %v1909
        %v1924 = vadd.f32 %v1766, %v1914
        %s1925 = scalar_lea.vmem [#allocation2], 48
        %v1926 = vld [vmem:[%s1925] ss:$2 sm:$0xff]
        %s1927 = scalar_lea.vmem %s1925, 48 [#allocation2]
        %v1928 = vld [vmem:[%s1927] ss:$2 sm:$0xff]
        %s1929 = scalar_lea.vmem %s1925, 96 [#allocation2]
        %v1930 = vld [vmem:[%s1929] ss:$2 sm:$0xff]
        %s1931 = scalar_lea.vmem %s1925, 144 [#allocation2]
        %v1932 = vld [vmem:[%s1931] ss:$2 sm:$0xff]
        %s1933 = scalar_lea.vmem %s1925, 192 [#allocation2]
        %v1934 = vld [vmem:[%s1933] ss:$2 sm:$0xff]
        %s1935 = scalar_lea.vmem %s1925, 240 [#allocation2]
        %v1936 = vld [vmem:[%s1935] ss:$2 sm:$0xff]
        %s1937 = scalar_lea.vmem %s1925, 288 [#allocation2]
        %v1938 = vld [vmem:[%s1937] ss:$2 sm:$0xff]
        %s1939 = scalar_lea.vmem %s1925, 336 [#allocation2]
        %v1940 = vld [vmem:[%s1939] ss:$2 sm:$0xff]
        %s1941 = scalar_lea.vmem %s4, 24
        %v1942 = vld [vmem:[%s1941] sm:$0xf]
        %v1944 = vsel %vm439, %v1926, 0
        %v1947 = vsel %vm439, %v1928, 0
        %v1950 = vsel %vm439, %v1930, 0
        %v1953 = vsel %vm439, %v1932, 0
        %v1956 = vsel %vm439, %v1934, 0
        %v1959 = vsel %vm439, %v1936, 0
        %v1962 = vsel %vm439, %v1938, 0
        %v1965 = vsel %vm439, %v1940, 0
        %v1968 = vsel %vm624, %v1942, 0
        %1970 = vmatprep.subr.mxu0 0.0
        %1971 = vmatpush1.msra.mxu0 %v1968
        %1972 = vmatprep.subr.mxu0 0.0
        %1973 = vmatpush1.msra.mxu0 0.0
        %1974 = vmatprep.subr.mxu0 0.0
        %1975 = vmatpush1.msra.mxu0 0.0
        %1976 = vmatprep.subr.mxu0 0.0
        %1977 = vmatpush1.msra.mxu0 0.0
        %1978 = vmatprep.subr.mxu0 0.0
        %1979 = vmatpush1.msra.mxu0 0.0
        %1980 = vmatprep.subr.mxu0 0.0
        %1981 = vmatpush1.msra.mxu0 0.0
        %1982 = vmatprep.subr.mxu0 0.0
        %1983 = vmatpush1.msra.mxu0 0.0
        %1984 = vmatprep.subr.mxu0 0.0
        %1985 = vmatpush1.msra.mxu0 0.0
        %1986 = vmatprep.subr.mxu0 0.0
        %1987 = vmatpush1.msra.mxu0 0.0
        %1988 = vmatprep.subr.mxu0 0.0
        %1989 = vmatpush1.msra.mxu0 0.0
        %1990 = vmatprep.subr.mxu0 0.0
        %1991 = vmatpush1.msra.mxu0 0.0
        %1992 = vmatprep.subr.mxu0 0.0
        %1993 = vmatpush1.msra.mxu0 0.0
        %1994 = vmatprep.subr.mxu0 0.0
        %1995 = vmatpush1.msra.mxu0 0.0
        %1996 = vmatprep.subr.mxu0 0.0
        %1997 = vmatpush1.msra.mxu0 0.0
        %1998 = vmatprep.subr.mxu0 0.0
        %1999 = vmatpush1.msra.mxu0 0.0
        %2000 = vmatprep.subr.mxu0 0.0
        %2001 = vmatpush1.msra.mxu0 0.0
        %2002 = vmatprep.subr.mxu0 0.0
        %2003 = vmatpush1.msra.mxu0 0.0
        %2004 = vmatprep.subr.mxu0 0.0
        %2005 = vmatpush1.msra.mxu0 0.0
        %2006 = vmatprep.subr.mxu0 0.0
        %2007 = vmatpush1.msra.mxu0 0.0
        %2008 = vmatprep.subr.mxu0 0.0
        %2009 = vmatpush1.msra.mxu0 0.0
        %2010 = vmatprep.subr.mxu0 0.0
        %2011 = vmatpush1.msra.mxu0 0.0
        %2012 = vmatprep.subr.mxu0 0.0
        %2013 = vmatpush1.msra.mxu0 0.0
        %2014 = vmatprep.subr.mxu0 0.0
        %2015 = vmatpush1.msra.mxu0 0.0
        %2016 = vmatprep.subr.mxu0 0.0
        %2017 = vmatpush1.msra.mxu0 0.0
        %2018 = vmatprep.subr.mxu0 0.0
        %2019 = vmatpush1.msra.mxu0 0.0
        %2020 = vmatprep.subr.mxu0 0.0
        %2021 = vmatpush1.msra.mxu0 0.0
        %2022 = vmatprep.subr.mxu0 0.0
        %2023 = vmatpush1.msra.mxu0 0.0
        %2024 = vmatprep.subr.mxu0 0.0
        %2025 = vmatpush1.msra.mxu0 0.0
        %2026 = vmatprep.subr.mxu0 0.0
        %2027 = vmatpush1.msra.mxu0 0.0
        %2028 = vmatprep.subr.mxu0 0.0
        %2029 = vmatpush1.msra.mxu0 0.0
        %2030 = vmatprep.subr.mxu0 0.0
        %2031 = vmatpush1.msra.mxu0 0.0
        %2032 = vmatprep.subr.mxu0 0.0
        %2033 = vmatpush1.msra.mxu0 0.0
        %2034 = vmatprep.mubr.f32.mxu0 0.0
        %2035 = vmatmul.mubr.f32.gmra.mrb[0].mxu0 %v1944
        %v2036 = vpop.f32.mrb[0].mxu0
        %v2037 = vadd.f32 0.0, %v2036
        %v2038 = vpop.f32.mrb[0].mxu0
        %2039 = vmatprep.mubr.f32.mxu0 0.0
        %2040 = vmatmul.mubr.f32.gmra.mrb[0].mxu0 %v1947
        %v2041 = vpop.f32.mrb[0].mxu0
        %v2042 = vadd.f32 0.0, %v2041
        %v2043 = vpop.f32.mrb[0].mxu0
        %2044 = vmatprep.mubr.f32.mxu0 0.0
        %2045 = vmatmul.mubr.f32.gmra.mrb[0].mxu0 %v1950
        %v2046 = vpop.f32.mrb[0].mxu0
        %v2047 = vadd.f32 0.0, %v2046
        %v2048 = vpop.f32.mrb[0].mxu0
        %2049 = vmatprep.mubr.f32.mxu0 0.0
        %2050 = vmatmul.mubr.f32.gmra.mrb[0].mxu0 %v1953
        %v2051 = vpop.f32.mrb[0].mxu0
        %v2052 = vadd.f32 0.0, %v2051
        %v2053 = vpop.f32.mrb[0].mxu0
        %2054 = vmatprep.mubr.f32.mxu0 0.0
        %2055 = vmatmul.mubr.f32.gmra.mrb[0].mxu0 %v1956
        %v2056 = vpop.f32.mrb[0].mxu0
        %v2057 = vadd.f32 0.0, %v2056
        %v2058 = vpop.f32.mrb[0].mxu0
        %2059 = vmatprep.mubr.f32.mxu0 0.0
        %2060 = vmatmul.mubr.f32.gmra.mrb[0].mxu0 %v1959
        %v2061 = vpop.f32.mrb[0].mxu0
        %v2062 = vadd.f32 0.0, %v2061
        %v2063 = vpop.f32.mrb[0].mxu0
        %2064 = vmatprep.mubr.f32.mxu0 0.0
        %2065 = vmatmul.mubr.f32.gmra.mrb[0].mxu0 %v1962
        %v2066 = vpop.f32.mrb[0].mxu0
        %v2067 = vadd.f32 0.0, %v2066
        %v2068 = vpop.f32.mrb[0].mxu0
        %2069 = vmatprep.mubr.f32.mxu0 0.0
        %2070 = vmatmul.mubr.f32.gmra.mrb[0].mxu0 %v1965
        %v2071 = vpop.f32.mrb[0].mxu0
        %v2072 = vadd.f32 0.0, %v2071
        %v2073 = vpop.f32.mrb[0].mxu0
        %2074 = vdwg.mxu0
        %v2075 = vadd.f32 %v1917, %v2037
        %v2076 = vadd.f32 %v1918, %v2042
        %v2077 = vadd.f32 %v1919, %v2047
        %v2078 = vadd.f32 %v1920, %v2052
        %v2079 = vadd.f32 %v1921, %v2057
        %v2080 = vadd.f32 %v1922, %v2062
        %v2081 = vadd.f32 %v1923, %v2067
        %v2082 = vadd.f32 %v1924, %v2072
        %s2083 = scalar_lea.vmem %s1925, 1 [#allocation2]
        %v2084 = vld [vmem:[%s2083] ss:$2 sm:$0xff]
        %s2085 = scalar_lea.vmem %s1925, 49 [#allocation2]
        %v2086 = vld [vmem:[%s2085] ss:$2 sm:$0xff]
        %s2087 = scalar_lea.vmem %s1925, 97 [#allocation2]
        %v2088 = vld [vmem:[%s2087] ss:$2 sm:$0xff]
        %s2089 = scalar_lea.vmem %s1925, 145 [#allocation2]
        %v2090 = vld [vmem:[%s2089] ss:$2 sm:$0xff]
        %s2091 = scalar_lea.vmem %s1925, 193 [#allocation2]
        %v2092 = vld [vmem:[%s2091] ss:$2 sm:$0xff]
        %s2093 = scalar_lea.vmem %s1925, 241 [#allocation2]
        %v2094 = vld [vmem:[%s2093] ss:$2 sm:$0xff]
        %s2095 = scalar_lea.vmem %s1925, 289 [#allocation2]
        %v2096 = vld [vmem:[%s2095] ss:$2 sm:$0xff]
        %s2097 = scalar_lea.vmem %s1925, 337 [#allocation2]
        %v2098 = vld [vmem:[%s2097] ss:$2 sm:$0xff]
        %s2099 = scalar_lea.vmem %s4, 28
        %v2100 = vld [vmem:[%s2099] sm:$0xf]
        %v2102 = vsel %vm439, %v2084, 0
        %v2105 = vsel %vm439, %v2086, 0
        %v2108 = vsel %vm439, %v2088, 0
        %v2111 = vsel %vm439, %v2090, 0
        %v2114 = vsel %vm439, %v2092, 0
        %v2117 = vsel %vm439, %v2094, 0
        %v2120 = vsel %vm439, %v2096, 0
        %v2123 = vsel %vm439, %v2098, 0
        %v2126 = vsel %vm624, %v2100, 0
        %2128 = vmatprep.subr.mxu0 0.0
        %2129 = vmatpush1.msra.mxu0 %v2126
        %2130 = vmatprep.subr.mxu0 0.0
        %2131 = vmatpush1.msra.mxu0 0.0
        %2132 = vmatprep.subr.mxu0 0.0
        %2133 = vmatpush1.msra.mxu0 0.0
        %2134 = vmatprep.subr.mxu0 0.0
        %2135 = vmatpush1.msra.mxu0 0.0
        %2136 = vmatprep.subr.mxu0 0.0
        %2137 = vmatpush1.msra.mxu0 0.0
        %2138 = vmatprep.subr.mxu0 0.0
        %2139 = vmatpush1.msra.mxu0 0.0
        %2140 = vmatprep.subr.mxu0 0.0
        %2141 = vmatpush1.msra.mxu0 0.0
        %2142 = vmatprep.subr.mxu0 0.0
        %2143 = vmatpush1.msra.mxu0 0.0
        %2144 = vmatprep.subr.mxu0 0.0
        %2145 = vmatpush1.msra.mxu0 0.0
        %2146 = vmatprep.subr.mxu0 0.0
        %2147 = vmatpush1.msra.mxu0 0.0
        %2148 = vmatprep.subr.mxu0 0.0
        %2149 = vmatpush1.msra.mxu0 0.0
        %2150 = vmatprep.subr.mxu0 0.0
        %2151 = vmatpush1.msra.mxu0 0.0
        %2152 = vmatprep.subr.mxu0 0.0
        %2153 = vmatpush1.msra.mxu0 0.0
        %2154 = vmatprep.subr.mxu0 0.0
        %2155 = vmatpush1.msra.mxu0 0.0
        %2156 = vmatprep.subr.mxu0 0.0
        %2157 = vmatpush1.msra.mxu0 0.0
        %2158 = vmatprep.subr.mxu0 0.0
        %2159 = vmatpush1.msra.mxu0 0.0
        %2160 = vmatprep.subr.mxu0 0.0
        %2161 = vmatpush1.msra.mxu0 0.0
        %2162 = vmatprep.subr.mxu0 0.0
        %2163 = vmatpush1.msra.mxu0 0.0
        %2164 = vmatprep.subr.mxu0 0.0
        %2165 = vmatpush1.msra.mxu0 0.0
        %2166 = vmatprep.subr.mxu0 0.0
        %2167 = vmatpush1.msra.mxu0 0.0
        %2168 = vmatprep.subr.mxu0 0.0
        %2169 = vmatpush1.msra.mxu0 0.0
        %2170 = vmatprep.subr.mxu0 0.0
        %2171 = vmatpush1.msra.mxu0 0.0
        %2172 = vmatprep.subr.mxu0 0.0
        %2173 = vmatpush1.msra.mxu0 0.0
        %2174 = vmatprep.subr.mxu0 0.0
        %2175 = vmatpush1.msra.mxu0 0.0
        %2176 = vmatprep.subr.mxu0 0.0
        %2177 = vmatpush1.msra.mxu0 0.0
        %2178 = vmatprep.subr.mxu0 0.0
        %2179 = vmatpush1.msra.mxu0 0.0
        %2180 = vmatprep.subr.mxu0 0.0
        %2181 = vmatpush1.msra.mxu0 0.0
        %2182 = vmatprep.subr.mxu0 0.0
        %2183 = vmatpush1.msra.mxu0 0.0
        %2184 = vmatprep.subr.mxu0 0.0
        %2185 = vmatpush1.msra.mxu0 0.0
        %2186 = vmatprep.subr.mxu0 0.0
        %2187 = vmatpush1.msra.mxu0 0.0
        %2188 = vmatprep.subr.mxu0 0.0
        %2189 = vmatpush1.msra.mxu0 0.0
        %2190 = vmatprep.subr.mxu0 0.0
        %2191 = vmatpush1.msra.mxu0 0.0
        %2192 = vmatprep.mubr.f32.mxu0 0.0
        %2193 = vmatmul.mubr.f32.gmra.mrb[0].mxu0 %v2102
        %v2194 = vpop.f32.mrb[0].mxu0
        %v2195 = vadd.f32 0.0, %v2194
        %v2196 = vpop.f32.mrb[0].mxu0
        %2197 = vmatprep.mubr.f32.mxu0 0.0
        %2198 = vmatmul.mubr.f32.gmra.mrb[0].mxu0 %v2105
        %v2199 = vpop.f32.mrb[0].mxu0
        %v2200 = vadd.f32 0.0, %v2199
        %v2201 = vpop.f32.mrb[0].mxu0
        %2202 = vmatprep.mubr.f32.mxu0 0.0
        %2203 = vmatmul.mubr.f32.gmra.mrb[0].mxu0 %v2108
        %v2204 = vpop.f32.mrb[0].mxu0
        %v2205 = vadd.f32 0.0, %v2204
        %v2206 = vpop.f32.mrb[0].mxu0
        %2207 = vmatprep.mubr.f32.mxu0 0.0
        %2208 = vmatmul.mubr.f32.gmra.mrb[0].mxu0 %v2111
        %v2209 = vpop.f32.mrb[0].mxu0
        %v2210 = vadd.f32 0.0, %v2209
        %v2211 = vpop.f32.mrb[0].mxu0
        %2212 = vmatprep.mubr.f32.mxu0 0.0
        %2213 = vmatmul.mubr.f32.gmra.mrb[0].mxu0 %v2114
        %v2214 = vpop.f32.mrb[0].mxu0
        %v2215 = vadd.f32 0.0, %v2214
        %v2216 = vpop.f32.mrb[0].mxu0
        %2217 = vmatprep.mubr.f32.mxu0 0.0
        %2218 = vmatmul.mubr.f32.gmra.mrb[0].mxu0 %v2117
        %v2219 = vpop.f32.mrb[0].mxu0
        %v2220 = vadd.f32 0.0, %v2219
        %v2221 = vpop.f32.mrb[0].mxu0
        %2222 = vmatprep.mubr.f32.mxu0 0.0
        %2223 = vmatmul.mubr.f32.gmra.mrb[0].mxu0 %v2120
        %v2224 = vpop.f32.mrb[0].mxu0
        %v2225 = vadd.f32 0.0, %v2224
        %v2226 = vpop.f32.mrb[0].mxu0
        %2227 = vmatprep.mubr.f32.mxu0 0.0
        %2228 = vmatmul.mubr.f32.gmra.mrb[0].mxu0 %v2123
        %v2229 = vpop.f32.mrb[0].mxu0
        %v2230 = vadd.f32 0.0, %v2229
        %v2231 = vpop.f32.mrb[0].mxu0
        %2232 = vdwg.mxu0
        %v2233 = vadd.f32 %v2075, %v2195
        %v2234 = vadd.f32 %v2076, %v2200
        %v2235 = vadd.f32 %v2077, %v2205
        %v2236 = vadd.f32 %v2078, %v2210
        %v2237 = vadd.f32 %v2079, %v2215
        %v2238 = vadd.f32 %v2080, %v2220
        %v2239 = vadd.f32 %v2081, %v2225
        %v2240 = vadd.f32 %v2082, %v2230
        %s2241 = scalar_lea.vmem %s1925, 2 [#allocation2]
        %v2242 = vld [vmem:[%s2241] ss:$2 sm:$0xff]
        %s2243 = scalar_lea.vmem %s1925, 50 [#allocation2]
        %v2244 = vld [vmem:[%s2243] ss:$2 sm:$0xff]
        %s2245 = scalar_lea.vmem %s1925, 98 [#allocation2]
        %v2246 = vld [vmem:[%s2245] ss:$2 sm:$0xff]
        %s2247 = scalar_lea.vmem %s1925, 146 [#allocation2]
        %v2248 = vld [vmem:[%s2247] ss:$2 sm:$0xff]
        %s2249 = scalar_lea.vmem %s1925, 194 [#allocation2]
        %v2250 = vld [vmem:[%s2249] ss:$2 sm:$0xff]
        %s2251 = scalar_lea.vmem %s1925, 242 [#allocation2]
        %v2252 = vld [vmem:[%s2251] ss:$2 sm:$0xff]
        %s2253 = scalar_lea.vmem %s1925, 290 [#allocation2]
        %v2254 = vld [vmem:[%s2253] ss:$2 sm:$0xff]
        %s2255 = scalar_lea.vmem %s1925, 338 [#allocation2]
        %v2256 = vld [vmem:[%s2255] ss:$2 sm:$0xff]
        %s2257 = scalar_lea.vmem %s4, 32
        %v2258 = vld [vmem:[%s2257] sm:$0xf]
        %v2260 = vsel %vm439, %v2242, 0
        %v2263 = vsel %vm439, %v2244, 0
        %v2266 = vsel %vm439, %v2246, 0
        %v2269 = vsel %vm439, %v2248, 0
        %v2272 = vsel %vm439, %v2250, 0
        %v2275 = vsel %vm439, %v2252, 0
        %v2278 = vsel %vm439, %v2254, 0
        %v2281 = vsel %vm439, %v2256, 0
        %v2284 = vsel %vm624, %v2258, 0
        %2286 = vmatprep.subr.mxu0 0.0
        %2287 = vmatpush1.msra.mxu0 %v2284
        %2288 = vmatprep.subr.mxu0 0.0
        %2289 = vmatpush1.msra.mxu0 0.0
        %2290 = vmatprep.subr.mxu0 0.0
        %2291 = vmatpush1.msra.mxu0 0.0
        %2292 = vmatprep.subr.mxu0 0.0
        %2293 = vmatpush1.msra.mxu0 0.0
        %2294 = vmatprep.subr.mxu0 0.0
        %2295 = vmatpush1.msra.mxu0 0.0
        %2296 = vmatprep.subr.mxu0 0.0
        %2297 = vmatpush1.msra.mxu0 0.0
        %2298 = vmatprep.subr.mxu0 0.0
        %2299 = vmatpush1.msra.mxu0 0.0
        %2300 = vmatprep.subr.mxu0 0.0
        %2301 = vmatpush1.msra.mxu0 0.0
        %2302 = vmatprep.subr.mxu0 0.0
        %2303 = vmatpush1.msra.mxu0 0.0
        %2304 = vmatprep.subr.mxu0 0.0
        %2305 = vmatpush1.msra.mxu0 0.0
        %2306 = vmatprep.subr.mxu0 0.0
        %2307 = vmatpush1.msra.mxu0 0.0
        %2308 = vmatprep.subr.mxu0 0.0
        %2309 = vmatpush1.msra.mxu0 0.0
        %2310 = vmatprep.subr.mxu0 0.0
        %2311 = vmatpush1.msra.mxu0 0.0
        %2312 = vmatprep.subr.mxu0 0.0
        %2313 = vmatpush1.msra.mxu0 0.0
        %2314 = vmatprep.subr.mxu0 0.0
        %2315 = vmatpush1.msra.mxu0 0.0
        %2316 = vmatprep.subr.mxu0 0.0
        %2317 = vmatpush1.msra.mxu0 0.0
        %2318 = vmatprep.subr.mxu0 0.0
        %2319 = vmatpush1.msra.mxu0 0.0
        %2320 = vmatprep.subr.mxu0 0.0
        %2321 = vmatpush1.msra.mxu0 0.0
        %2322 = vmatprep.subr.mxu0 0.0
        %2323 = vmatpush1.msra.mxu0 0.0
        %2324 = vmatprep.subr.mxu0 0.0
        %2325 = vmatpush1.msra.mxu0 0.0
        %2326 = vmatprep.subr.mxu0 0.0
        %2327 = vmatpush1.msra.mxu0 0.0
        %2328 = vmatprep.subr.mxu0 0.0
        %2329 = vmatpush1.msra.mxu0 0.0
        %2330 = vmatprep.subr.mxu0 0.0
        %2331 = vmatpush1.msra.mxu0 0.0
        %2332 = vmatprep.subr.mxu0 0.0
        %2333 = vmatpush1.msra.mxu0 0.0
        %2334 = vmatprep.subr.mxu0 0.0
        %2335 = vmatpush1.msra.mxu0 0.0
        %2336 = vmatprep.subr.mxu0 0.0
        %2337 = vmatpush1.msra.mxu0 0.0
        %2338 = vmatprep.subr.mxu0 0.0
        %2339 = vmatpush1.msra.mxu0 0.0
        %2340 = vmatprep.subr.mxu0 0.0
        %2341 = vmatpush1.msra.mxu0 0.0
        %2342 = vmatprep.subr.mxu0 0.0
        %2343 = vmatpush1.msra.mxu0 0.0
        %2344 = vmatprep.subr.mxu0 0.0
        %2345 = vmatpush1.msra.mxu0 0.0
        %2346 = vmatprep.subr.mxu0 0.0
        %2347 = vmatpush1.msra.mxu0 0.0
        %2348 = vmatprep.subr.mxu0 0.0
        %2349 = vmatpush1.msra.mxu0 0.0
        %2350 = vmatprep.mubr.f32.mxu0 0.0
        %2351 = vmatmul.mubr.f32.gmra.mrb[0].mxu0 %v2260
        %v2352 = vpop.f32.mrb[0].mxu0
        %v2353 = vadd.f32 0.0, %v2352
        %v2354 = vpop.f32.mrb[0].mxu0
        %2355 = vmatprep.mubr.f32.mxu0 0.0
        %2356 = vmatmul.mubr.f32.gmra.mrb[0].mxu0 %v2263
        %v2357 = vpop.f32.mrb[0].mxu0
        %v2358 = vadd.f32 0.0, %v2357
        %v2359 = vpop.f32.mrb[0].mxu0
        %2360 = vmatprep.mubr.f32.mxu0 0.0
        %2361 = vmatmul.mubr.f32.gmra.mrb[0].mxu0 %v2266
        %v2362 = vpop.f32.mrb[0].mxu0
        %v2363 = vadd.f32 0.0, %v2362
        %v2364 = vpop.f32.mrb[0].mxu0
        %2365 = vmatprep.mubr.f32.mxu0 0.0
        %2366 = vmatmul.mubr.f32.gmra.mrb[0].mxu0 %v2269
        %v2367 = vpop.f32.mrb[0].mxu0
        %v2368 = vadd.f32 0.0, %v2367
        %v2369 = vpop.f32.mrb[0].mxu0
        %2370 = vmatprep.mubr.f32.mxu0 0.0
        %2371 = vmatmul.mubr.f32.gmra.mrb[0].mxu0 %v2272
        %v2372 = vpop.f32.mrb[0].mxu0
        %v2373 = vadd.f32 0.0, %v2372
        %v2374 = vpop.f32.mrb[0].mxu0
        %2375 = vmatprep.mubr.f32.mxu0 0.0
        %2376 = vmatmul.mubr.f32.gmra.mrb[0].mxu0 %v2275
        %v2377 = vpop.f32.mrb[0].mxu0
        %v2378 = vadd.f32 0.0, %v2377
        %v2379 = vpop.f32.mrb[0].mxu0
        %2380 = vmatprep.mubr.f32.mxu0 0.0
        %2381 = vmatmul.mubr.f32.gmra.mrb[0].mxu0 %v2278
        %v2382 = vpop.f32.mrb[0].mxu0
        %v2383 = vadd.f32 0.0, %v2382
        %v2384 = vpop.f32.mrb[0].mxu0
        %2385 = vmatprep.mubr.f32.mxu0 0.0
        %2386 = vmatmul.mubr.f32.gmra.mrb[0].mxu0 %v2281
        %v2387 = vpop.f32.mrb[0].mxu0
        %v2388 = vadd.f32 0.0, %v2387
        %v2389 = vpop.f32.mrb[0].mxu0
        %2390 = vdwg.mxu0
        %v2391 = vadd.f32 %v2233, %v2353
        %v2392 = vadd.f32 %v2234, %v2358
        %v2393 = vadd.f32 %v2235, %v2363
        %v2394 = vadd.f32 %v2236, %v2368
        %v2395 = vadd.f32 %v2237, %v2373
        %v2396 = vadd.f32 %v2238, %v2378
        %v2397 = vadd.f32 %v2239, %v2383
        %v2398 = vadd.f32 %v2240, %v2388
        %v2399 = vld [vmem:[%s5] sm:$0x1]
        %v2401 = vlaneseq
        %v2402 = vshrl.u32 %v2401, 7
        %v2403 = vsub.s32 0, %v2402
        %v2404 = vrot.slane %v2399, %v2403
        %v2406 = vmul.f32 %v2391, %v2404
        %v2407 = vmul.f32 %v2392, %v2404
        %v2408 = vmul.f32 %v2393, %v2404
        %v2409 = vmul.f32 %v2394, %v2404
        %v2410 = vmul.f32 %v2395, %v2404
        %v2411 = vmul.f32 %v2396, %v2404
        %v2412 = vmul.f32 %v2397, %v2404
        %v2413 = vmul.f32 %v2398, %v2404
        %v2414 = vld [vmem:[%s6] sm:$0x1]
        %v2416 = vlaneseq
        %v2417 = vshrl.u32 %v2416, 7
        %v2418 = vsub.s32 0, %v2417
        %v2419 = vrot.slane %v2414, %v2418
        %v2421 = vadd.f32 %v2406, %v2419
        %v2422 = vadd.f32 %v2407, %v2419
        %v2423 = vadd.f32 %v2408, %v2419
        %v2424 = vadd.f32 %v2409, %v2419
        %v2425 = vadd.f32 %v2410, %v2419
        %v2426 = vadd.f32 %v2411, %v2419
        %v2427 = vadd.f32 %v2412, %v2419
        %v2428 = vadd.f32 %v2413, %v2419
        %v2429 = vmax.f32 %v2421, 0.0
        %v2430 = vmax.f32 %v2422, 0.0
        %v2431 = vmax.f32 %v2423, 0.0
        %v2432 = vmax.f32 %v2424, 0.0
        %v2433 = vmax.f32 %v2425, 0.0
        %v2434 = vmax.f32 %v2426, 0.0
        %v2435 = vmax.f32 %v2427, 0.0
        %v2436 = vmax.f32 %v2428, 0.0
        %v2437 = vld [vmem:[%s7] sm:$0xf]
        %v2439 = vsel %vm439, %v2429, 0
        %v2442 = vsel %vm439, %v2430, 0
        %v2445 = vsel %vm439, %v2431, 0
        %v2448 = vsel %vm439, %v2432, 0
        %v2451 = vsel %vm439, %v2433, 0
        %v2454 = vsel %vm439, %v2434, 0
        %v2457 = vsel %vm439, %v2435, 0
        %v2460 = vsel %vm439, %v2436, 0
        %v2463 = vsel %vm624, %v2437, 0
        %2465 = vmatprep.subr.mxu0 0.0
        %2466 = vmatpush1.msra.mxu0 %v2463
        %2467 = vmatprep.subr.mxu0 0.0
        %2468 = vmatpush1.msra.mxu0 0.0
        %2469 = vmatprep.subr.mxu0 0.0
        %2470 = vmatpush1.msra.mxu0 0.0
        %2471 = vmatprep.subr.mxu0 0.0
        %2472 = vmatpush1.msra.mxu0 0.0
        %2473 = vmatprep.subr.mxu0 0.0
        %2474 = vmatpush1.msra.mxu0 0.0
        %2475 = vmatprep.subr.mxu0 0.0
        %2476 = vmatpush1.msra.mxu0 0.0
        %2477 = vmatprep.subr.mxu0 0.0
        %2478 = vmatpush1.msra.mxu0 0.0
        %2479 = vmatprep.subr.mxu0 0.0
        %2480 = vmatpush1.msra.mxu0 0.0
        %2481 = vmatprep.subr.mxu0 0.0
        %2482 = vmatpush1.msra.mxu0 0.0
        %2483 = vmatprep.subr.mxu0 0.0
        %2484 = vmatpush1.msra.mxu0 0.0
        %2485 = vmatprep.subr.mxu0 0.0
        %2486 = vmatpush1.msra.mxu0 0.0
        %2487 = vmatprep.subr.mxu0 0.0
        %2488 = vmatpush1.msra.mxu0 0.0
        %2489 = vmatprep.subr.mxu0 0.0
        %2490 = vmatpush1.msra.mxu0 0.0
        %2491 = vmatprep.subr.mxu0 0.0
        %2492 = vmatpush1.msra.mxu0 0.0
        %2493 = vmatprep.subr.mxu0 0.0
        %2494 = vmatpush1.msra.mxu0 0.0
        %2495 = vmatprep.subr.mxu0 0.0
        %2496 = vmatpush1.msra.mxu0 0.0
        %2497 = vmatprep.subr.mxu0 0.0
        %2498 = vmatpush1.msra.mxu0 0.0
        %2499 = vmatprep.subr.mxu0 0.0
        %2500 = vmatpush1.msra.mxu0 0.0
        %2501 = vmatprep.subr.mxu0 0.0
        %2502 = vmatpush1.msra.mxu0 0.0
        %2503 = vmatprep.subr.mxu0 0.0
        %2504 = vmatpush1.msra.mxu0 0.0
        %2505 = vmatprep.subr.mxu0 0.0
        %2506 = vmatpush1.msra.mxu0 0.0
        %2507 = vmatprep.subr.mxu0 0.0
        %2508 = vmatpush1.msra.mxu0 0.0
        %2509 = vmatprep.subr.mxu0 0.0
        %2510 = vmatpush1.msra.mxu0 0.0
        %2511 = vmatprep.subr.mxu0 0.0
        %2512 = vmatpush1.msra.mxu0 0.0
        %2513 = vmatprep.subr.mxu0 0.0
        %2514 = vmatpush1.msra.mxu0 0.0
        %2515 = vmatprep.subr.mxu0 0.0
        %2516 = vmatpush1.msra.mxu0 0.0
        %2517 = vmatprep.subr.mxu0 0.0
        %2518 = vmatpush1.msra.mxu0 0.0
        %2519 = vmatprep.subr.mxu0 0.0
        %2520 = vmatpush1.msra.mxu0 0.0
        %2521 = vmatprep.subr.mxu0 0.0
        %2522 = vmatpush1.msra.mxu0 0.0
        %2523 = vmatprep.subr.mxu0 0.0
        %2524 = vmatpush1.msra.mxu0 0.0
        %2525 = vmatprep.subr.mxu0 0.0
        %2526 = vmatpush1.msra.mxu0 0.0
        %2527 = vmatprep.subr.mxu0 0.0
        %2528 = vmatpush1.msra.mxu0 0.0
        %2529 = vmatprep.mubr.f32.mxu0 0.0
        %2530 = vmatmul.mubr.f32.gmra.mrb[0].mxu0 %v2439
        %v2531 = vpop.f32.mrb[0].mxu0
        %v2532 = vadd.f32 0.0, %v2531
        %v2533 = vpop.f32.mrb[0].mxu0
        %2534 = vmatprep.mubr.f32.mxu0 0.0
        %2535 = vmatmul.mubr.f32.gmra.mrb[0].mxu0 %v2442
        %v2536 = vpop.f32.mrb[0].mxu0
        %v2537 = vadd.f32 0.0, %v2536
        %v2538 = vpop.f32.mrb[0].mxu0
        %2539 = vmatprep.mubr.f32.mxu0 0.0
        %2540 = vmatmul.mubr.f32.gmra.mrb[0].mxu0 %v2445
        %v2541 = vpop.f32.mrb[0].mxu0
        %v2542 = vadd.f32 0.0, %v2541
        %v2543 = vpop.f32.mrb[0].mxu0
        %2544 = vmatprep.mubr.f32.mxu0 0.0
        %2545 = vmatmul.mubr.f32.gmra.mrb[0].mxu0 %v2448
        %v2546 = vpop.f32.mrb[0].mxu0
        %v2547 = vadd.f32 0.0, %v2546
        %v2548 = vpop.f32.mrb[0].mxu0
        %2549 = vmatprep.mubr.f32.mxu0 0.0
        %2550 = vmatmul.mubr.f32.gmra.mrb[0].mxu0 %v2451
        %v2551 = vpop.f32.mrb[0].mxu0
        %v2552 = vadd.f32 0.0, %v2551
        %v2553 = vpop.f32.mrb[0].mxu0
        %2554 = vmatprep.mubr.f32.mxu0 0.0
        %2555 = vmatmul.mubr.f32.gmra.mrb[0].mxu0 %v2454
        %v2556 = vpop.f32.mrb[0].mxu0
        %v2557 = vadd.f32 0.0, %v2556
        %v2558 = vpop.f32.mrb[0].mxu0
        %2559 = vmatprep.mubr.f32.mxu0 0.0
        %2560 = vmatmul.mubr.f32.gmra.mrb[0].mxu0 %v2457
        %v2561 = vpop.f32.mrb[0].mxu0
        %v2562 = vadd.f32 0.0, %v2561
        %v2563 = vpop.f32.mrb[0].mxu0
        %2564 = vmatprep.mubr.f32.mxu0 0.0
        %2565 = vmatmul.mubr.f32.gmra.mrb[0].mxu0 %v2460
        %v2566 = vpop.f32.mrb[0].mxu0
        %v2567 = vadd.f32 0.0, %v2566
        %v2568 = vpop.f32.mrb[0].mxu0
        %2569 = vdwg.mxu0
        %v2570 = vld [vmem:[%s8] sm:$0x1]
        %v2572 = vlaneseq
        %v2573 = vshrl.u32 %v2572, 7
        %v2574 = vsub.s32 0, %v2573
        %v2575 = vrot.slane %v2570, %v2574
        %v2577 = vmul.f32 %v2532, %v2575
        %v2578 = vmul.f32 %v2537, %v2575
        %v2579 = vmul.f32 %v2542, %v2575
        %v2580 = vmul.f32 %v2547, %v2575
        %v2581 = vmul.f32 %v2552, %v2575
        %v2582 = vmul.f32 %v2557, %v2575
        %v2583 = vmul.f32 %v2562, %v2575
        %v2584 = vmul.f32 %v2567, %v2575
        %v2585 = vld [vmem:[%s9] sm:$0x1]
        %v2587 = vlaneseq
        %v2588 = vshrl.u32 %v2587, 7
        %v2589 = vsub.s32 0, %v2588
        %v2590 = vrot.slane %v2585, %v2589
        %v2592 = vadd.f32 %v2577, %v2590
        %v2593 = vadd.f32 %v2578, %v2590
        %v2594 = vadd.f32 %v2579, %v2590
        %v2595 = vadd.f32 %v2580, %v2590
        %v2596 = vadd.f32 %v2581, %v2590
        %v2597 = vadd.f32 %v2582, %v2590
        %v2598 = vadd.f32 %v2583, %v2590
        %v2599 = vadd.f32 %v2584, %v2590
        %v2600 = vld [vmem:[%s438] ss:$2 sm:$0xff]
        %s2601 = scalar_lea.vmem %s438, 32
        %v2602 = vld [vmem:[%s2601] ss:$2 sm:$0xff]
        %s2603 = scalar_lea.vmem %s438, 64
        %v2604 = vld [vmem:[%s2603] ss:$2 sm:$0xff]
        %s2605 = scalar_lea.vmem %s438, 96
        %v2606 = vld [vmem:[%s2605] ss:$2 sm:$0xff]
        %s2607 = scalar_lea.vmem %s438, 128
        %v2608 = vld [vmem:[%s2607] ss:$2 sm:$0xff]
        %s2609 = scalar_lea.vmem %s438, 160
        %v2610 = vld [vmem:[%s2609] ss:$2 sm:$0xff]
        %s2611 = scalar_lea.vmem %s438, 192
        %v2612 = vld [vmem:[%s2611] ss:$2 sm:$0xff]
        %s2613 = scalar_lea.vmem %s438, 224
        %v2614 = vld [vmem:[%s2613] ss:$2 sm:$0xff]
        %v2615 = vld [vmem:[%s10] sm:$0xf]
        %v2617 = vsel %vm439, %v2600, 0
        %v2620 = vsel %vm439, %v2602, 0
        %v2623 = vsel %vm439, %v2604, 0
        %v2626 = vsel %vm439, %v2606, 0
        %v2629 = vsel %vm439, %v2608, 0
        %v2632 = vsel %vm439, %v2610, 0
        %v2635 = vsel %vm439, %v2612, 0
        %v2638 = vsel %vm439, %v2614, 0
        %v2641 = vsel %vm624, %v2615, 0
        %2643 = vmatprep.subr.mxu0 0.0
        %2644 = vmatpush1.msra.mxu0 %v2641
        %2645 = vmatprep.subr.mxu0 0.0
        %2646 = vmatpush1.msra.mxu0 0.0
        %2647 = vmatprep.subr.mxu0 0.0
        %2648 = vmatpush1.msra.mxu0 0.0
        %2649 = vmatprep.subr.mxu0 0.0
        %2650 = vmatpush1.msra.mxu0 0.0
        %2651 = vmatprep.subr.mxu0 0.0
        %2652 = vmatpush1.msra.mxu0 0.0
        %2653 = vmatprep.subr.mxu0 0.0
        %2654 = vmatpush1.msra.mxu0 0.0
        %2655 = vmatprep.subr.mxu0 0.0
        %2656 = vmatpush1.msra.mxu0 0.0
        %2657 = vmatprep.subr.mxu0 0.0
        %2658 = vmatpush1.msra.mxu0 0.0
        %2659 = vmatprep.subr.mxu0 0.0
        %2660 = vmatpush1.msra.mxu0 0.0
        %2661 = vmatprep.subr.mxu0 0.0
        %2662 = vmatpush1.msra.mxu0 0.0
        %2663 = vmatprep.subr.mxu0 0.0
        %2664 = vmatpush1.msra.mxu0 0.0
        %2665 = vmatprep.subr.mxu0 0.0
        %2666 = vmatpush1.msra.mxu0 0.0
        %2667 = vmatprep.subr.mxu0 0.0
        %2668 = vmatpush1.msra.mxu0 0.0
        %2669 = vmatprep.subr.mxu0 0.0
        %2670 = vmatpush1.msra.mxu0 0.0
        %2671 = vmatprep.subr.mxu0 0.0
        %2672 = vmatpush1.msra.mxu0 0.0
        %2673 = vmatprep.subr.mxu0 0.0
        %2674 = vmatpush1.msra.mxu0 0.0
        %2675 = vmatprep.subr.mxu0 0.0
        %2676 = vmatpush1.msra.mxu0 0.0
        %2677 = vmatprep.subr.mxu0 0.0
        %2678 = vmatpush1.msra.mxu0 0.0
        %2679 = vmatprep.subr.mxu0 0.0
        %2680 = vmatpush1.msra.mxu0 0.0
        %2681 = vmatprep.subr.mxu0 0.0
        %2682 = vmatpush1.msra.mxu0 0.0
        %2683 = vmatprep.subr.mxu0 0.0
        %2684 = vmatpush1.msra.mxu0 0.0
        %2685 = vmatprep.subr.mxu0 0.0
        %2686 = vmatpush1.msra.mxu0 0.0
        %2687 = vmatprep.subr.mxu0 0.0
        %2688 = vmatpush1.msra.mxu0 0.0
        %2689 = vmatprep.subr.mxu0 0.0
        %2690 = vmatpush1.msra.mxu0 0.0
        %2691 = vmatprep.subr.mxu0 0.0
        %2692 = vmatpush1.msra.mxu0 0.0
        %2693 = vmatprep.subr.mxu0 0.0
        %2694 = vmatpush1.msra.mxu0 0.0
        %2695 = vmatprep.subr.mxu0 0.0
        %2696 = vmatpush1.msra.mxu0 0.0
        %2697 = vmatprep.subr.mxu0 0.0
        %2698 = vmatpush1.msra.mxu0 0.0
        %2699 = vmatprep.subr.mxu0 0.0
        %2700 = vmatpush1.msra.mxu0 0.0
        %2701 = vmatprep.subr.mxu0 0.0
        %2702 = vmatpush1.msra.mxu0 0.0
        %2703 = vmatprep.subr.mxu0 0.0
        %2704 = vmatpush1.msra.mxu0 0.0
        %2705 = vmatprep.subr.mxu0 0.0
        %2706 = vmatpush1.msra.mxu0 0.0
        %2707 = vmatprep.mubr.f32.mxu0 0.0
        %2708 = vmatmul.mubr.f32.gmra.mrb[0].mxu0 %v2617
        %v2709 = vpop.f32.mrb[0].mxu0
        %v2710 = vadd.f32 0.0, %v2709
        %v2711 = vpop.f32.mrb[0].mxu0
        %2712 = vmatprep.mubr.f32.mxu0 0.0
        %2713 = vmatmul.mubr.f32.gmra.mrb[0].mxu0 %v2620
        %v2714 = vpop.f32.mrb[0].mxu0
        %v2715 = vadd.f32 0.0, %v2714
        %v2716 = vpop.f32.mrb[0].mxu0
        %2717 = vmatprep.mubr.f32.mxu0 0.0
        %2718 = vmatmul.mubr.f32.gmra.mrb[0].mxu0 %v2623
        %v2719 = vpop.f32.mrb[0].mxu0
        %v2720 = vadd.f32 0.0, %v2719
        %v2721 = vpop.f32.mrb[0].mxu0
        %2722 = vmatprep.mubr.f32.mxu0 0.0
        %2723 = vmatmul.mubr.f32.gmra.mrb[0].mxu0 %v2626
        %v2724 = vpop.f32.mrb[0].mxu0
        %v2725 = vadd.f32 0.0, %v2724
        %v2726 = vpop.f32.mrb[0].mxu0
        %2727 = vmatprep.mubr.f32.mxu0 0.0
        %2728 = vmatmul.mubr.f32.gmra.mrb[0].mxu0 %v2629
        %v2729 = vpop.f32.mrb[0].mxu0
        %v2730 = vadd.f32 0.0, %v2729
        %v2731 = vpop.f32.mrb[0].mxu0
        %2732 = vmatprep.mubr.f32.mxu0 0.0
        %2733 = vmatmul.mubr.f32.gmra.mrb[0].mxu0 %v2632
        %v2734 = vpop.f32.mrb[0].mxu0
        %v2735 = vadd.f32 0.0, %v2734
        %v2736 = vpop.f32.mrb[0].mxu0
        %2737 = vmatprep.mubr.f32.mxu0 0.0
        %2738 = vmatmul.mubr.f32.gmra.mrb[0].mxu0 %v2635
        %v2739 = vpop.f32.mrb[0].mxu0
        %v2740 = vadd.f32 0.0, %v2739
        %v2741 = vpop.f32.mrb[0].mxu0
        %2742 = vmatprep.mubr.f32.mxu0 0.0
        %2743 = vmatmul.mubr.f32.gmra.mrb[0].mxu0 %v2638
        %v2744 = vpop.f32.mrb[0].mxu0
        %v2745 = vadd.f32 0.0, %v2744
        %v2746 = vpop.f32.mrb[0].mxu0
        %2747 = vdwg.mxu0
        %v2748 = vld [vmem:[%s11] sm:$0x1]
        %v2750 = vlaneseq
        %v2751 = vshrl.u32 %v2750, 7
        %v2752 = vsub.s32 0, %v2751
        %v2753 = vrot.slane %v2748, %v2752
        %v2755 = vmul.f32 %v2710, %v2753
        %v2756 = vmul.f32 %v2715, %v2753
        %v2757 = vmul.f32 %v2720, %v2753
        %v2758 = vmul.f32 %v2725, %v2753
        %v2759 = vmul.f32 %v2730, %v2753
        %v2760 = vmul.f32 %v2735, %v2753
        %v2761 = vmul.f32 %v2740, %v2753
        %v2762 = vmul.f32 %v2745, %v2753
        %v2763 = vld [vmem:[%s12] sm:$0x1]
        %v2765 = vlaneseq
        %v2766 = vshrl.u32 %v2765, 7
        %v2767 = vsub.s32 0, %v2766
        %v2768 = vrot.slane %v2763, %v2767
        %v2770 = vadd.f32 %v2755, %v2768
        %v2771 = vadd.f32 %v2756, %v2768
        %v2772 = vadd.f32 %v2757, %v2768
        %v2773 = vadd.f32 %v2758, %v2768
        %v2774 = vadd.f32 %v2759, %v2768
        %v2775 = vadd.f32 %v2760, %v2768
        %v2776 = vadd.f32 %v2761, %v2768
        %v2777 = vadd.f32 %v2762, %v2768
        %v2778 = vadd.f32 %v2592, %v2770
        %v2779 = vadd.f32 %v2593, %v2771
        %v2780 = vadd.f32 %v2594, %v2772
        %v2781 = vadd.f32 %v2595, %v2773
        %v2782 = vadd.f32 %v2596, %v2774
        %v2783 = vadd.f32 %v2597, %v2775
        %v2784 = vadd.f32 %v2598, %v2776
        %v2785 = vadd.f32 %v2599, %v2777
        %v2786 = vmax.f32 %v2778, 0.0
        %v2787 = vmax.f32 %v2779, 0.0
        %v2788 = vmax.f32 %v2780, 0.0
        %v2789 = vmax.f32 %v2781, 0.0
        %v2790 = vmax.f32 %v2782, 0.0
        %v2791 = vmax.f32 %v2783, 0.0
        %v2792 = vmax.f32 %v2784, 0.0
        %v2793 = vmax.f32 %v2785, 0.0
        %vm2794 = vcmask 130048
        %2795 = vst.msk [vmem:[%s433] sm:$0xff] %vm2794, %v2786
        %2796 = vst.msk [vmem:[%s433 + $0x8] sm:$0xff] %vm2794, %v2787
        %2797 = vst.msk [vmem:[%s433 + $0x10] sm:$0xff] %vm2794, %v2788
        %2798 = vst.msk [vmem:[%s433 + $0x18] sm:$0xff] %vm2794, %v2789
        %2799 = vst.msk [vmem:[%s433 + $0x20] sm:$0xff] %vm2794, %v2790
        %2800 = vst.msk [vmem:[%s433 + $0x28] sm:$0xff] %vm2794, %v2791
        %2801 = vst.msk [vmem:[%s433 + $0x30] sm:$0xff] %vm2794, %v2792
        %2802 = vst.msk [vmem:[%s433 + $0x38] sm:$0xff] %vm2794, %v2793
        %s2803 = sand.u32 %s313, 1
        %s2804 = scalar_lea.sflag [#allocation4], %s2803
        %s2805 = sand.u32 %s313, 1
        %s2806 = smul.addr %s2805, 64
        %s2807 = scalar_lea.vmem [#allocation3], %s2806
        // Predicated region
        $region73: #{tpu_custom_call.1} parent=71 // pred_check
          %p2808 = pneg %p323
        $region74: #{tpu_custom_call.1} parent=71 // pred_check_branch
          %2810 = sbr.rel (%p2808) target = $region76
        $region75: #{tpu_custom_call.1} parent=71 // pred_region
          %s2812 = ssub.s32 1024, 1024
          %2813 = vsyncadd %s2804, %s2812
          %s2814 = smul.addr %s27, 8
          %s2815 = smul.addr %s2814, 128
          %s2816 = scalar_lea.hbm %s13, %s2815
          %s2817 = sshll.u32 %s2807, 4
          %s2818 = int_to_ptr.vmem [resolvable:$true] %s2817
          %2823 = dma.vmem_to_hbm [thread:$0]  %s2818, 1024, %s2816, %s2804, 128, 128, 8
        $region76: #{tpu_custom_call.1} parent=71 // pred_fallthru
          _
      $region72: #{tpu_custom_call.1} parent=5 // pred_fallthru
        _
      %p2824 = scmp.le.s32.totalorder 2, %s22
      // Predicated region
      $region77: #{tpu_custom_call.1} parent=5 // pred_check
        %p2825 = pneg %p2824
      $region78: #{tpu_custom_call.1} parent=5 // pred_check_branch
        %2827 = sbr.rel (%p2825) target = $region80
      $region79: #{tpu_custom_call.1} parent=5 // pred_region
        %s2828 = ssub.s32 %s22, 2
        // Predicated region
        $region81: #{tpu_custom_call.1} parent=79 // pred_check
          %p2829 = pneg %p329
        $region82: #{tpu_custom_call.1} parent=79 // pred_check_branch
          %2831 = sbr.rel (%p2829) target = $region84
        $region83: #{tpu_custom_call.1} parent=79 // pred_region
          %s2832 = sand.u32 %s314, 1
          %s2833 = scalar_lea.sflag [#allocation4], %s2832
          %s2834 = sand.u32 %s314, 1
          %s2835 = smul.addr %s2834, 64
          %s2836 = scalar_lea.vmem [#allocation3], %s2835
          %2837 = dma.done %s2833, 1024
        $region84: #{tpu_custom_call.1} parent=79 // pred_fallthru
          _
      $region80: #{tpu_custom_call.1} parent=5 // pred_fallthru
        _
    $region6: #{tpu_custom_call.1} parent=1 // loop_footer
      %s26 = sadd.s32 1, %s22
    $region7: #{tpu_custom_call.1} parent=1 // loop_footer_branch
      %21 = sbr.rel target = $region3
    $region8: #{tpu_custom_call.1} parent=1 // loop_exit
      _
    %2838 = vsyncpa [#allocation4], 1
    %s2839 = scalar_lea.sflag [#allocation4], 1
    %2840 = vsyncpa %s2839, 1

</llo_original>
